<compile_context>
chip_gen: v7x
topology: tpu7x:2x2x1
jax: 0.10.0
libtpu: 0.0.40
codegen_flags: <defaults>
</compile_context>

<pallas_src>
import math

import jax
import jax.numpy as jnp
import numpy as np
from jax.experimental import pallas as pl
from jax.experimental.pallas import tpu as pltpu

PITCH_X, PITCH_Y = 108.0, 72.0  # soccer pitch used by reshape_tensor(upscale=True)
GATE_PAD = 128                  # lanes per gate block
# TODO(synk): on v5e (128-wide MXU) sweep GATE_PAD 96 vs 128 (N=768 is 6 column passes
# there vs 3 on v6e/v7x); still latency-bound either way.


# ----------------------------------------------------------------------------
# Pallas kernel
# ----------------------------------------------------------------------------
def _make_kernel(step_sizes, T, B, y_dim, n_players):
    G = GATE_PAD
    n_levels = len(step_sizes)
    LVL_ROWS = 3 * G + 8  # per-level rows in dec_pack: dwh(G)+dwb(G)+mw(G)+bias block(8)

    def kernel(seq_ref, gru_ref, dec_ref, loss_ref, pd_ref, h_stack, hb_stack):
        seq = seq_ref[...]                      # [T*B, G]: cols 0:y = gt[i], y:2y+1 = data[T-1-i]
        w_big = gru_ref[0:2 * G, :]             # [2G, 6G] block-diag recurrent weights (fwd+bwd)
        w_in = gru_ref[2 * G:3 * G, :]          # [G, 6G]  fused input-side weights
        bhh = gru_ref[3 * G:3 * G + 1, :]       # [1, 6G]  hidden biases (inside r*(...) for n)
        b_in = gru_ref[3 * G + 1:3 * G + 2, :]  # [1, 6G]  input biases

        # ---- hoisted input-side preactivations for ALL fused steps (off serial chain) ----
        gi_all = jnp.dot(seq, w_in, preferred_element_type=jnp.float32) + b_in  # [T*B, 6G]

        # ---- fused interleaved recurrence: T-1 dependent steps ----
        # Gate lane blocks: [r_f, r_b, z_f, z_b, n_f, n_b]; H = [h_fwd | h_back] in 2*G lanes.
        # (The last forward step of the original loop, t = T-1, never feeds any output, so
        # it is skipped; loss count stays = T exactly like the PyTorch module.)
        hpad = jnp.zeros((B, 2 * G), jnp.float32)
        for i in range(T - 1):
            # cache h_back_dict[T - i] (stored BEFORE the backward step, like the reference)
            hb_stack[(T - i - 2) * B:(T - i - 1) * B, :] = hpad[:, G:2 * G]
            gi = gi_all[i * B:(i + 1) * B, :]
            gh = jnp.dot(hpad, w_big, preferred_element_type=jnp.float32) + bhh
            rz = jax.nn.sigmoid(gi[:, 0:4 * G] + gh[:, 0:4 * G])      # r_f r_b z_f z_b
            r, z = rz[:, 0:2 * G], rz[:, 2 * G:4 * G]
            n = jnp.tanh(gi[:, 4 * G:] + r * gh[:, 4 * G:])           # b_hn inside r*(...) like PyTorch
            hpad = (1.0 - z) * n + z * hpad
            h_stack[i * B:(i + 1) * B, :] = hpad[:, 0:G]              # h_fwd after step i

        # ---- batched decoder / MAE / pos_dist epilogue (a few matmuls per level) ----
        tail = n_levels * LVL_ROWS
        scale_vec = dec_ref[tail:tail + 1, 0:y_dim]                   # [1, y]
        pair_mat = dec_ref[tail + 8:tail + 8 + y_dim, 0:n_players]    # [y, P]

        loss = jnp.float32(0.0)
        pos_dist = jnp.float32(0.0)
        imput_count = 0
        for li, step in enumerate(step_sizes):
            n_valid = T - 2 * step + 1            # t in [0, T-2*step]
            if n_valid <= 0:
                continue
            off = li * LVL_ROWS
            dwh = dec_ref[off:off + G, :]                             # [G, G]
            dwb = dec_ref[off + G:off + 2 * G, :]                     # [G, G]
            mwp = dec_ref[off + 2 * G:off + 3 * G, :]                 # [G, G]
            db = dec_ref[off + 3 * G:off + 3 * G + 1, :]              # [1, G]
            mb = dec_ref[off + 3 * G + 1:off + 3 * G + 2, 0:y_dim]    # [1, y]
            h_f = h_stack[0:n_valid * B, :]                                      # h after t
            h_b = hb_stack[(2 * step - 2) * B:(2 * step - 2 + n_valid) * B, :]   # dict[t+2*step]
            tgt = seq[step * B:(step + n_valid) * B, 0:y_dim]                    # gt[t+step]
            # dec = ReLU(Linear(cat([h, h_back])))  (split-weight form, no concat)
            dec = jnp.maximum(
                jnp.dot(h_f, dwh, preferred_element_type=jnp.float32)
                + jnp.dot(h_b, dwb, preferred_element_type=jnp.float32) + db, 0.0)
            mean = jnp.dot(dec, mwp, preferred_element_type=jnp.float32)[:, 0:y_dim] + mb
            err = mean - tgt
            # calc_mae_loss (n_features==2 -> 'pos', scale 1): sum of per-pair means
            # == total |err| sum / (B * y_dim).
            loss = loss + jnp.sum(jnp.abs(err)) / (B * y_dim)
            # pos_dist: per-player euclidean distance on upscaled (x, y) coordinates.
            diff = err * scale_vec
            pair_sq = jnp.dot(diff * diff, pair_mat, preferred_element_type=jnp.float32)
            pos_dist = pos_dist + jnp.sum(jnp.sqrt(pair_sq)) / (B * n_players)
            imput_count += n_valid

        # Matches the PyTorch module exactly: loss /= count (=T) and then /= bs
        # (yes, the batch dimension is divided twice in the original code).
        loss_ref[0, 0] = loss / (T * B)
        pd_ref[0, 0] = pos_dist / imput_count

    return kernel


# ----------------------------------------------------------------------------
# Weight / sequence packing (wrapper side)
# ----------------------------------------------------------------------------
def _gate_expand(w, R, blocks):
    """[K, 3R] stacked (r, z, n) -> [K, 6*G] with gate g placed at lane block blocks[g]."""
    G = GATE_PAD
    out = jnp.zeros((w.shape[0], 6 * G), jnp.float32)
    for g, blk in enumerate(blocks):
        out = out.at[:, blk * G:blk * G + R].set(w[:, g * R:(g + 1) * R])
    return out


def pack_params(weights, n_levels, rnn_dim, y_dim, n_players):
    """One-time packing of all parameters into two (8,128)-aligned VMEM buffers."""
    G = GATE_PAD
    R = rnn_dim
    assert R <= G and 2 * y_dim + 1 <= G
    wih_f, whh_f, bih_f, bhh_f = weights[0:4]
    wih_b, whh_b, bih_b, bhh_b = weights[4:8]
    lvl = weights[8:8 + 5 * n_levels]
    scale_vec = weights[8 + 5 * n_levels]
    pair_mat = weights[9 + 5 * n_levels]

    FWD, BWD = (0, 2, 4), (1, 3, 5)   # gate lane blocks: r_f r_b z_f z_b n_f n_b
    w_big = jnp.zeros((2 * G, 6 * G), jnp.float32)
    w_big = w_big.at[0:R, :].set(_gate_expand(whh_f, R, FWD))
    w_big = w_big.at[G:G + R, :].set(_gate_expand(whh_b, R, BWD))
    w_in = jnp.zeros((G, 6 * G), jnp.float32)
    w_in = w_in.at[0:y_dim, :].set(_gate_expand(wih_f, R, FWD))
    w_in = w_in.at[y_dim:2 * y_dim + 1, :].set(_gate_expand(wih_b, R, BWD))
    bhh_big = _gate_expand(bhh_f, R, FWD) + _gate_expand(bhh_b, R, BWD)
    b_in_big = _gate_expand(bih_f, R, FWD) + _gate_expand(bih_b, R, BWD)
    gru_pack = jnp.concatenate([w_big, w_in, bhh_big, b_in_big], axis=0)   # [3G+2, 6G]

    LVL_ROWS = 3 * G + 8
    dec_pack = jnp.zeros((n_levels * LVL_ROWS + 16, G), jnp.float32)
    for li in range(n_levels):
        dwh, dwb, db, mw, mb = lvl[5 * li:5 * li + 5]
        dim = dwh.shape[1]
        assert dim <= G
        off = li * LVL_ROWS
        dec_pack = dec_pack.at[off:off + R, 0:dim].set(dwh)
        dec_pack = dec_pack.at[off + G:off + G + R, 0:dim].set(dwb)
        dec_pack = dec_pack.at[off + 2 * G:off + 2 * G + dim, 0:y_dim].set(mw)
        dec_pack = dec_pack.at[off + 3 * G, 0:dim].set(db[0])
        dec_pack = dec_pack.at[off + 3 * G + 1, 0:y_dim].set(mb[0])
    tail = n_levels * LVL_ROWS
    dec_pack = dec_pack.at[tail, 0:y_dim].set(scale_vec[0])
    dec_pack = dec_pack.at[tail + 8:tail + 8 + y_dim, 0:n_players].set(pair_mat)
    return gru_pack, dec_pack


def naomi_imputer_forward(data, ground_truth, gru_pack, dec_pack, step_sizes,
                          *, y_dim, n_players):
    """data:[T,B,1+y]  ground_truth:[T,B,y]  -> (loss, pos_dist) scalars."""
    T, B, _ = data.shape
    G = GATE_PAD
    # Sequence pack: row block i pairs gt[i] (fwd stream) with data[T-1-i] (bwd stream),
    # so one hoisted matmul yields the combined gate preactivations for fused step i.
    seq = jnp.zeros((T, B, G), jnp.float32)
    seq = seq.at[:, :, 0:y_dim].set(ground_truth)
    seq = seq.at[:, :, y_dim:2 * y_dim + 1].set(jnp.flip(data, axis=0))
    seq_pack = seq.reshape(T * B, G)

    kernel = _make_kernel(tuple(step_sizes), T, B, y_dim, n_players)
    vmem = pltpu.MemorySpace.VMEM
    smem = pltpu.MemorySpace.SMEM
    loss, pos_dist = pl.pallas_call(
        kernel,
        out_shape=(jax.ShapeDtypeStruct((1, 1), jnp.float32),
                   jax.ShapeDtypeStruct((1, 1), jnp.float32)),
        in_specs=[pl.BlockSpec(memory_space=vmem)] * 3,
        out_specs=(pl.BlockSpec(memory_space=smem),
                   pl.BlockSpec(memory_space=smem)),
        scratch_shapes=[pltpu.VMEM(((T - 1) * B, G), jnp.float32),   # h after fwd step i
                        pltpu.VMEM(((T - 1) * B, G), jnp.float32)],  # h_back_dict[k] at (k-2)
    )(seq_pack, gru_pack, dec_pack)
    return loss[0, 0], pos_dist[0, 0]
    # TODO(synk): when imputing many independent (data, gt) instances, fold them into the
    # batch dimension (free up to B=8, near-linear beyond) and/or add a leading "parallel"
    # grid axis over instances so v7x's two TensorCores both work.


# ----------------------------------------------------------------------------
# Pure-JAX reference (PyTorch-faithful per-step math, natural weight layout)
# ----------------------------------------------------------------------------
def naomi_imputer_ref(data, gt, weights, step_sizes):
    T, B, _ = data.shape
    wih_f, whh_f, bih_f, bhh_f = weights[0:4]
    wih_b, whh_b, bih_b, bhh_b = weights[4:8]
    n_levels = len(step_sizes)
    lvl = weights[8:8 + 5 * n_levels]
    levels = [tuple(lvl[5 * i:5 * i + 5]) for i in range(n_levels)]
    scale_vec = weights[8 + 5 * n_levels]
    pair_mat = weights[9 + 5 * n_levels]
    R = whh_f.shape[0]
    hi = jax.lax.Precision.HIGHEST

    def cell(x, h, wih, whh, bih, bhh):
        gi = jnp.dot(x, wih, precision=hi) + bih
        gh = jnp.dot(h, whh, precision=hi) + bhh
        r = jax.nn.sigmoid(gi[:, :R] + gh[:, :R])
        z = jax.nn.sigmoid(gi[:, R:2 * R] + gh[:, R:2 * R])
        n = jnp.tanh(gi[:, 2 * R:] + r * gh[:, 2 * R:])
        return (1.0 - z) * n + z * h

    h_back = jnp.zeros((B, R), jnp.float32)
    h_back_dict = {}
    for t in range(T - 1, 0, -1):
        h_back_dict[t + 1] = h_back
        h_back = cell(data[t], h_back, wih_b, whh_b, bih_b, bhh_b)

    h = jnp.zeros((B, R), jnp.float32)
    loss = jnp.float32(0.0)
    pos_dist = jnp.float32(0.0)
    count = 0
    imput = 0
    for t in range(T):
        h = cell(gt[t], h, wih_f, whh_f, bih_f, bhh_f)
        count += 1
        for step, (dwh, dwb, db, mw, mb) in zip(step_sizes, levels):
            if t + 2 * step <= T:
                next_t = gt[t + step]
                h_b = h_back_dict[t + 2 * step]
                dec = jnp.maximum(jnp.dot(h, dwh, precision=hi)
                                  + jnp.dot(h_b, dwb, precision=hi) + db, 0.0)
                mean = jnp.dot(dec, mw, precision=hi) + mb
                loss = loss + jnp.mean(jnp.abs(mean - next_t))
                diff = (mean - next_t) * scale_vec
                pair_sq = jnp.dot(diff * diff, pair_mat, precision=hi)
                pos_dist = pos_dist + jnp.mean(jnp.sqrt(pair_sq))
                imput += 1
    return loss / count / B, pos_dist / imput


# ----------------------------------------------------------------------------
# Deterministic parameter initialization (PyTorch-style uniform bounds)
# ----------------------------------------------------------------------------
def init_weights(key, *, rnn_dim, y_dim, dec_dims, n_players):
    def uni(k, shape, bound):
        return jax.random.uniform(k, shape, jnp.float32, -bound, bound)

    keys = iter(jax.random.split(key, 64))
    kg = 1.0 / math.sqrt(rnn_dim)

    def gru_weights(in_dim):
        # PyTorch nn.GRU layout: weight_ih_l0 [3H, in], gate order (r, z, n).
        w_ih = uni(next(keys), (3 * rnn_dim, in_dim), kg)
        w_hh = uni(next(keys), (3 * rnn_dim, rnn_dim), kg)
        b_ih = uni(next(keys), (3 * rnn_dim,), kg)
        b_hh = uni(next(keys), (3 * rnn_dim,), kg)
        # Stacked-gate layout for x @ W: W:[in, 3H]; bias [1, 3H].
        return (w_ih.T, w_hh.T,
                b_ih.reshape(1, 3 * rnn_dim), b_hh.reshape(1, 3 * rnn_dim))

    fwd = gru_weights(y_dim)          # self.gru      : input y_dim
    bwd = gru_weights(y_dim + 1)      # self.back_gru : input y_dim + 1

    levels = []
    for dim in dec_dims:
        kd = 1.0 / math.sqrt(2 * rnn_dim)
        dec_W = uni(next(keys), (dim, 2 * rnn_dim), kd)     # Linear(2*rnn, dim)
        dec_b = uni(next(keys), (dim,), kd)
        km = 1.0 / math.sqrt(dim)
        mean_W = uni(next(keys), (y_dim, dim), km)          # Linear(dim, y_dim)
        mean_b = uni(next(keys), (y_dim,), km)
        levels += [dec_W[:, :rnn_dim].T, dec_W[:, rnn_dim:].T,
                   dec_b.reshape(1, dim), mean_W.T, mean_b.reshape(1, y_dim)]

    # TODO(synk): reshape_tensor() is not part of the provided module source; assumed
    # semantics: 'pos' = the (x, y) pair per player, upscale = multiply by (108, 72).
    scale_vec = jnp.tile(jnp.array([PITCH_X, PITCH_Y], jnp.float32),
                         n_players).reshape(1, y_dim)
    # pairing matrix sums squared (x, y) per player -> avoids in-kernel lane reshapes
    pair_mat = jnp.kron(jnp.eye(n_players, dtype=jnp.float32),
                        jnp.ones((2, 1), jnp.float32))      # [y_dim, n_players]

    return list(fwd) + list(bwd) + levels + [scale_vec, pair_mat]


# ----------------------------------------------------------------------------
if __name__ == "__main__":
    params = dict(dataset="soccer", n_features=2, team_size=4, single_team=True,
                  stochastic=False, rnn_dim=32, n_layers=1, n_highest=2,
                  batch_size=2, agent_wise=False, dec1_dim=32, dec2_dim=32,
                  ppe=False, fpe=False, fpi=False, cuda=False)

    T = 8
    bs = params["batch_size"]
    n_players = params["team_size"]                 # single_team=True
    y_dim = n_players * params["n_features"]        # 8
    rnn_dim = params["rnn_dim"]
    step_sizes = [1, 2]                             # powers of 2 up to n_highest
    dec_dims = [params["dec1_dim"], params["dec2_dim"]]

    key = jax.random.PRNGKey(0)
    k_w, k_mask, k_vals, k_gt = jax.random.split(key, 4)
    weights = init_weights(k_w, rnn_dim=rnn_dim, y_dim=y_dim,
                           dec_dims=dec_dims, n_players=n_players)
    gru_pack, dec_pack = pack_params(weights, len(step_sizes), rnn_dim, y_dim, n_players)

    has_value = jax.random.bernoulli(k_mask, 0.7, (T, bs, 1)).astype(jnp.float32)
    values = jax.random.uniform(k_vals, (T, bs, y_dim), dtype=jnp.float32)
    data = jnp.concatenate([has_value, values], axis=-1)          # [T, bs, 1 + y_dim]
    ground_truth = jax.random.uniform(k_gt, (T, bs, y_dim), dtype=jnp.float32)

    loss, pos_dist = naomi_imputer_forward(data, ground_truth, gru_pack, dec_pack,
                                           step_sizes, y_dim=y_dim, n_players=n_players)
    (loss, pos_dist) = jax.block_until_ready((loss, pos_dist))

    # Pure-JAX reference check (kernel matmuls use MXU default precision; tolerance
    # covers EUP-vs-XLA transcendental and MXU-precision/reduction-order differences).
    ref_loss, ref_pd = jax.jit(
        lambda d, g: naomi_imputer_ref(d, g, weights, step_sizes))(data, ground_truth)
    np.testing.assert_allclose(np.asarray(loss), np.asarray(ref_loss), rtol=1e-3, atol=1e-3)
    np.testing.assert_allclose(np.asarray(pos_dist), np.asarray(ref_pd), rtol=1e-3, atol=1e-3)

    print("KERNEL_OK")
</pallas_src>

<mosaic_0001>
module attributes {stable_mosaic.version = 11 : i64} {
  func.func @kernel(%arg0: memref<16x128xf32, #tpu.memory_space<vmem>>, %arg1: memref<386x768xf32, #tpu.memory_space<vmem>>, %arg2: memref<800x128xf32, #tpu.memory_space<vmem>>, %arg3: memref<1x1xf32, #tpu.memory_space<smem>>, %arg4: memref<1x1xf32, #tpu.memory_space<smem>>, %arg5: memref<14x128xf32, #tpu.memory_space<vmem>>, %arg6: memref<14x128xf32, #tpu.memory_space<vmem>>) attributes {dimension_semantics = [], scalar_prefetch = 0 : i64, scratch_operands = 2 : i64, tpu.core_type = #tpu.core_type<tc>} {
    %c0 = arith.constant 0 : index
    %c0_0 = arith.constant 0 : index
    %0 = vector.load %arg0[%c0, %c0_0] : memref<16x128xf32, #tpu.memory_space<vmem>>, vector<16x128xf32>
    %c0_1 = arith.constant 0 : index
    %c0_2 = arith.constant 0 : index
    %1 = vector.load %arg1[%c0_1, %c0_2] : memref<386x768xf32, #tpu.memory_space<vmem>>, vector<256x768xf32>
    %c256 = arith.constant 256 : index
    %c0_3 = arith.constant 0 : index
    %2 = vector.load %arg1[%c256, %c0_3] : memref<386x768xf32, #tpu.memory_space<vmem>>, vector<128x768xf32>
    %c384 = arith.constant 384 : index
    %c0_4 = arith.constant 0 : index
    %3 = vector.load %arg1[%c384, %c0_4] : memref<386x768xf32, #tpu.memory_space<vmem>>, vector<1x768xf32>
    %c385 = arith.constant 385 : index
    %c0_5 = arith.constant 0 : index
    %4 = vector.load %arg1[%c385, %c0_5] : memref<386x768xf32, #tpu.memory_space<vmem>>, vector<1x768xf32>
    %cst = arith.constant dense<0.000000e+00> : vector<16x768xf32>
    %5 = tpu.matmul %0, %2, %cst {dimension_numbers = #tpu.dot_dimension_numbers<[1], [0], [0], [1], [0, 0, 1, 1], [], []>} : vector<16x128xf32>, vector<128x768xf32>, vector<16x768xf32> -> vector<16x768xf32>
    %6 = vector.broadcast %4 : vector<1x768xf32> to vector<16x768xf32>
    %7 = arith.addf %5, %6 : vector<16x768xf32>
    %cst_6 = arith.constant 0.000000e+00 : f32
    %8 = vector.broadcast %cst_6 : f32 to vector<2x256xf32>
    %9 = vector.extract_strided_slice %8 {offsets = [0, 128], sizes = [2, 128], strides = [1, 1]} : vector<2x256xf32> to vector<2x128xf32>
    %c12 = arith.constant 12 : index
    %c0_7 = arith.constant 0 : index
    %10 = vector.load %arg6[%c12, %c0_7] : memref<14x128xf32, #tpu.memory_space<vmem>>, vector<2x128xf32>
    tpu.vector_store %arg6[%c12, %c0_7], %9 {strides = array<i32>} : memref<14x128xf32, #tpu.memory_space<vmem>>, vector<2x128xf32>,
    %11 = vector.extract_strided_slice %7 {offsets = [0, 0], sizes = [2, 768], strides = [1, 1]} : vector<16x768xf32> to vector<2x768xf32>
    %cst_8 = arith.constant dense<0.000000e+00> : vector<2x768xf32>
    %12 = tpu.matmul %8, %1, %cst_8 {dimension_numbers = #tpu.dot_dimension_numbers<[1], [0], [0], [1], [0, 0, 1, 1], [], []>} : vector<2x256xf32>, vector<256x768xf32>, vector<2x768xf32> -> vector<2x768xf32>
    %13 = vector.broadcast %3 : vector<1x768xf32> to vector<2x768xf32>
    %14 = arith.addf %12, %13 : vector<2x768xf32>
    %15 = vector.extract_strided_slice %11 {offsets = [0, 0], sizes = [2, 512], strides = [1, 1]} : vector<2x768xf32> to vector<2x512xf32>
    %16 = vector.extract_strided_slice %14 {offsets = [0, 0], sizes = [2, 512], strides = [1, 1]} : vector<2x768xf32> to vector<2x512xf32>
    %17 = arith.addf %15, %16 : vector<2x512xf32>
    %18 = arith.negf %17 : vector<2x512xf32>
    %19 = math.exp %18 : vector<2x512xf32>
    %cst_9 = arith.constant 1.000000e+00 : f32
    %20 = vector.broadcast %cst_9 : f32 to vector<2x512xf32>
    %21 = arith.addf %20, %19 : vector<2x512xf32>
    %22 = arith.divf %20, %21 : vector<2x512xf32>
    %23 = vector.extract_strided_slice %22 {offsets = [0, 0], sizes = [2, 256], strides = [1, 1]} : vector<2x512xf32> to vector<2x256xf32>
    %24 = vector.extract_strided_slice %22 {offsets = [0, 256], sizes = [2, 256], strides = [1, 1]} : vector<2x512xf32> to vector<2x256xf32>
    %25 = vector.extract_strided_slice %11 {offsets = [0, 512], sizes = [2, 256], strides = [1, 1]} : vector<2x768xf32> to vector<2x256xf32>
    %26 = vector.extract_strided_slice %14 {offsets = [0, 512], sizes = [2, 256], strides = [1, 1]} : vector<2x768xf32> to vector<2x256xf32>
    %27 = arith.mulf %23, %26 : vector<2x256xf32>
    %28 = arith.addf %25, %27 : vector<2x256xf32>
    %29 = math.tanh %28 : vector<2x256xf32>
    %cst_10 = arith.constant 1.000000e+00 : f32
    %30 = vector.broadcast %cst_10 : f32 to vector<2x256xf32>
    %31 = arith.subf %30, %24 : vector<2x256xf32>
    %32 = arith.mulf %31, %29 : vector<2x256xf32>
    %33 = arith.mulf %24, %8 : vector<2x256xf32>
    %34 = arith.addf %32, %33 : vector<2x256xf32>
    %35 = vector.extract_strided_slice %34 {offsets = [0, 0], sizes = [2, 128], strides = [1, 1]} : vector<2x256xf32> to vector<2x128xf32>
    %c0_11 = arith.constant 0 : index
    %c0_12 = arith.constant 0 : index
    %36 = vector.load %arg5[%c0_11, %c0_12] : memref<14x128xf32, #tpu.memory_space<vmem>>, vector<2x128xf32>
    tpu.vector_store %arg5[%c0_11, %c0_12], %35 {strides = array<i32>} : memref<14x128xf32, #tpu.memory_space<vmem>>, vector<2x128xf32>,
    %37 = vector.extract_strided_slice %34 {offsets = [0, 128], sizes = [2, 128], strides = [1, 1]} : vector<2x256xf32> to vector<2x128xf32>
    %c10 = arith.constant 10 : index
    %c0_13 = arith.constant 0 : index
    %38 = vector.load %arg6[%c10, %c0_13] : memref<14x128xf32, #tpu.memory_space<vmem>>, vector<2x128xf32>
    tpu.vector_store %arg6[%c10, %c0_13], %37 {strides = array<i32>} : memref<14x128xf32, #tpu.memory_space<vmem>>, vector<2x128xf32>,
    %39 = vector.extract_strided_slice %7 {offsets = [2, 0], sizes = [2, 768], strides = [1, 1]} : vector<16x768xf32> to vector<2x768xf32>
    %cst_14 = arith.constant dense<0.000000e+00> : vector<2x768xf32>
    %40 = tpu.matmul %34, %1, %cst_14 {dimension_numbers = #tpu.dot_dimension_numbers<[1], [0], [0], [1], [0, 0, 1, 1], [], []>} : vector<2x256xf32>, vector<256x768xf32>, vector<2x768xf32> -> vector<2x768xf32>
    %41 = vector.broadcast %3 : vector<1x768xf32> to vector<2x768xf32>
    %42 = arith.addf %40, %41 : vector<2x768xf32>
    %43 = vector.extract_strided_slice %39 {offsets = [0, 0], sizes = [2, 512], strides = [1, 1]} : vector<2x768xf32> to vector<2x512xf32>
    %44 = vector.extract_strided_slice %42 {offsets = [0, 0], sizes = [2, 512], strides = [1, 1]} : vector<2x768xf32> to vector<2x512xf32>
    %45 = arith.addf %43, %44 : vector<2x512xf32>
    %46 = arith.negf %45 : vector<2x512xf32>
    %47 = math.exp %46 : vector<2x512xf32>
    %cst_15 = arith.constant 1.000000e+00 : f32
    %48 = vector.broadcast %cst_15 : f32 to vector<2x512xf32>
    %49 = arith.addf %48, %47 : vector<2x512xf32>
    %50 = arith.divf %48, %49 : vector<2x512xf32>
    %51 = vector.extract_strided_slice %50 {offsets = [0, 0], sizes = [2, 256], strides = [1, 1]} : vector<2x512xf32> to vector<2x256xf32>
    %52 = vector.extract_strided_slice %50 {offsets = [0, 256], sizes = [2, 256], strides = [1, 1]} : vector<2x512xf32> to vector<2x256xf32>
    %53 = vector.extract_strided_slice %39 {offsets = [0, 512], sizes = [2, 256], strides = [1, 1]} : vector<2x768xf32> to vector<2x256xf32>
    %54 = vector.extract_strided_slice %42 {offsets = [0, 512], sizes = [2, 256], strides = [1, 1]} : vector<2x768xf32> to vector<2x256xf32>
    %55 = arith.mulf %51, %54 : vector<2x256xf32>
    %56 = arith.addf %53, %55 : vector<2x256xf32>
    %57 = math.tanh %56 : vector<2x256xf32>
    %cst_16 = arith.constant 1.000000e+00 : f32
    %58 = vector.broadcast %cst_16 : f32 to vector<2x256xf32>
    %59 = arith.subf %58, %52 : vector<2x256xf32>
    %60 = arith.mulf %59, %57 : vector<2x256xf32>
    %61 = arith.mulf %52, %34 : vector<2x256xf32>
    %62 = arith.addf %60, %61 : vector<2x256xf32>
    %63 = vector.extract_strided_slice %62 {offsets = [0, 0], sizes = [2, 128], strides = [1, 1]} : vector<2x256xf32> to vector<2x128xf32>
    %c2 = arith.constant 2 : index
    %c0_17 = arith.constant 0 : index
    %64 = vector.load %arg5[%c2, %c0_17] : memref<14x128xf32, #tpu.memory_space<vmem>>, vector<2x128xf32>
    tpu.vector_store %arg5[%c2, %c0_17], %63 {strides = array<i32>} : memref<14x128xf32, #tpu.memory_space<vmem>>, vector<2x128xf32>,
    %65 = vector.extract_strided_slice %62 {offsets = [0, 128], sizes = [2, 128], strides = [1, 1]} : vector<2x256xf32> to vector<2x128xf32>
    %c8 = arith.constant 8 : index
    %c0_18 = arith.constant 0 : index
    %66 = vector.load %arg6[%c8, %c0_18] : memref<14x128xf32, #tpu.memory_space<vmem>>, vector<2x128xf32>
    tpu.vector_store %arg6[%c8, %c0_18], %65 {strides = array<i32>} : memref<14x128xf32, #tpu.memory_space<vmem>>, vector<2x128xf32>,
    %67 = vector.extract_strided_slice %7 {offsets = [4, 0], sizes = [2, 768], strides = [1, 1]} : vector<16x768xf32> to vector<2x768xf32>
    %cst_19 = arith.constant dense<0.000000e+00> : vector<2x768xf32>
    %68 = tpu.matmul %62, %1, %cst_19 {dimension_numbers = #tpu.dot_dimension_numbers<[1], [0], [0], [1], [0, 0, 1, 1], [], []>} : vector<2x256xf32>, vector<256x768xf32>, vector<2x768xf32> -> vector<2x768xf32>
    %69 = vector.broadcast %3 : vector<1x768xf32> to vector<2x768xf32>
    %70 = arith.addf %68, %69 : vector<2x768xf32>
    %71 = vector.extract_strided_slice %67 {offsets = [0, 0], sizes = [2, 512], strides = [1, 1]} : vector<2x768xf32> to vector<2x512xf32>
    %72 = vector.extract_strided_slice %70 {offsets = [0, 0], sizes = [2, 512], strides = [1, 1]} : vector<2x768xf32> to vector<2x512xf32>
    %73 = arith.addf %71, %72 : vector<2x512xf32>
    %74 = arith.negf %73 : vector<2x512xf32>
    %75 = math.exp %74 : vector<2x512xf32>
    %cst_20 = arith.constant 1.000000e+00 : f32
    %76 = vector.broadcast %cst_20 : f32 to vector<2x512xf32>
    %77 = arith.addf %76, %75 : vector<2x512xf32>
    %78 = arith.divf %76, %77 : vector<2x512xf32>
    %79 = vector.extract_strided_slice %78 {offsets = [0, 0], sizes = [2, 256], strides = [1, 1]} : vector<2x512xf32> to vector<2x256xf32>
    %80 = vector.extract_strided_slice %78 {offsets = [0, 256], sizes = [2, 256], strides = [1, 1]} : vector<2x512xf32> to vector<2x256xf32>
    %81 = vector.extract_strided_slice %67 {offsets = [0, 512], sizes = [2, 256], strides = [1, 1]} : vector<2x768xf32> to vector<2x256xf32>
    %82 = vector.extract_strided_slice %70 {offsets = [0, 512], sizes = [2, 256], strides = [1, 1]} : vector<2x768xf32> to vector<2x256xf32>
    %83 = arith.mulf %79, %82 : vector<2x256xf32>
    %84 = arith.addf %81, %83 : vector<2x256xf32>
    %85 = math.tanh %84 : vector<2x256xf32>
    %cst_21 = arith.constant 1.000000e+00 : f32
    %86 = vector.broadcast %cst_21 : f32 to vector<2x256xf32>
    %87 = arith.subf %86, %80 : vector<2x256xf32>
    %88 = arith.mulf %87, %85 : vector<2x256xf32>
    %89 = arith.mulf %80, %62 : vector<2x256xf32>
    %90 = arith.addf %88, %89 : vector<2x256xf32>
    %91 = vector.extract_strided_slice %90 {offsets = [0, 0], sizes = [2, 128], strides = [1, 1]} : vector<2x256xf32> to vector<2x128xf32>
    %c4 = arith.constant 4 : index
    %c0_22 = arith.constant 0 : index
    %92 = vector.load %arg5[%c4, %c0_22] : memref<14x128xf32, #tpu.memory_space<vmem>>, vector<2x128xf32>
    tpu.vector_store %arg5[%c4, %c0_22], %91 {strides = array<i32>} : memref<14x128xf32, #tpu.memory_space<vmem>>, vector<2x128xf32>,
    %93 = vector.extract_strided_slice %90 {offsets = [0, 128], sizes = [2, 128], strides = [1, 1]} : vector<2x256xf32> to vector<2x128xf32>
    %c6 = arith.constant 6 : index
    %c0_23 = arith.constant 0 : index
    %94 = vector.load %arg6[%c6, %c0_23] : memref<14x128xf32, #tpu.memory_space<vmem>>, vector<2x128xf32>
    tpu.vector_store %arg6[%c6, %c0_23], %93 {strides = array<i32>} : memref<14x128xf32, #tpu.memory_space<vmem>>, vector<2x128xf32>,
    %95 = vector.extract_strided_slice %7 {offsets = [6, 0], sizes = [2, 768], strides = [1, 1]} : vector<16x768xf32> to vector<2x768xf32>
    %cst_24 = arith.constant dense<0.000000e+00> : vector<2x768xf32>
    %96 = tpu.matmul %90, %1, %cst_24 {dimension_numbers = #tpu.dot_dimension_numbers<[1], [0], [0], [1], [0, 0, 1, 1], [], []>} : vector<2x256xf32>, vector<256x768xf32>, vector<2x768xf32> -> vector<2x768xf32>
    %97 = vector.broadcast %3 : vector<1x768xf32> to vector<2x768xf32>
    %98 = arith.addf %96, %97 : vector<2x768xf32>
    %99 = vector.extract_strided_slice %95 {offsets = [0, 0], sizes = [2, 512], strides = [1, 1]} : vector<2x768xf32> to vector<2x512xf32>
    %100 = vector.extract_strided_slice %98 {offsets = [0, 0], sizes = [2, 512], strides = [1, 1]} : vector<2x768xf32> to vector<2x512xf32>
    %101 = arith.addf %99, %100 : vector<2x512xf32>
    %102 = arith.negf %101 : vector<2x512xf32>
    %103 = math.exp %102 : vector<2x512xf32>
    %cst_25 = arith.constant 1.000000e+00 : f32
    %104 = vector.broadcast %cst_25 : f32 to vector<2x512xf32>
    %105 = arith.addf %104, %103 : vector<2x512xf32>
    %106 = arith.divf %104, %105 : vector<2x512xf32>
    %107 = vector.extract_strided_slice %106 {offsets = [0, 0], sizes = [2, 256], strides = [1, 1]} : vector<2x512xf32> to vector<2x256xf32>
    %108 = vector.extract_strided_slice %106 {offsets = [0, 256], sizes = [2, 256], strides = [1, 1]} : vector<2x512xf32> to vector<2x256xf32>
    %109 = vector.extract_strided_slice %95 {offsets = [0, 512], sizes = [2, 256], strides = [1, 1]} : vector<2x768xf32> to vector<2x256xf32>
    %110 = vector.extract_strided_slice %98 {offsets = [0, 512], sizes = [2, 256], strides = [1, 1]} : vector<2x768xf32> to vector<2x256xf32>
    %111 = arith.mulf %107, %110 : vector<2x256xf32>
    %112 = arith.addf %109, %111 : vector<2x256xf32>
    %113 = math.tanh %112 : vector<2x256xf32>
    %cst_26 = arith.constant 1.000000e+00 : f32
    %114 = vector.broadcast %cst_26 : f32 to vector<2x256xf32>
    %115 = arith.subf %114, %108 : vector<2x256xf32>
    %116 = arith.mulf %115, %113 : vector<2x256xf32>
    %117 = arith.mulf %108, %90 : vector<2x256xf32>
    %118 = arith.addf %116, %117 : vector<2x256xf32>
    %119 = vector.extract_strided_slice %118 {offsets = [0, 0], sizes = [2, 128], strides = [1, 1]} : vector<2x256xf32> to vector<2x128xf32>
    %c6_27 = arith.constant 6 : index
    %c0_28 = arith.constant 0 : index
    %120 = vector.load %arg5[%c6_27, %c0_28] : memref<14x128xf32, #tpu.memory_space<vmem>>, vector<2x128xf32>
    tpu.vector_store %arg5[%c6_27, %c0_28], %119 {strides = array<i32>} : memref<14x128xf32, #tpu.memory_space<vmem>>, vector<2x128xf32>,
    %121 = vector.extract_strided_slice %118 {offsets = [0, 128], sizes = [2, 128], strides = [1, 1]} : vector<2x256xf32> to vector<2x128xf32>
    %c4_29 = arith.constant 4 : index
    %c0_30 = arith.constant 0 : index
    %122 = vector.load %arg6[%c4_29, %c0_30] : memref<14x128xf32, #tpu.memory_space<vmem>>, vector<2x128xf32>
    tpu.vector_store %arg6[%c4_29, %c0_30], %121 {strides = array<i32>} : memref<14x128xf32, #tpu.memory_space<vmem>>, vector<2x128xf32>,
    %123 = vector.extract_strided_slice %7 {offsets = [8, 0], sizes = [2, 768], strides = [1, 1]} : vector<16x768xf32> to vector<2x768xf32>
    %cst_31 = arith.constant dense<0.000000e+00> : vector<2x768xf32>
    %124 = tpu.matmul %118, %1, %cst_31 {dimension_numbers = #tpu.dot_dimension_numbers<[1], [0], [0], [1], [0, 0, 1, 1], [], []>} : vector<2x256xf32>, vector<256x768xf32>, vector<2x768xf32> -> vector<2x768xf32>
    %125 = vector.broadcast %3 : vector<1x768xf32> to vector<2x768xf32>
    %126 = arith.addf %124, %125 : vector<2x768xf32>
    %127 = vector.extract_strided_slice %123 {offsets = [0, 0], sizes = [2, 512], strides = [1, 1]} : vector<2x768xf32> to vector<2x512xf32>
    %128 = vector.extract_strided_slice %126 {offsets = [0, 0], sizes = [2, 512], strides = [1, 1]} : vector<2x768xf32> to vector<2x512xf32>
    %129 = arith.addf %127, %128 : vector<2x512xf32>
    %130 = arith.negf %129 : vector<2x512xf32>
    %131 = math.exp %130 : vector<2x512xf32>
    %cst_32 = arith.constant 1.000000e+00 : f32
    %132 = vector.broadcast %cst_32 : f32 to vector<2x512xf32>
    %133 = arith.addf %132, %131 : vector<2x512xf32>
    %134 = arith.divf %132, %133 : vector<2x512xf32>
    %135 = vector.extract_strided_slice %134 {offsets = [0, 0], sizes = [2, 256], strides = [1, 1]} : vector<2x512xf32> to vector<2x256xf32>
    %136 = vector.extract_strided_slice %134 {offsets = [0, 256], sizes = [2, 256], strides = [1, 1]} : vector<2x512xf32> to vector<2x256xf32>
    %137 = vector.extract_strided_slice %123 {offsets = [0, 512], sizes = [2, 256], strides = [1, 1]} : vector<2x768xf32> to vector<2x256xf32>
    %138 = vector.extract_strided_slice %126 {offsets = [0, 512], sizes = [2, 256], strides = [1, 1]} : vector<2x768xf32> to vector<2x256xf32>
    %139 = arith.mulf %135, %138 : vector<2x256xf32>
    %140 = arith.addf %137, %139 : vector<2x256xf32>
    %141 = math.tanh %140 : vector<2x256xf32>
    %cst_33 = arith.constant 1.000000e+00 : f32
    %142 = vector.broadcast %cst_33 : f32 to vector<2x256xf32>
    %143 = arith.subf %142, %136 : vector<2x256xf32>
    %144 = arith.mulf %143, %141 : vector<2x256xf32>
    %145 = arith.mulf %136, %118 : vector<2x256xf32>
    %146 = arith.addf %144, %145 : vector<2x256xf32>
    %147 = vector.extract_strided_slice %146 {offsets = [0, 0], sizes = [2, 128], strides = [1, 1]} : vector<2x256xf32> to vector<2x128xf32>
    %c8_34 = arith.constant 8 : index
    %c0_35 = arith.constant 0 : index
    %148 = vector.load %arg5[%c8_34, %c0_35] : memref<14x128xf32, #tpu.memory_space<vmem>>, vector<2x128xf32>
    tpu.vector_store %arg5[%c8_34, %c0_35], %147 {strides = array<i32>} : memref<14x128xf32, #tpu.memory_space<vmem>>, vector<2x128xf32>,
    %149 = vector.extract_strided_slice %146 {offsets = [0, 128], sizes = [2, 128], strides = [1, 1]} : vector<2x256xf32> to vector<2x128xf32>
    %c2_36 = arith.constant 2 : index
    %c0_37 = arith.constant 0 : index
    %150 = vector.load %arg6[%c2_36, %c0_37] : memref<14x128xf32, #tpu.memory_space<vmem>>, vector<2x128xf32>
    tpu.vector_store %arg6[%c2_36, %c0_37], %149 {strides = array<i32>} : memref<14x128xf32, #tpu.memory_space<vmem>>, vector<2x128xf32>,
    %151 = vector.extract_strided_slice %7 {offsets = [10, 0], sizes = [2, 768], strides = [1, 1]} : vector<16x768xf32> to vector<2x768xf32>
    %cst_38 = arith.constant dense<0.000000e+00> : vector<2x768xf32>
    %152 = tpu.matmul %146, %1, %cst_38 {dimension_numbers = #tpu.dot_dimension_numbers<[1], [0], [0], [1], [0, 0, 1, 1], [], []>} : vector<2x256xf32>, vector<256x768xf32>, vector<2x768xf32> -> vector<2x768xf32>
    %153 = vector.broadcast %3 : vector<1x768xf32> to vector<2x768xf32>
    %154 = arith.addf %152, %153 : vector<2x768xf32>
    %155 = vector.extract_strided_slice %151 {offsets = [0, 0], sizes = [2, 512], strides = [1, 1]} : vector<2x768xf32> to vector<2x512xf32>
    %156 = vector.extract_strided_slice %154 {offsets = [0, 0], sizes = [2, 512], strides = [1, 1]} : vector<2x768xf32> to vector<2x512xf32>
    %157 = arith.addf %155, %156 : vector<2x512xf32>
    %158 = arith.negf %157 : vector<2x512xf32>
    %159 = math.exp %158 : vector<2x512xf32>
    %cst_39 = arith.constant 1.000000e+00 : f32
    %160 = vector.broadcast %cst_39 : f32 to vector<2x512xf32>
    %161 = arith.addf %160, %159 : vector<2x512xf32>
    %162 = arith.divf %160, %161 : vector<2x512xf32>
    %163 = vector.extract_strided_slice %162 {offsets = [0, 0], sizes = [2, 256], strides = [1, 1]} : vector<2x512xf32> to vector<2x256xf32>
    %164 = vector.extract_strided_slice %162 {offsets = [0, 256], sizes = [2, 256], strides = [1, 1]} : vector<2x512xf32> to vector<2x256xf32>
    %165 = vector.extract_strided_slice %151 {offsets = [0, 512], sizes = [2, 256], strides = [1, 1]} : vector<2x768xf32> to vector<2x256xf32>
    %166 = vector.extract_strided_slice %154 {offsets = [0, 512], sizes = [2, 256], strides = [1, 1]} : vector<2x768xf32> to vector<2x256xf32>
    %167 = arith.mulf %163, %166 : vector<2x256xf32>
    %168 = arith.addf %165, %167 : vector<2x256xf32>
    %169 = math.tanh %168 : vector<2x256xf32>
    %cst_40 = arith.constant 1.000000e+00 : f32
    %170 = vector.broadcast %cst_40 : f32 to vector<2x256xf32>
    %171 = arith.subf %170, %164 : vector<2x256xf32>
    %172 = arith.mulf %171, %169 : vector<2x256xf32>
    %173 = arith.mulf %164, %146 : vector<2x256xf32>
    %174 = arith.addf %172, %173 : vector<2x256xf32>
    %175 = vector.extract_strided_slice %174 {offsets = [0, 0], sizes = [2, 128], strides = [1, 1]} : vector<2x256xf32> to vector<2x128xf32>
    %c10_41 = arith.constant 10 : index
    %c0_42 = arith.constant 0 : index
    %176 = vector.load %arg5[%c10_41, %c0_42] : memref<14x128xf32, #tpu.memory_space<vmem>>, vector<2x128xf32>
    tpu.vector_store %arg5[%c10_41, %c0_42], %175 {strides = array<i32>} : memref<14x128xf32, #tpu.memory_space<vmem>>, vector<2x128xf32>,
    %177 = vector.extract_strided_slice %174 {offsets = [0, 128], sizes = [2, 128], strides = [1, 1]} : vector<2x256xf32> to vector<2x128xf32>
    %c0_43 = arith.constant 0 : index
    %c0_44 = arith.constant 0 : index
    %178 = vector.load %arg6[%c0_43, %c0_44] : memref<14x128xf32, #tpu.memory_space<vmem>>, vector<2x128xf32>
    tpu.vector_store %arg6[%c0_43, %c0_44], %177 {strides = array<i32>} : memref<14x128xf32, #tpu.memory_space<vmem>>, vector<2x128xf32>,
    %179 = vector.extract_strided_slice %7 {offsets = [12, 0], sizes = [2, 768], strides = [1, 1]} : vector<16x768xf32> to vector<2x768xf32>
    %cst_45 = arith.constant dense<0.000000e+00> : vector<2x768xf32>
    %180 = tpu.matmul %174, %1, %cst_45 {dimension_numbers = #tpu.dot_dimension_numbers<[1], [0], [0], [1], [0, 0, 1, 1], [], []>} : vector<2x256xf32>, vector<256x768xf32>, vector<2x768xf32> -> vector<2x768xf32>
    %181 = vector.broadcast %3 : vector<1x768xf32> to vector<2x768xf32>
    %182 = arith.addf %180, %181 : vector<2x768xf32>
    %183 = vector.extract_strided_slice %179 {offsets = [0, 0], sizes = [2, 512], strides = [1, 1]} : vector<2x768xf32> to vector<2x512xf32>
    %184 = vector.extract_strided_slice %182 {offsets = [0, 0], sizes = [2, 512], strides = [1, 1]} : vector<2x768xf32> to vector<2x512xf32>
    %185 = arith.addf %183, %184 : vector<2x512xf32>
    %186 = arith.negf %185 : vector<2x512xf32>
    %187 = math.exp %186 : vector<2x512xf32>
    %cst_46 = arith.constant 1.000000e+00 : f32
    %188 = vector.broadcast %cst_46 : f32 to vector<2x512xf32>
    %189 = arith.addf %188, %187 : vector<2x512xf32>
    %190 = arith.divf %188, %189 : vector<2x512xf32>
    %191 = vector.extract_strided_slice %190 {offsets = [0, 0], sizes = [2, 256], strides = [1, 1]} : vector<2x512xf32> to vector<2x256xf32>
    %192 = vector.extract_strided_slice %190 {offsets = [0, 256], sizes = [2, 256], strides = [1, 1]} : vector<2x512xf32> to vector<2x256xf32>
    %193 = vector.extract_strided_slice %179 {offsets = [0, 512], sizes = [2, 256], strides = [1, 1]} : vector<2x768xf32> to vector<2x256xf32>
    %194 = vector.extract_strided_slice %182 {offsets = [0, 512], sizes = [2, 256], strides = [1, 1]} : vector<2x768xf32> to vector<2x256xf32>
    %195 = arith.mulf %191, %194 : vector<2x256xf32>
    %196 = arith.addf %193, %195 : vector<2x256xf32>
    %197 = math.tanh %196 : vector<2x256xf32>
    %cst_47 = arith.constant 1.000000e+00 : f32
    %198 = vector.broadcast %cst_47 : f32 to vector<2x256xf32>
    %199 = arith.subf %198, %192 : vector<2x256xf32>
    %200 = arith.mulf %199, %197 : vector<2x256xf32>
    %201 = arith.mulf %192, %174 : vector<2x256xf32>
    %202 = arith.addf %200, %201 : vector<2x256xf32>
    %203 = vector.extract_strided_slice %202 {offsets = [0, 0], sizes = [2, 128], strides = [1, 1]} : vector<2x256xf32> to vector<2x128xf32>
    %c12_48 = arith.constant 12 : index
    %c0_49 = arith.constant 0 : index
    %204 = vector.load %arg5[%c12_48, %c0_49] : memref<14x128xf32, #tpu.memory_space<vmem>>, vector<2x128xf32>
    tpu.vector_store %arg5[%c12_48, %c0_49], %203 {strides = array<i32>} : memref<14x128xf32, #tpu.memory_space<vmem>>, vector<2x128xf32>,
    %c784 = arith.constant 784 : index
    %c0_50 = arith.constant 0 : index
    %205 = vector.load %arg2[%c784, %c0_50] : memref<800x128xf32, #tpu.memory_space<vmem>>, vector<1x8xf32>
    %c792 = arith.constant 792 : index
    %c0_51 = arith.constant 0 : index
    %206 = vector.load %arg2[%c792, %c0_51] : memref<800x128xf32, #tpu.memory_space<vmem>>, vector<8x4xf32>
    %c0_52 = arith.constant 0 : index
    %c0_53 = arith.constant 0 : index
    %207 = vector.load %arg2[%c0_52, %c0_53] : memref<800x128xf32, #tpu.memory_space<vmem>>, vector<128x128xf32>
    %c128 = arith.constant 128 : index
    %c0_54 = arith.constant 0 : index
    %208 = vector.load %arg2[%c128, %c0_54] : memref<800x128xf32, #tpu.memory_space<vmem>>, vector<128x128xf32>
    %c256_55 = arith.constant 256 : index
    %c0_56 = arith.constant 0 : index
    %209 = vector.load %arg2[%c256_55, %c0_56] : memref<800x128xf32, #tpu.memory_space<vmem>>, vector<128x128xf32>
    %c384_57 = arith.constant 384 : index
    %c0_58 = arith.constant 0 : index
    %210 = vector.load %arg2[%c384_57, %c0_58] : memref<800x128xf32, #tpu.memory_space<vmem>>, vector<1x128xf32>
    %c385_59 = arith.constant 385 : index
    %c0_60 = arith.constant 0 : index
    %211 = vector.load %arg2[%c385_59, %c0_60] : memref<800x128xf32, #tpu.memory_space<vmem>>, vector<1x8xf32>
    %c0_61 = arith.constant 0 : index
    %c0_62 = arith.constant 0 : index
    %212 = vector.load %arg5[%c0_61, %c0_62] : memref<14x128xf32, #tpu.memory_space<vmem>>, vector<14x128xf32>
    %c0_63 = arith.constant 0 : index
    %c0_64 = arith.constant 0 : index
    %213 = vector.load %arg6[%c0_63, %c0_64] : memref<14x128xf32, #tpu.memory_space<vmem>>, vector<14x128xf32>
    %214 = vector.extract_strided_slice %0 {offsets = [2, 0], sizes = [14, 8], strides = [1, 1]} : vector<16x128xf32> to vector<14x8xf32>
    %cst_65 = arith.constant dense<0.000000e+00> : vector<14x128xf32>
    %215 = tpu.matmul %212, %207, %cst_65 {dimension_numbers = #tpu.dot_dimension_numbers<[1], [0], [0], [1], [0, 0, 1, 1], [], []>} : vector<14x128xf32>, vector<128x128xf32>, vector<14x128xf32> -> vector<14x128xf32>
    %cst_66 = arith.constant dense<0.000000e+00> : vector<14x128xf32>
    %216 = tpu.matmul %213, %208, %cst_66 {dimension_numbers = #tpu.dot_dimension_numbers<[1], [0], [0], [1], [0, 0, 1, 1], [], []>} : vector<14x128xf32>, vector<128x128xf32>, vector<14x128xf32> -> vector<14x128xf32>
    %217 = arith.addf %215, %216 : vector<14x128xf32>
    %218 = vector.broadcast %210 : vector<1x128xf32> to vector<14x128xf32>
    %219 = arith.addf %217, %218 : vector<14x128xf32>
    %cst_67 = arith.constant 0.000000e+00 : f32
    %220 = vector.broadcast %cst_67 : f32 to vector<14x128xf32>
    %221 = arith.maximumf %219, %220 : vector<14x128xf32>
    %cst_68 = arith.constant dense<0.000000e+00> : vector<14x128xf32>
    %222 = tpu.matmul %221, %209, %cst_68 {dimension_numbers = #tpu.dot_dimension_numbers<[1], [0], [0], [1], [0, 0, 1, 1], [], []>} : vector<14x128xf32>, vector<128x128xf32>, vector<14x128xf32> -> vector<14x128xf32>
    %223 = vector.extract_strided_slice %222 {offsets = [0, 0], sizes = [14, 8], strides = [1, 1]} : vector<14x128xf32> to vector<14x8xf32>
    %224 = vector.broadcast %211 : vector<1x8xf32> to vector<14x8xf32>
    %225 = arith.addf %223, %224 : vector<14x8xf32>
    %226 = arith.subf %225, %214 : vector<14x8xf32>
    %227 = math.absf %226 : vector<14x8xf32>
    %228 = vector.shape_cast %227 : vector<14x8xf32> to vector<1x14x8xf32>
    %cst_69 = arith.constant dense<0.000000e+00> : vector<1xf32>
    %229 = vector.multi_reduction <add>, %228, %cst_69 [1, 2] : vector<1x14x8xf32> to vector<1xf32>
    %230 = vector.shape_cast %229 : vector<1xf32> to vector<1x1x1xf32>
    %231 = vector.extract %230[0, 0, 0] : f32 from vector<1x1x1xf32>
    %cst_70 = arith.constant 1.600000e+01 : f32
    %232 = arith.divf %231, %cst_70 : f32
    %cst_71 = arith.constant 0.000000e+00 : f32
    %233 = arith.addf %cst_71, %232 : f32
    %234 = vector.broadcast %205 : vector<1x8xf32> to vector<14x8xf32>
    %235 = arith.mulf %226, %234 : vector<14x8xf32>
    %236 = arith.mulf %235, %235 : vector<14x8xf32>
    %cst_72 = arith.constant dense<0.000000e+00> : vector<14x4xf32>
    %237 = tpu.matmul %236, %206, %cst_72 {dimension_numbers = #tpu.dot_dimension_numbers<[1], [0], [0], [1], [0, 0, 1, 1], [], []>} : vector<14x8xf32>, vector<8x4xf32>, vector<14x4xf32> -> vector<14x4xf32>
    %238 = math.sqrt %237 : vector<14x4xf32>
    %239 = vector.shape_cast %238 : vector<14x4xf32> to vector<1x14x4xf32>
    %cst_73 = arith.constant dense<0.000000e+00> : vector<1xf32>
    %240 = vector.multi_reduction <add>, %239, %cst_73 [1, 2] : vector<1x14x4xf32> to vector<1xf32>
    %241 = vector.shape_cast %240 : vector<1xf32> to vector<1x1x1xf32>
    %242 = vector.extract %241[0, 0, 0] : f32 from vector<1x1x1xf32>
    %cst_74 = arith.constant 8.000000e+00 : f32
    %243 = arith.divf %242, %cst_74 : f32
    %cst_75 = arith.constant 0.000000e+00 : f32
    %244 = arith.addf %cst_75, %243 : f32
    %c392 = arith.constant 392 : index
    %c0_76 = arith.constant 0 : index
    %245 = vector.load %arg2[%c392, %c0_76] : memref<800x128xf32, #tpu.memory_space<vmem>>, vector<128x128xf32>
    %c520 = arith.constant 520 : index
    %c0_77 = arith.constant 0 : index
    %246 = vector.load %arg2[%c520, %c0_77] : memref<800x128xf32, #tpu.memory_space<vmem>>, vector<128x128xf32>
    %c648 = arith.constant 648 : index
    %c0_78 = arith.constant 0 : index
    %247 = vector.load %arg2[%c648, %c0_78] : memref<800x128xf32, #tpu.memory_space<vmem>>, vector<128x128xf32>
    %c776 = arith.constant 776 : index
    %c0_79 = arith.constant 0 : index
    %248 = vector.load %arg2[%c776, %c0_79] : memref<800x128xf32, #tpu.memory_space<vmem>>, vector<1x128xf32>
    %c777 = arith.constant 777 : index
    %c0_80 = arith.constant 0 : index
    %249 = vector.load %arg2[%c777, %c0_80] : memref<800x128xf32, #tpu.memory_space<vmem>>, vector<1x8xf32>
    %c0_81 = arith.constant 0 : index
    %c0_82 = arith.constant 0 : index
    %250 = vector.load %arg5[%c0_81, %c0_82] : memref<14x128xf32, #tpu.memory_space<vmem>>, vector<10x128xf32>
    %c4_83 = arith.constant 4 : index
    %c0_84 = arith.constant 0 : index
    %251 = vector.load %arg6[%c4_83, %c0_84] : memref<14x128xf32, #tpu.memory_space<vmem>>, vector<10x128xf32>
    %252 = vector.extract_strided_slice %0 {offsets = [4, 0], sizes = [10, 8], strides = [1, 1]} : vector<16x128xf32> to vector<10x8xf32>
    %cst_85 = arith.constant dense<0.000000e+00> : vector<10x128xf32>
    %253 = tpu.matmul %250, %245, %cst_85 {dimension_numbers = #tpu.dot_dimension_numbers<[1], [0], [0], [1], [0, 0, 1, 1], [], []>} : vector<10x128xf32>, vector<128x128xf32>, vector<10x128xf32> -> vector<10x128xf32>
    %cst_86 = arith.constant dense<0.000000e+00> : vector<10x128xf32>
    %254 = tpu.matmul %251, %246, %cst_86 {dimension_numbers = #tpu.dot_dimension_numbers<[1], [0], [0], [1], [0, 0, 1, 1], [], []>} : vector<10x128xf32>, vector<128x128xf32>, vector<10x128xf32> -> vector<10x128xf32>
    %255 = arith.addf %253, %254 : vector<10x128xf32>
    %256 = vector.broadcast %248 : vector<1x128xf32> to vector<10x128xf32>
    %257 = arith.addf %255, %256 : vector<10x128xf32>
    %cst_87 = arith.constant 0.000000e+00 : f32
    %258 = vector.broadcast %cst_87 : f32 to vector<10x128xf32>
    %259 = arith.maximumf %257, %258 : vector<10x128xf32>
    %cst_88 = arith.constant dense<0.000000e+00> : vector<10x128xf32>
    %260 = tpu.matmul %259, %247, %cst_88 {dimension_numbers = #tpu.dot_dimension_numbers<[1], [0], [0], [1], [0, 0, 1, 1], [], []>} : vector<10x128xf32>, vector<128x128xf32>, vector<10x128xf32> -> vector<10x128xf32>
    %261 = vector.extract_strided_slice %260 {offsets = [0, 0], sizes = [10, 8], strides = [1, 1]} : vector<10x128xf32> to vector<10x8xf32>
    %262 = vector.broadcast %249 : vector<1x8xf32> to vector<10x8xf32>
    %263 = arith.addf %261, %262 : vector<10x8xf32>
    %264 = arith.subf %263, %252 : vector<10x8xf32>
    %265 = math.absf %264 : vector<10x8xf32>
    %266 = vector.shape_cast %265 : vector<10x8xf32> to vector<1x10x8xf32>
    %cst_89 = arith.constant dense<0.000000e+00> : vector<1xf32>
    %267 = vector.multi_reduction <add>, %266, %cst_89 [1, 2] : vector<1x10x8xf32> to vector<1xf32>
    %268 = vector.shape_cast %267 : vector<1xf32> to vector<1x1x1xf32>
    %269 = vector.extract %268[0, 0, 0] : f32 from vector<1x1x1xf32>
    %cst_90 = arith.constant 1.600000e+01 : f32
    %270 = arith.divf %269, %cst_90 : f32
    %271 = arith.addf %233, %270 : f32
    %272 = vector.broadcast %205 : vector<1x8xf32> to vector<10x8xf32>
    %273 = arith.mulf %264, %272 : vector<10x8xf32>
    %274 = arith.mulf %273, %273 : vector<10x8xf32>
    %cst_91 = arith.constant dense<0.000000e+00> : vector<10x4xf32>
    %275 = tpu.matmul %274, %206, %cst_91 {dimension_numbers = #tpu.dot_dimension_numbers<[1], [0], [0], [1], [0, 0, 1, 1], [], []>} : vector<10x8xf32>, vector<8x4xf32>, vector<10x4xf32> -> vector<10x4xf32>
    %276 = math.sqrt %275 : vector<10x4xf32>
    %277 = vector.shape_cast %276 : vector<10x4xf32> to vector<1x10x4xf32>
    %cst_92 = arith.constant dense<0.000000e+00> : vector<1xf32>
    %278 = vector.multi_reduction <add>, %277, %cst_92 [1, 2] : vector<1x10x4xf32> to vector<1xf32>
    %279 = vector.shape_cast %278 : vector<1xf32> to vector<1x1x1xf32>
    %280 = vector.extract %279[0, 0, 0] : f32 from vector<1x1x1xf32>
    %cst_93 = arith.constant 8.000000e+00 : f32
    %281 = arith.divf %280, %cst_93 : f32
    %282 = arith.addf %244, %281 : f32
    %cst_94 = arith.constant 1.600000e+01 : f32
    %283 = arith.divf %271, %cst_94 : f32
    %c0_95 = arith.constant 0 : index
    %c0_96 = arith.constant 0 : index
    %284 = memref.load %arg3[%c0_95, %c0_96] : memref<1x1xf32, #tpu.memory_space<smem>>
    memref.store %283, %arg3[%c0_95, %c0_96] : memref<1x1xf32, #tpu.memory_space<smem>>
    %cst_97 = arith.constant 1.200000e+01 : f32
    %285 = arith.divf %282, %cst_97 : f32
    %c0_98 = arith.constant 0 : index
    %c0_99 = arith.constant 0 : index
    %286 = memref.load %arg4[%c0_98, %c0_99] : memref<1x1xf32, #tpu.memory_space<smem>>
    memref.store %285, %arg4[%c0_98, %c0_99] : memref<1x1xf32, #tpu.memory_space<smem>>
    return
  }
}

</mosaic_0001>

<llo_original>
// kernel: tpu_custom_call.1
$region0: #{tpu_custom_call.1}
  #allocation0 [shape = 'u32[]', space=smem, size = 0x4, offset = 0x4, fixed_abs, tag = 'smem constant byte address 0x4 - core index']
  #allocation1 [shape = 'u32[144,128]{1,0:T(1,128)}', space=vmem, size = 0x12000, scoped, tag = 'internal scratch']
  #allocation2 [shape = 'f32[14,128]{1,0:T(8,128)}', space=vmem, size = 0x2000, scoped, tag = 'scratch operand']
  #allocation3 [shape = 'f32[14,128]{1,0:T(8,128)}', space=vmem, size = 0x2000, scoped, tag = 'scratch operand']
  %s0 = inlined_call_operand.hbm [shape: f32[16,128], index: 0, kind: input, shape index: {}]
  %s1 = inlined_call_operand.hbm [shape: f32[386,768], index: 1, kind: input, shape index: {}]
  %s2 = inlined_call_operand.hbm [shape: f32[800,128], index: 2, kind: input, shape index: {}]
  %s3 = inlined_call_operand.hbm [shape: f32[1,1], index: 3, kind: output, shape index: {0}]
  %s4 = inlined_call_operand.hbm [shape: f32[1,1], index: 4, kind: output, shape index: {1}]
  %5 = xla_tuple %s3, %s4
  %s6 = sld [smem:[#allocation0]]
  $region42: #{tpu_custom_call.1} parent=0
    _
  %s8 = ssub.s32 1, %s6
  %s9 = scalar_select 0, %s8, %s6
  $region1: #{tpu_custom_call.1} parent=0
    #allocation4 [shape = 'u8[8192]{0}', space=vmem, size = 0x2000, scoped, tag = 'input window, operand 0, single buffered']
    #allocation5 [shape = 's32[1]{0}', space=sflag, size = 0x4, scoped, tag = 'scoped memory for tpu_custom_call.1']
    #allocation6 [shape = 's32[1]{0}', space=sflag, size = 0x4, scoped, tag = 'scoped memory for tpu_custom_call.1']
    #allocation7 [shape = 'u8[1204224]{0}', space=vmem, size = 0x126000, scoped, tag = 'input window, operand 1, single buffered']
    #allocation8 [shape = 's32[1]{0}', space=sflag, size = 0x4, scoped, tag = 'scoped memory for tpu_custom_call.1']
    #allocation9 [shape = 'u8[409600]{0}', space=vmem, size = 0x64000, scoped, tag = 'input window, operand 2, single buffered']
    #allocation10 [shape = 'u8[512]{0}', space=smem, size = 0x200, scoped, tag = 'output window, operand 0, single buffered']
    #allocation11 [shape = 'u8[512]{0}', space=smem, size = 0x200, scoped, tag = 'output window, operand 1, single buffered']
    #allocation12 [shape = 's32[1]{0}', space=sflag, size = 0x4, scoped, tag = 'scoped memory for tpu_custom_call.1']
    %10 = vsyncpa [#allocation5], 0
    %11 = vsyncpa [#allocation8], 0
    %12 = vsyncpa [#allocation6], 0
    %13 = vsyncpa [#allocation12], 0
    // Predicated region
    $region2: #{tpu_custom_call.1} parent=1 // pred_check
      _
    $region3: #{tpu_custom_call.1} parent=1 // pred_check_branch
      %15 = sbr.rel (0) target = $region5
    $region4: #{tpu_custom_call.1} parent=1 // pred_region
      %s17 = ssub.s32 256, 256
      %18 = vsyncadd [#allocation5], %s17
      %s19 = sshll.u32 [#allocation4], 4
      %s20 = int_to_ptr.vmem [resolvable:$true] %s19
      %25 = dma.hbm_to_vmem [thread:$0]  %s0, 256, %s20, [#allocation5], 128, 128, 8
    $region5: #{tpu_custom_call.1} parent=1 // pred_fallthru
      _
    // Predicated region
    $region6: #{tpu_custom_call.1} parent=1 // pred_check
      _
    $region7: #{tpu_custom_call.1} parent=1 // pred_check_branch
      %27 = sbr.rel (0) target = $region9
    $region8: #{tpu_custom_call.1} parent=1 // pred_region
      %s29 = ssub.s32 37632, 37632
      %30 = vsyncadd [#allocation8], %s29
      %s31 = sshll.u32 [#allocation7], 4
      %s32 = int_to_ptr.vmem [resolvable:$true] %s31
      %37 = dma.hbm_to_vmem [thread:$0]  %s1, 37632, %s32, [#allocation8], 768, 768, 48
    $region9: #{tpu_custom_call.1} parent=1 // pred_fallthru
      _
    // Predicated region
    $region10: #{tpu_custom_call.1} parent=1 // pred_check
      _
    $region11: #{tpu_custom_call.1} parent=1 // pred_check_branch
      %39 = sbr.rel (0) target = $region13
    $region12: #{tpu_custom_call.1} parent=1 // pred_region
      %s41 = ssub.s32 12800, 12800
      %42 = vsyncadd [#allocation8], %s41
      %s43 = sshll.u32 [#allocation9], 4
      %s44 = int_to_ptr.vmem [resolvable:$true] %s43
      %49 = dma.hbm_to_vmem [thread:$0]  %s2, 12800, %s44, [#allocation8], 128, 128, 8
    $region13: #{tpu_custom_call.1} parent=1 // pred_fallthru
      _
    // Predicated region
    $region14: #{tpu_custom_call.1} parent=1 // pred_check
      _
    $region15: #{tpu_custom_call.1} parent=1 // pred_check_branch
      %51 = sbr.rel (0) target = $region17
    $region16: #{tpu_custom_call.1} parent=1 // pred_region
      %52 = dma.done [#allocation5], 256
    $region17: #{tpu_custom_call.1} parent=1 // pred_fallthru
      _
    // Predicated region
    $region18: #{tpu_custom_call.1} parent=1 // pred_check
      _
    $region19: #{tpu_custom_call.1} parent=1 // pred_check_branch
      %54 = sbr.rel (0) target = $region21
    $region20: #{tpu_custom_call.1} parent=1 // pred_region
      %55 = dma.done [#allocation8], 37632
    $region21: #{tpu_custom_call.1} parent=1 // pred_fallthru
      _
    // Predicated region
    $region22: #{tpu_custom_call.1} parent=1 // pred_check
      _
    $region23: #{tpu_custom_call.1} parent=1 // pred_check_branch
      %57 = sbr.rel (0) target = $region25
    $region24: #{tpu_custom_call.1} parent=1 // pred_region
      %58 = dma.done [#allocation8], 12800
    $region25: #{tpu_custom_call.1} parent=1 // pred_fallthru
      _
    %v59 = vld [vmem:[#allocation4] sm:$0xff]
    %v60 = vld [vmem:[#allocation4 + $0x8] sm:$0xff]
    %v61 = vld [vmem:[#allocation7] sm:$0xff]
    %v62 = vld [vmem:[#allocation7 + $0x8] sm:$0xff]
    %v63 = vld [vmem:[#allocation7 + $0x10] sm:$0xff]
    %v64 = vld [vmem:[#allocation7 + $0x18] sm:$0xff]
    %v65 = vld [vmem:[#allocation7 + $0x20] sm:$0xff]
    %v66 = vld [vmem:[#allocation7 + $0x28] sm:$0xff]
    %v67 = vld [vmem:[#allocation7 + $0x30] sm:$0xff]
    %v68 = vld [vmem:[#allocation7 + $0x38] sm:$0xff]
    %v69 = vld [vmem:[#allocation7 + $0x40] sm:$0xff]
    %v70 = vld [vmem:[#allocation7 + $0x48] sm:$0xff]
    %v71 = vld [vmem:[#allocation7 + $0x50] sm:$0xff]
    %v72 = vld [vmem:[#allocation7 + $0x58] sm:$0xff]
    %v73 = vld [vmem:[#allocation7 + $0x60] sm:$0xff]
    %v74 = vld [vmem:[#allocation7 + $0x68] sm:$0xff]
    %v75 = vld [vmem:[#allocation7 + $0x70] sm:$0xff]
    %v76 = vld [vmem:[#allocation7 + $0x78] sm:$0xff]
    %v77 = vld [vmem:[#allocation7 + $0x80] sm:$0xff]
    %v78 = vld [vmem:[#allocation7 + $0x88] sm:$0xff]
    %v79 = vld [vmem:[#allocation7 + $0x90] sm:$0xff]
    %v80 = vld [vmem:[#allocation7 + $0x98] sm:$0xff]
    %v81 = vld [vmem:[#allocation7 + $0xa0] sm:$0xff]
    %v82 = vld [vmem:[#allocation7 + $0xa8] sm:$0xff]
    %v83 = vld [vmem:[#allocation7 + $0xb0] sm:$0xff]
    %v84 = vld [vmem:[#allocation7 + $0xb8] sm:$0xff]
    %v85 = vld [vmem:[#allocation7 + $0xc0] sm:$0xff]
    %v86 = vld [vmem:[#allocation7 + $0xc8] sm:$0xff]
    %v87 = vld [vmem:[#allocation7 + $0xd0] sm:$0xff]
    %v88 = vld [vmem:[#allocation7 + $0xd8] sm:$0xff]
    %v89 = vld [vmem:[#allocation7 + $0xe0] sm:$0xff]
    %v90 = vld [vmem:[#allocation7 + $0xe8] sm:$0xff]
    %v91 = vld [vmem:[#allocation7 + $0xf0] sm:$0xff]
    %v92 = vld [vmem:[#allocation7 + $0xf8] sm:$0xff]
    %v93 = vld [vmem:[#allocation7 + $0x100] sm:$0xff]
    %v94 = vld [vmem:[#allocation7 + $0x108] sm:$0xff]
    %v95 = vld [vmem:[#allocation7 + $0x110] sm:$0xff]
    %v96 = vld [vmem:[#allocation7 + $0x118] sm:$0xff]
    %v97 = vld [vmem:[#allocation7 + $0x120] sm:$0xff]
    %v98 = vld [vmem:[#allocation7 + $0x128] sm:$0xff]
    %v99 = vld [vmem:[#allocation7 + $0x130] sm:$0xff]
    %v100 = vld [vmem:[#allocation7 + $0x138] sm:$0xff]
    %v101 = vld [vmem:[#allocation7 + $0x140] sm:$0xff]
    %v102 = vld [vmem:[#allocation7 + $0x148] sm:$0xff]
    %v103 = vld [vmem:[#allocation7 + $0x150] sm:$0xff]
    %v104 = vld [vmem:[#allocation7 + $0x158] sm:$0xff]
    %v105 = vld [vmem:[#allocation7 + $0x160] sm:$0xff]
    %v106 = vld [vmem:[#allocation7 + $0x168] sm:$0xff]
    %v107 = vld [vmem:[#allocation7 + $0x170] sm:$0xff]
    %v108 = vld [vmem:[#allocation7 + $0x178] sm:$0xff]
    %v109 = vld [vmem:[#allocation7 + $0x180] sm:$0xff]
    %v110 = vld [vmem:[#allocation7 + $0x188] sm:$0xff]
    %v111 = vld [vmem:[#allocation7 + $0x190] sm:$0xff]
    %v112 = vld [vmem:[#allocation7 + $0x198] sm:$0xff]
    %v113 = vld [vmem:[#allocation7 + $0x1a0] sm:$0xff]
    %v114 = vld [vmem:[#allocation7 + $0x1a8] sm:$0xff]
    %v115 = vld [vmem:[#allocation7 + $0x1b0] sm:$0xff]
    %v116 = vld [vmem:[#allocation7 + $0x1b8] sm:$0xff]
    %v117 = vld [vmem:[#allocation7 + $0x1c0] sm:$0xff]
    %v118 = vld [vmem:[#allocation7 + $0x1c8] sm:$0xff]
    %v119 = vld [vmem:[#allocation7 + $0x1d0] sm:$0xff]
    %v120 = vld [vmem:[#allocation7 + $0x1d8] sm:$0xff]
    %v121 = vld [vmem:[#allocation7 + $0x1e0] sm:$0xff]
    %v122 = vld [vmem:[#allocation7 + $0x1e8] sm:$0xff]
    %v123 = vld [vmem:[#allocation7 + $0x1f0] sm:$0xff]
    %v124 = vld [vmem:[#allocation7 + $0x1f8] sm:$0xff]
    %v125 = vld [vmem:[#allocation7 + $0x200] sm:$0xff]
    %v126 = vld [vmem:[#allocation7 + $0x208] sm:$0xff]
    %v127 = vld [vmem:[#allocation7 + $0x210] sm:$0xff]
    %v128 = vld [vmem:[#allocation7 + $0x218] sm:$0xff]
    %v129 = vld [vmem:[#allocation7 + $0x220] sm:$0xff]
    %v130 = vld [vmem:[#allocation7 + $0x228] sm:$0xff]
    %v131 = vld [vmem:[#allocation7 + $0x230] sm:$0xff]
    %v132 = vld [vmem:[#allocation7 + $0x238] sm:$0xff]
    %v133 = vld [vmem:[#allocation7 + $0x240] sm:$0xff]
    %v134 = vld [vmem:[#allocation7 + $0x248] sm:$0xff]
    %v135 = vld [vmem:[#allocation7 + $0x250] sm:$0xff]
    %v136 = vld [vmem:[#allocation7 + $0x258] sm:$0xff]
    %v137 = vld [vmem:[#allocation7 + $0x260] sm:$0xff]
    %v138 = vld [vmem:[#allocation7 + $0x268] sm:$0xff]
    %v139 = vld [vmem:[#allocation7 + $0x270] sm:$0xff]
    %v140 = vld [vmem:[#allocation7 + $0x278] sm:$0xff]
    %v141 = vld [vmem:[#allocation7 + $0x280] sm:$0xff]
    %v142 = vld [vmem:[#allocation7 + $0x288] sm:$0xff]
    %v143 = vld [vmem:[#allocation7 + $0x290] sm:$0xff]
    %v144 = vld [vmem:[#allocation7 + $0x298] sm:$0xff]
    %v145 = vld [vmem:[#allocation7 + $0x2a0] sm:$0xff]
    %v146 = vld [vmem:[#allocation7 + $0x2a8] sm:$0xff]
    %v147 = vld [vmem:[#allocation7 + $0x2b0] sm:$0xff]
    %v148 = vld [vmem:[#allocation7 + $0x2b8] sm:$0xff]
    %v149 = vld [vmem:[#allocation7 + $0x2c0] sm:$0xff]
    %v150 = vld [vmem:[#allocation7 + $0x2c8] sm:$0xff]
    %v151 = vld [vmem:[#allocation7 + $0x2d0] sm:$0xff]
    %v152 = vld [vmem:[#allocation7 + $0x2d8] sm:$0xff]
    %v153 = vld [vmem:[#allocation7 + $0x2e0] sm:$0xff]
    %v154 = vld [vmem:[#allocation7 + $0x2e8] sm:$0xff]
    %v155 = vld [vmem:[#allocation7 + $0x2f0] sm:$0xff]
    %v156 = vld [vmem:[#allocation7 + $0x2f8] sm:$0xff]
    %v157 = vld [vmem:[#allocation7 + $0x300] sm:$0xff]
    %v158 = vld [vmem:[#allocation7 + $0x308] sm:$0xff]
    %v159 = vld [vmem:[#allocation7 + $0x310] sm:$0xff]
    %v160 = vld [vmem:[#allocation7 + $0x318] sm:$0xff]
    %v161 = vld [vmem:[#allocation7 + $0x320] sm:$0xff]
    %v162 = vld [vmem:[#allocation7 + $0x328] sm:$0xff]
    %v163 = vld [vmem:[#allocation7 + $0x330] sm:$0xff]
    %v164 = vld [vmem:[#allocation7 + $0x338] sm:$0xff]
    %v165 = vld [vmem:[#allocation7 + $0x340] sm:$0xff]
    %v166 = vld [vmem:[#allocation7 + $0x348] sm:$0xff]
    %v167 = vld [vmem:[#allocation7 + $0x350] sm:$0xff]
    %v168 = vld [vmem:[#allocation7 + $0x358] sm:$0xff]
    %v169 = vld [vmem:[#allocation7 + $0x360] sm:$0xff]
    %v170 = vld [vmem:[#allocation7 + $0x368] sm:$0xff]
    %v171 = vld [vmem:[#allocation7 + $0x370] sm:$0xff]
    %v172 = vld [vmem:[#allocation7 + $0x378] sm:$0xff]
    %v173 = vld [vmem:[#allocation7 + $0x380] sm:$0xff]
    %v174 = vld [vmem:[#allocation7 + $0x388] sm:$0xff]
    %v175 = vld [vmem:[#allocation7 + $0x390] sm:$0xff]
    %v176 = vld [vmem:[#allocation7 + $0x398] sm:$0xff]
    %v177 = vld [vmem:[#allocation7 + $0x3a0] sm:$0xff]
    %v178 = vld [vmem:[#allocation7 + $0x3a8] sm:$0xff]
    %v179 = vld [vmem:[#allocation7 + $0x3b0] sm:$0xff]
    %v180 = vld [vmem:[#allocation7 + $0x3b8] sm:$0xff]
    %v181 = vld [vmem:[#allocation7 + $0x3c0] sm:$0xff]
    %v182 = vld [vmem:[#allocation7 + $0x3c8] sm:$0xff]
    %v183 = vld [vmem:[#allocation7 + $0x3d0] sm:$0xff]
    %v184 = vld [vmem:[#allocation7 + $0x3d8] sm:$0xff]
    %v185 = vld [vmem:[#allocation7 + $0x3e0] sm:$0xff]
    %v186 = vld [vmem:[#allocation7 + $0x3e8] sm:$0xff]
    %v187 = vld [vmem:[#allocation7 + $0x3f0] sm:$0xff]
    %v188 = vld [vmem:[#allocation7 + $0x3f8] sm:$0xff]
    %v189 = vld [vmem:[#allocation7 + $0x400] sm:$0xff]
    %v190 = vld [vmem:[#allocation7 + $0x408] sm:$0xff]
    %v191 = vld [vmem:[#allocation7 + $0x410] sm:$0xff]
    %v192 = vld [vmem:[#allocation7 + $0x418] sm:$0xff]
    %v193 = vld [vmem:[#allocation7 + $0x420] sm:$0xff]
    %v194 = vld [vmem:[#allocation7 + $0x428] sm:$0xff]
    %v195 = vld [vmem:[#allocation7 + $0x430] sm:$0xff]
    %v196 = vld [vmem:[#allocation7 + $0x438] sm:$0xff]
    %v197 = vld [vmem:[#allocation7 + $0x440] sm:$0xff]
    %v198 = vld [vmem:[#allocation7 + $0x448] sm:$0xff]
    %v199 = vld [vmem:[#allocation7 + $0x450] sm:$0xff]
    %v200 = vld [vmem:[#allocation7 + $0x458] sm:$0xff]
    %v201 = vld [vmem:[#allocation7 + $0x460] sm:$0xff]
    %v202 = vld [vmem:[#allocation7 + $0x468] sm:$0xff]
    %v203 = vld [vmem:[#allocation7 + $0x470] sm:$0xff]
    %v204 = vld [vmem:[#allocation7 + $0x478] sm:$0xff]
    %v205 = vld [vmem:[#allocation7 + $0x480] sm:$0xff]
    %v206 = vld [vmem:[#allocation7 + $0x488] sm:$0xff]
    %v207 = vld [vmem:[#allocation7 + $0x490] sm:$0xff]
    %v208 = vld [vmem:[#allocation7 + $0x498] sm:$0xff]
    %v209 = vld [vmem:[#allocation7 + $0x4a0] sm:$0xff]
    %v210 = vld [vmem:[#allocation7 + $0x4a8] sm:$0xff]
    %v211 = vld [vmem:[#allocation7 + $0x4b0] sm:$0xff]
    %v212 = vld [vmem:[#allocation7 + $0x4b8] sm:$0xff]
    %v213 = vld [vmem:[#allocation7 + $0x4c0] sm:$0xff]
    %v214 = vld [vmem:[#allocation7 + $0x4c8] sm:$0xff]
    %v215 = vld [vmem:[#allocation7 + $0x4d0] sm:$0xff]
    %v216 = vld [vmem:[#allocation7 + $0x4d8] sm:$0xff]
    %v217 = vld [vmem:[#allocation7 + $0x4e0] sm:$0xff]
    %v218 = vld [vmem:[#allocation7 + $0x4e8] sm:$0xff]
    %v219 = vld [vmem:[#allocation7 + $0x4f0] sm:$0xff]
    %v220 = vld [vmem:[#allocation7 + $0x4f8] sm:$0xff]
    %v221 = vld [vmem:[#allocation7 + $0x500] sm:$0xff]
    %v222 = vld [vmem:[#allocation7 + $0x508] sm:$0xff]
    %v223 = vld [vmem:[#allocation7 + $0x510] sm:$0xff]
    %v224 = vld [vmem:[#allocation7 + $0x518] sm:$0xff]
    %v225 = vld [vmem:[#allocation7 + $0x520] sm:$0xff]
    %v226 = vld [vmem:[#allocation7 + $0x528] sm:$0xff]
    %v227 = vld [vmem:[#allocation7 + $0x530] sm:$0xff]
    %v228 = vld [vmem:[#allocation7 + $0x538] sm:$0xff]
    %v229 = vld [vmem:[#allocation7 + $0x540] sm:$0xff]
    %v230 = vld [vmem:[#allocation7 + $0x548] sm:$0xff]
    %v231 = vld [vmem:[#allocation7 + $0x550] sm:$0xff]
    %v232 = vld [vmem:[#allocation7 + $0x558] sm:$0xff]
    %v233 = vld [vmem:[#allocation7 + $0x560] sm:$0xff]
    %v234 = vld [vmem:[#allocation7 + $0x568] sm:$0xff]
    %v235 = vld [vmem:[#allocation7 + $0x570] sm:$0xff]
    %v236 = vld [vmem:[#allocation7 + $0x578] sm:$0xff]
    %v237 = vld [vmem:[#allocation7 + $0x580] sm:$0xff]
    %v238 = vld [vmem:[#allocation7 + $0x588] sm:$0xff]
    %v239 = vld [vmem:[#allocation7 + $0x590] sm:$0xff]
    %v240 = vld [vmem:[#allocation7 + $0x598] sm:$0xff]
    %v241 = vld [vmem:[#allocation7 + $0x5a0] sm:$0xff]
    %v242 = vld [vmem:[#allocation7 + $0x5a8] sm:$0xff]
    %v243 = vld [vmem:[#allocation7 + $0x5b0] sm:$0xff]
    %v244 = vld [vmem:[#allocation7 + $0x5b8] sm:$0xff]
    %v245 = vld [vmem:[#allocation7 + $0x5c0] sm:$0xff]
    %v246 = vld [vmem:[#allocation7 + $0x5c8] sm:$0xff]
    %v247 = vld [vmem:[#allocation7 + $0x5d0] sm:$0xff]
    %v248 = vld [vmem:[#allocation7 + $0x5d8] sm:$0xff]
    %v249 = vld [vmem:[#allocation7 + $0x5e0] sm:$0xff]
    %v250 = vld [vmem:[#allocation7 + $0x5e8] sm:$0xff]
    %v251 = vld [vmem:[#allocation7 + $0x5f0] sm:$0xff]
    %v252 = vld [vmem:[#allocation7 + $0x5f8] sm:$0xff]
    %v253 = vld [vmem:[#allocation7 + $0x600] sm:$0xff]
    %v254 = vld [vmem:[#allocation7 + $0x608] sm:$0xff]
    %v255 = vld [vmem:[#allocation7 + $0x610] sm:$0xff]
    %v256 = vld [vmem:[#allocation7 + $0x618] sm:$0xff]
    %v257 = vld [vmem:[#allocation7 + $0x620] sm:$0xff]
    %v258 = vld [vmem:[#allocation7 + $0x628] sm:$0xff]
    %v259 = vld [vmem:[#allocation7 + $0x630] sm:$0xff]
    %v260 = vld [vmem:[#allocation7 + $0x638] sm:$0xff]
    %v261 = vld [vmem:[#allocation7 + $0x640] sm:$0xff]
    %v262 = vld [vmem:[#allocation7 + $0x648] sm:$0xff]
    %v263 = vld [vmem:[#allocation7 + $0x650] sm:$0xff]
    %v264 = vld [vmem:[#allocation7 + $0x658] sm:$0xff]
    %v265 = vld [vmem:[#allocation7 + $0x660] sm:$0xff]
    %v266 = vld [vmem:[#allocation7 + $0x668] sm:$0xff]
    %v267 = vld [vmem:[#allocation7 + $0x670] sm:$0xff]
    %v268 = vld [vmem:[#allocation7 + $0x678] sm:$0xff]
    %v269 = vld [vmem:[#allocation7 + $0x680] sm:$0xff]
    %v270 = vld [vmem:[#allocation7 + $0x688] sm:$0xff]
    %v271 = vld [vmem:[#allocation7 + $0x690] sm:$0xff]
    %v272 = vld [vmem:[#allocation7 + $0x698] sm:$0xff]
    %v273 = vld [vmem:[#allocation7 + $0x6a0] sm:$0xff]
    %v274 = vld [vmem:[#allocation7 + $0x6a8] sm:$0xff]
    %v275 = vld [vmem:[#allocation7 + $0x6b0] sm:$0xff]
    %v276 = vld [vmem:[#allocation7 + $0x6b8] sm:$0xff]
    %v277 = vld [vmem:[#allocation7 + $0x6c0] sm:$0xff]
    %v278 = vld [vmem:[#allocation7 + $0x6c8] sm:$0xff]
    %v279 = vld [vmem:[#allocation7 + $0x6d0] sm:$0xff]
    %v280 = vld [vmem:[#allocation7 + $0x6d8] sm:$0xff]
    %v281 = vld [vmem:[#allocation7 + $0x6e0] sm:$0xff]
    %v282 = vld [vmem:[#allocation7 + $0x6e8] sm:$0xff]
    %v283 = vld [vmem:[#allocation7 + $0x6f0] sm:$0xff]
    %v284 = vld [vmem:[#allocation7 + $0x6f8] sm:$0xff]
    %v285 = vld [vmem:[#allocation7 + $0x700] sm:$0xff]
    %v286 = vld [vmem:[#allocation7 + $0x708] sm:$0xff]
    %v287 = vld [vmem:[#allocation7 + $0x710] sm:$0xff]
    %v288 = vld [vmem:[#allocation7 + $0x718] sm:$0xff]
    %v289 = vld [vmem:[#allocation7 + $0x720] sm:$0xff]
    %v290 = vld [vmem:[#allocation7 + $0x728] sm:$0xff]
    %v291 = vld [vmem:[#allocation7 + $0x730] sm:$0xff]
    %v292 = vld [vmem:[#allocation7 + $0x738] sm:$0xff]
    %v293 = vld [vmem:[#allocation7 + $0x740] sm:$0xff]
    %v294 = vld [vmem:[#allocation7 + $0x748] sm:$0xff]
    %v295 = vld [vmem:[#allocation7 + $0x750] sm:$0xff]
    %v296 = vld [vmem:[#allocation7 + $0x758] sm:$0xff]
    %v297 = vld [vmem:[#allocation7 + $0x760] sm:$0xff]
    %v298 = vld [vmem:[#allocation7 + $0x768] sm:$0xff]
    %v299 = vld [vmem:[#allocation7 + $0x770] sm:$0xff]
    %v300 = vld [vmem:[#allocation7 + $0x778] sm:$0xff]
    %v301 = vld [vmem:[#allocation7 + $0x780] sm:$0xff]
    %v302 = vld [vmem:[#allocation7 + $0x788] sm:$0xff]
    %v303 = vld [vmem:[#allocation7 + $0x790] sm:$0xff]
    %v304 = vld [vmem:[#allocation7 + $0x798] sm:$0xff]
    %v305 = vld [vmem:[#allocation7 + $0x7a0] sm:$0xff]
    %v306 = vld [vmem:[#allocation7 + $0x7a8] sm:$0xff]
    %v307 = vld [vmem:[#allocation7 + $0x7b0] sm:$0xff]
    %v308 = vld [vmem:[#allocation7 + $0x7b8] sm:$0xff]
    %v309 = vld [vmem:[#allocation7 + $0x7c0] sm:$0xff]
    %v310 = vld [vmem:[#allocation7 + $0x7c8] sm:$0xff]
    %v311 = vld [vmem:[#allocation7 + $0x7d0] sm:$0xff]
    %v312 = vld [vmem:[#allocation7 + $0x7d8] sm:$0xff]
    %v313 = vld [vmem:[#allocation7 + $0x7e0] sm:$0xff]
    %v314 = vld [vmem:[#allocation7 + $0x7e8] sm:$0xff]
    %v315 = vld [vmem:[#allocation7 + $0x7f0] sm:$0xff]
    %v316 = vld [vmem:[#allocation7 + $0x7f8] sm:$0xff]
    %v317 = vld [vmem:[#allocation7 + $0x800] sm:$0xff]
    %v318 = vld [vmem:[#allocation7 + $0x808] sm:$0xff]
    %v319 = vld [vmem:[#allocation7 + $0x810] sm:$0xff]
    %v320 = vld [vmem:[#allocation7 + $0x818] sm:$0xff]
    %v321 = vld [vmem:[#allocation7 + $0x820] sm:$0xff]
    %v322 = vld [vmem:[#allocation7 + $0x828] sm:$0xff]
    %v323 = vld [vmem:[#allocation7 + $0x830] sm:$0xff]
    %v324 = vld [vmem:[#allocation7 + $0x838] sm:$0xff]
    %v325 = vld [vmem:[#allocation7 + $0x840] sm:$0xff]
    %v326 = vld [vmem:[#allocation7 + $0x848] sm:$0xff]
    %v327 = vld [vmem:[#allocation7 + $0x850] sm:$0xff]
    %v328 = vld [vmem:[#allocation7 + $0x858] sm:$0xff]
    %v329 = vld [vmem:[#allocation7 + $0x860] sm:$0xff]
    %v330 = vld [vmem:[#allocation7 + $0x868] sm:$0xff]
    %v331 = vld [vmem:[#allocation7 + $0x870] sm:$0xff]
    %v332 = vld [vmem:[#allocation7 + $0x878] sm:$0xff]
    %v333 = vld [vmem:[#allocation7 + $0x880] sm:$0xff]
    %v334 = vld [vmem:[#allocation7 + $0x888] sm:$0xff]
    %v335 = vld [vmem:[#allocation7 + $0x890] sm:$0xff]
    %v336 = vld [vmem:[#allocation7 + $0x898] sm:$0xff]
    %v337 = vld [vmem:[#allocation7 + $0x8a0] sm:$0xff]
    %v338 = vld [vmem:[#allocation7 + $0x8a8] sm:$0xff]
    %v339 = vld [vmem:[#allocation7 + $0x8b0] sm:$0xff]
    %v340 = vld [vmem:[#allocation7 + $0x8b8] sm:$0xff]
    %v341 = vld [vmem:[#allocation7 + $0x8c0] sm:$0xff]
    %v342 = vld [vmem:[#allocation7 + $0x8c8] sm:$0xff]
    %v343 = vld [vmem:[#allocation7 + $0x8d0] sm:$0xff]
    %v344 = vld [vmem:[#allocation7 + $0x8d8] sm:$0xff]
    %v345 = vld [vmem:[#allocation7 + $0x8e0] sm:$0xff]
    %v346 = vld [vmem:[#allocation7 + $0x8e8] sm:$0xff]
    %v347 = vld [vmem:[#allocation7 + $0x8f0] sm:$0xff]
    %v348 = vld [vmem:[#allocation7 + $0x8f8] sm:$0xff]
    %s349 = scalar_lea.vmem [#allocation7], 2304
    %v350 = vld [vmem:[%s349] ss:$8 sm:$0xf]
    %v351 = vld [vmem:[%s349] ss:$8 sm:$0x30]
    %v352 = vor.u32 %v350, %v351
    %s353 = scalar_lea.vmem [#allocation7], 2305
    %v354 = vld [vmem:[%s353] ss:$8 sm:$0xf]
    %v355 = vld [vmem:[%s353] ss:$8 sm:$0x30]
    %v356 = vor.u32 %v354, %v355
    %v358 = vlaneseq
    %v359 = vshrl.u32 %v358, 7
    %v360 = vsub.s32 0, %v359
    %v361 = vrot.slane %v356, %v360
    %v362 = vlaneseq
    %v363 = vshrl.u32 %v362, 7
    %v364 = vsub.s32 1, %v363
    %v365 = vrot.slane %v356, %v364
    %v366 = vlaneseq
    %v367 = vshrl.u32 %v366, 7
    %v368 = vsub.s32 2, %v367
    %v369 = vrot.slane %v356, %v368
    %v370 = vlaneseq
    %v371 = vshrl.u32 %v370, 7
    %v372 = vsub.s32 3, %v371
    %v373 = vrot.slane %v356, %v372
    %v374 = vlaneseq
    %v375 = vshrl.u32 %v374, 7
    %v376 = vsub.s32 4, %v375
    %v377 = vrot.slane %v356, %v376
    %v378 = vlaneseq
    %v379 = vshrl.u32 %v378, 7
    %v380 = vsub.s32 5, %v379
    %v381 = vrot.slane %v356, %v380
    %388 = vmatprep.subr.mxu0 %v254
    %389 = vmatpush1.msra.mxu0 %v253
    %390 = vmatprep.subr.mxu0 %v260
    %391 = vmatpush1.msra.mxu0 %v259
    %392 = vmatprep.subr.mxu0 %v266
    %393 = vmatpush1.msra.mxu0 %v265
    %394 = vmatprep.subr.mxu0 %v272
    %395 = vmatpush1.msra.mxu0 %v271
    %396 = vmatprep.subr.mxu0 %v278
    %397 = vmatpush1.msra.mxu0 %v277
    %398 = vmatprep.subr.mxu0 %v284
    %399 = vmatpush1.msra.mxu0 %v283
    %400 = vmatprep.subr.mxu0 %v290
    %401 = vmatpush1.msra.mxu0 %v289
    %402 = vmatprep.subr.mxu0 %v296
    %403 = vmatpush1.msra.mxu0 %v295
    %404 = vmatprep.subr.mxu0 %v302
    %405 = vmatpush1.msra.mxu0 %v301
    %406 = vmatprep.subr.mxu0 %v308
    %407 = vmatpush1.msra.mxu0 %v307
    %408 = vmatprep.subr.mxu0 %v314
    %409 = vmatpush1.msra.mxu0 %v313
    %410 = vmatprep.subr.mxu0 %v320
    %411 = vmatpush1.msra.mxu0 %v319
    %412 = vmatprep.subr.mxu0 %v326
    %413 = vmatpush1.msra.mxu0 %v325
    %414 = vmatprep.subr.mxu0 %v332
    %415 = vmatpush1.msra.mxu0 %v331
    %416 = vmatprep.subr.mxu0 %v338
    %417 = vmatpush1.msra.mxu0 %v337
    %418 = vmatprep.subr.mxu0 %v344
    %419 = vmatpush1.msra.mxu0 %v343
    %420 = vmatprep.subr.mxu0 0.0
    %421 = vmatpush1.msra.mxu0 0.0
    %422 = vmatprep.subr.mxu0 0.0
    %423 = vmatpush1.msra.mxu0 0.0
    %424 = vmatprep.subr.mxu0 0.0
    %425 = vmatpush1.msra.mxu0 0.0
    %426 = vmatprep.subr.mxu0 0.0
    %427 = vmatpush1.msra.mxu0 0.0
    %428 = vmatprep.subr.mxu0 0.0
    %429 = vmatpush1.msra.mxu0 0.0
    %430 = vmatprep.subr.mxu0 0.0
    %431 = vmatpush1.msra.mxu0 0.0
    %432 = vmatprep.subr.mxu0 0.0
    %433 = vmatpush1.msra.mxu0 0.0
    %434 = vmatprep.subr.mxu0 0.0
    %435 = vmatpush1.msra.mxu0 0.0
    %436 = vmatprep.subr.mxu0 0.0
    %437 = vmatpush1.msra.mxu0 0.0
    %438 = vmatprep.subr.mxu0 0.0
    %439 = vmatpush1.msra.mxu0 0.0
    %440 = vmatprep.subr.mxu0 0.0
    %441 = vmatpush1.msra.mxu0 0.0
    %442 = vmatprep.subr.mxu0 0.0
    %443 = vmatpush1.msra.mxu0 0.0
    %444 = vmatprep.subr.mxu0 0.0
    %445 = vmatpush1.msra.mxu0 0.0
    %446 = vmatprep.subr.mxu0 0.0
    %447 = vmatpush1.msra.mxu0 0.0
    %448 = vmatprep.subr.mxu0 0.0
    %449 = vmatpush1.msra.mxu0 0.0
    %450 = vmatprep.subr.mxu0 0.0
    %451 = vmatpush1.msra.mxu0 0.0
    %452 = vmatprep.mubr.f32.mxu0 0.0
    %453 = vmatmul.mubr.f32.gmra.mrb[0].mxu0 %v59
    %v454 = vpop.f32.mrb[0].mxu0
    %v455 = vadd.f32 %v361, %v454
    %v456 = vpop.f32.mrb[0].mxu0
    %v457 = vadd.f32 %v365, %v456
    %458 = vmatprep.mubr.f32.mxu0 0.0
    %459 = vmatmul.mubr.f32.gmra.mrb[0].mxu0 %v60
    %v460 = vpop.f32.mrb[0].mxu0
    %v461 = vadd.f32 %v361, %v460
    %v462 = vpop.f32.mrb[0].mxu0
    %v463 = vadd.f32 %v365, %v462
    %464 = vdwg.mxu0
    %465 = vmatprep.subr.mxu0 %v256
    %466 = vmatpush1.msra.mxu0 %v255
    %467 = vmatprep.subr.mxu0 %v262
    %468 = vmatpush1.msra.mxu0 %v261
    %469 = vmatprep.subr.mxu0 %v268
    %470 = vmatpush1.msra.mxu0 %v267
    %471 = vmatprep.subr.mxu0 %v274
    %472 = vmatpush1.msra.mxu0 %v273
    %473 = vmatprep.subr.mxu0 %v280
    %474 = vmatpush1.msra.mxu0 %v279
    %475 = vmatprep.subr.mxu0 %v286
    %476 = vmatpush1.msra.mxu0 %v285
    %477 = vmatprep.subr.mxu0 %v292
    %478 = vmatpush1.msra.mxu0 %v291
    %479 = vmatprep.subr.mxu0 %v298
    %480 = vmatpush1.msra.mxu0 %v297
    %481 = vmatprep.subr.mxu0 %v304
    %482 = vmatpush1.msra.mxu0 %v303
    %483 = vmatprep.subr.mxu0 %v310
    %484 = vmatpush1.msra.mxu0 %v309
    %485 = vmatprep.subr.mxu0 %v316
    %486 = vmatpush1.msra.mxu0 %v315
    %487 = vmatprep.subr.mxu0 %v322
    %488 = vmatpush1.msra.mxu0 %v321
    %489 = vmatprep.subr.mxu0 %v328
    %490 = vmatpush1.msra.mxu0 %v327
    %491 = vmatprep.subr.mxu0 %v334
    %492 = vmatpush1.msra.mxu0 %v333
    %493 = vmatprep.subr.mxu0 %v340
    %494 = vmatpush1.msra.mxu0 %v339
    %495 = vmatprep.subr.mxu0 %v346
    %496 = vmatpush1.msra.mxu0 %v345
    %497 = vmatprep.subr.mxu0 0.0
    %498 = vmatpush1.msra.mxu0 0.0
    %499 = vmatprep.subr.mxu0 0.0
    %500 = vmatpush1.msra.mxu0 0.0
    %501 = vmatprep.subr.mxu0 0.0
    %502 = vmatpush1.msra.mxu0 0.0
    %503 = vmatprep.subr.mxu0 0.0
    %504 = vmatpush1.msra.mxu0 0.0
    %505 = vmatprep.subr.mxu0 0.0
    %506 = vmatpush1.msra.mxu0 0.0
    %507 = vmatprep.subr.mxu0 0.0
    %508 = vmatpush1.msra.mxu0 0.0
    %509 = vmatprep.subr.mxu0 0.0
    %510 = vmatpush1.msra.mxu0 0.0
    %511 = vmatprep.subr.mxu0 0.0
    %512 = vmatpush1.msra.mxu0 0.0
    %513 = vmatprep.subr.mxu0 0.0
    %514 = vmatpush1.msra.mxu0 0.0
    %515 = vmatprep.subr.mxu0 0.0
    %516 = vmatpush1.msra.mxu0 0.0
    %517 = vmatprep.subr.mxu0 0.0
    %518 = vmatpush1.msra.mxu0 0.0
    %519 = vmatprep.subr.mxu0 0.0
    %520 = vmatpush1.msra.mxu0 0.0
    %521 = vmatprep.subr.mxu0 0.0
    %522 = vmatpush1.msra.mxu0 0.0
    %523 = vmatprep.subr.mxu0 0.0
    %524 = vmatpush1.msra.mxu0 0.0
    %525 = vmatprep.subr.mxu0 0.0
    %526 = vmatpush1.msra.mxu0 0.0
    %527 = vmatprep.subr.mxu0 0.0
    %528 = vmatpush1.msra.mxu0 0.0
    %529 = vmatprep.mubr.f32.mxu0 0.0
    %530 = vmatmul.mubr.f32.gmra.mrb[0].mxu0 %v59
    %v531 = vpop.f32.mrb[0].mxu0
    %v532 = vadd.f32 %v369, %v531
    %v533 = vpop.f32.mrb[0].mxu0
    %v534 = vadd.f32 %v373, %v533
    %535 = vmatprep.mubr.f32.mxu0 0.0
    %536 = vmatmul.mubr.f32.gmra.mrb[0].mxu0 %v60
    %v537 = vpop.f32.mrb[0].mxu0
    %v538 = vadd.f32 %v369, %v537
    %v539 = vpop.f32.mrb[0].mxu0
    %v540 = vadd.f32 %v373, %v539
    %541 = vdwg.mxu0
    %542 = vmatprep.subr.mxu0 %v258
    %543 = vmatpush1.msra.mxu0 %v257
    %544 = vmatprep.subr.mxu0 %v264
    %545 = vmatpush1.msra.mxu0 %v263
    %546 = vmatprep.subr.mxu0 %v270
    %547 = vmatpush1.msra.mxu0 %v269
    %548 = vmatprep.subr.mxu0 %v276
    %549 = vmatpush1.msra.mxu0 %v275
    %550 = vmatprep.subr.mxu0 %v282
    %551 = vmatpush1.msra.mxu0 %v281
    %552 = vmatprep.subr.mxu0 %v288
    %553 = vmatpush1.msra.mxu0 %v287
    %554 = vmatprep.subr.mxu0 %v294
    %555 = vmatpush1.msra.mxu0 %v293
    %556 = vmatprep.subr.mxu0 %v300
    %557 = vmatpush1.msra.mxu0 %v299
    %558 = vmatprep.subr.mxu0 %v306
    %559 = vmatpush1.msra.mxu0 %v305
    %560 = vmatprep.subr.mxu0 %v312
    %561 = vmatpush1.msra.mxu0 %v311
    %562 = vmatprep.subr.mxu0 %v318
    %563 = vmatpush1.msra.mxu0 %v317
    %564 = vmatprep.subr.mxu0 %v324
    %565 = vmatpush1.msra.mxu0 %v323
    %566 = vmatprep.subr.mxu0 %v330
    %567 = vmatpush1.msra.mxu0 %v329
    %568 = vmatprep.subr.mxu0 %v336
    %569 = vmatpush1.msra.mxu0 %v335
    %570 = vmatprep.subr.mxu0 %v342
    %571 = vmatpush1.msra.mxu0 %v341
    %572 = vmatprep.subr.mxu0 %v348
    %573 = vmatpush1.msra.mxu0 %v347
    %574 = vmatprep.subr.mxu0 0.0
    %575 = vmatpush1.msra.mxu0 0.0
    %576 = vmatprep.subr.mxu0 0.0
    %577 = vmatpush1.msra.mxu0 0.0
    %578 = vmatprep.subr.mxu0 0.0
    %579 = vmatpush1.msra.mxu0 0.0
    %580 = vmatprep.subr.mxu0 0.0
    %581 = vmatpush1.msra.mxu0 0.0
    %582 = vmatprep.subr.mxu0 0.0
    %583 = vmatpush1.msra.mxu0 0.0
    %584 = vmatprep.subr.mxu0 0.0
    %585 = vmatpush1.msra.mxu0 0.0
    %586 = vmatprep.subr.mxu0 0.0
    %587 = vmatpush1.msra.mxu0 0.0
    %588 = vmatprep.subr.mxu0 0.0
    %589 = vmatpush1.msra.mxu0 0.0
    %590 = vmatprep.subr.mxu0 0.0
    %591 = vmatpush1.msra.mxu0 0.0
    %592 = vmatprep.subr.mxu0 0.0
    %593 = vmatpush1.msra.mxu0 0.0
    %594 = vmatprep.subr.mxu0 0.0
    %595 = vmatpush1.msra.mxu0 0.0
    %596 = vmatprep.subr.mxu0 0.0
    %597 = vmatpush1.msra.mxu0 0.0
    %598 = vmatprep.subr.mxu0 0.0
    %599 = vmatpush1.msra.mxu0 0.0
    %600 = vmatprep.subr.mxu0 0.0
    %601 = vmatpush1.msra.mxu0 0.0
    %602 = vmatprep.subr.mxu0 0.0
    %603 = vmatpush1.msra.mxu0 0.0
    %604 = vmatprep.subr.mxu0 0.0
    %605 = vmatpush1.msra.mxu0 0.0
    %606 = vmatprep.mubr.f32.mxu0 0.0
    %607 = vmatmul.mubr.f32.gmra.mrb[0].mxu0 %v59
    %v608 = vpop.f32.mrb[0].mxu0
    %v609 = vadd.f32 %v377, %v608
    %v610 = vpop.f32.mrb[0].mxu0
    %v611 = vadd.f32 %v381, %v610
    %612 = vmatprep.mubr.f32.mxu0 0.0
    %613 = vmatmul.mubr.f32.gmra.mrb[0].mxu0 %v60
    %v614 = vpop.f32.mrb[0].mxu0
    %v615 = vadd.f32 %v377, %v614
    %v616 = vpop.f32.mrb[0].mxu0
    %v617 = vadd.f32 %v381, %v616
    %618 = vdwg.mxu0
    %619 = vst [vmem:[#allocation3 + $0xc] sm:$0x3] 0.0
    %v621 = vlaneseq
    %v622 = vshrl.u32 %v621, 7
    %v623 = vsub.s32 0, %v622
    %v624 = vrot.slane %v352, %v623
    %v625 = vlaneseq
    %v626 = vshrl.u32 %v625, 7
    %v627 = vsub.s32 1, %v626
    %v628 = vrot.slane %v352, %v627
    %v629 = vlaneseq
    %v630 = vshrl.u32 %v629, 7
    %v631 = vsub.s32 2, %v630
    %v632 = vrot.slane %v352, %v631
    %v633 = vlaneseq
    %v634 = vshrl.u32 %v633, 7
    %v635 = vsub.s32 3, %v634
    %v636 = vrot.slane %v352, %v635
    %v637 = vlaneseq
    %v638 = vshrl.u32 %v637, 7
    %v639 = vsub.s32 4, %v638
    %v640 = vrot.slane %v352, %v639
    %v641 = vlaneseq
    %v642 = vshrl.u32 %v641, 7
    %v643 = vsub.s32 5, %v642
    %v644 = vrot.slane %v352, %v643
    %651 = vmatprep.subr.mxu0 %v62
    %652 = vmatpush1.msra.mxu0 %v61
    %653 = vmatprep.subr.mxu0 %v68
    %654 = vmatpush1.msra.mxu0 %v67
    %655 = vmatprep.subr.mxu0 %v74
    %656 = vmatpush1.msra.mxu0 %v73
    %657 = vmatprep.subr.mxu0 %v80
    %658 = vmatpush1.msra.mxu0 %v79
    %659 = vmatprep.subr.mxu0 %v86
    %660 = vmatpush1.msra.mxu0 %v85
    %661 = vmatprep.subr.mxu0 %v92
    %662 = vmatpush1.msra.mxu0 %v91
    %663 = vmatprep.subr.mxu0 %v98
    %664 = vmatpush1.msra.mxu0 %v97
    %665 = vmatprep.subr.mxu0 %v104
    %666 = vmatpush1.msra.mxu0 %v103
    %667 = vmatprep.subr.mxu0 %v110
    %668 = vmatpush1.msra.mxu0 %v109
    %669 = vmatprep.subr.mxu0 %v116
    %670 = vmatpush1.msra.mxu0 %v115
    %671 = vmatprep.subr.mxu0 %v122
    %672 = vmatpush1.msra.mxu0 %v121
    %673 = vmatprep.subr.mxu0 %v128
    %674 = vmatpush1.msra.mxu0 %v127
    %675 = vmatprep.subr.mxu0 %v134
    %676 = vmatpush1.msra.mxu0 %v133
    %677 = vmatprep.subr.mxu0 %v140
    %678 = vmatpush1.msra.mxu0 %v139
    %679 = vmatprep.subr.mxu0 %v146
    %680 = vmatpush1.msra.mxu0 %v145
    %681 = vmatprep.subr.mxu0 %v152
    %682 = vmatpush1.msra.mxu0 %v151
    %683 = vmatprep.subr.mxu0 %v158
    %684 = vmatpush1.msra.mxu0 %v157
    %685 = vmatprep.subr.mxu0 %v164
    %686 = vmatpush1.msra.mxu0 %v163
    %687 = vmatprep.subr.mxu0 %v170
    %688 = vmatpush1.msra.mxu0 %v169
    %689 = vmatprep.subr.mxu0 %v176
    %690 = vmatpush1.msra.mxu0 %v175
    %691 = vmatprep.subr.mxu0 %v182
    %692 = vmatpush1.msra.mxu0 %v181
    %693 = vmatprep.subr.mxu0 %v188
    %694 = vmatpush1.msra.mxu0 %v187
    %695 = vmatprep.subr.mxu0 %v194
    %696 = vmatpush1.msra.mxu0 %v193
    %697 = vmatprep.subr.mxu0 %v200
    %698 = vmatpush1.msra.mxu0 %v199
    %699 = vmatprep.subr.mxu0 %v206
    %700 = vmatpush1.msra.mxu0 %v205
    %701 = vmatprep.subr.mxu0 %v212
    %702 = vmatpush1.msra.mxu0 %v211
    %703 = vmatprep.subr.mxu0 %v218
    %704 = vmatpush1.msra.mxu0 %v217
    %705 = vmatprep.subr.mxu0 %v224
    %706 = vmatpush1.msra.mxu0 %v223
    %707 = vmatprep.subr.mxu0 %v230
    %708 = vmatpush1.msra.mxu0 %v229
    %709 = vmatprep.subr.mxu0 %v236
    %710 = vmatpush1.msra.mxu0 %v235
    %711 = vmatprep.subr.mxu0 %v242
    %712 = vmatpush1.msra.mxu0 %v241
    %713 = vmatprep.subr.mxu0 %v248
    %714 = vmatpush1.msra.mxu0 %v247
    %715 = vmatprep.mubr.f32.mxu0 0.0
    %716 = vmatmul.mubr.f32.gmra.mrb[0].mxu0 0.0
    %v717 = vpop.f32.mrb[0].mxu0
    %v718 = vadd.f32 %v624, %v717
    %v719 = vpop.f32.mrb[0].mxu0
    %v720 = vadd.f32 %v628, %v719
    %721 = vdwg.mxu0
    %722 = vmatprep.subr.mxu0 %v64
    %723 = vmatpush1.msra.mxu0 %v63
    %724 = vmatprep.subr.mxu0 %v70
    %725 = vmatpush1.msra.mxu0 %v69
    %726 = vmatprep.subr.mxu0 %v76
    %727 = vmatpush1.msra.mxu0 %v75
    %728 = vmatprep.subr.mxu0 %v82
    %729 = vmatpush1.msra.mxu0 %v81
    %730 = vmatprep.subr.mxu0 %v88
    %731 = vmatpush1.msra.mxu0 %v87
    %732 = vmatprep.subr.mxu0 %v94
    %733 = vmatpush1.msra.mxu0 %v93
    %734 = vmatprep.subr.mxu0 %v100
    %735 = vmatpush1.msra.mxu0 %v99
    %736 = vmatprep.subr.mxu0 %v106
    %737 = vmatpush1.msra.mxu0 %v105
    %738 = vmatprep.subr.mxu0 %v112
    %739 = vmatpush1.msra.mxu0 %v111
    %740 = vmatprep.subr.mxu0 %v118
    %741 = vmatpush1.msra.mxu0 %v117
    %742 = vmatprep.subr.mxu0 %v124
    %743 = vmatpush1.msra.mxu0 %v123
    %744 = vmatprep.subr.mxu0 %v130
    %745 = vmatpush1.msra.mxu0 %v129
    %746 = vmatprep.subr.mxu0 %v136
    %747 = vmatpush1.msra.mxu0 %v135
    %748 = vmatprep.subr.mxu0 %v142
    %749 = vmatpush1.msra.mxu0 %v141
    %750 = vmatprep.subr.mxu0 %v148
    %751 = vmatpush1.msra.mxu0 %v147
    %752 = vmatprep.subr.mxu0 %v154
    %753 = vmatpush1.msra.mxu0 %v153
    %754 = vmatprep.subr.mxu0 %v160
    %755 = vmatpush1.msra.mxu0 %v159
    %756 = vmatprep.subr.mxu0 %v166
    %757 = vmatpush1.msra.mxu0 %v165
    %758 = vmatprep.subr.mxu0 %v172
    %759 = vmatpush1.msra.mxu0 %v171
    %760 = vmatprep.subr.mxu0 %v178
    %761 = vmatpush1.msra.mxu0 %v177
    %762 = vmatprep.subr.mxu0 %v184
    %763 = vmatpush1.msra.mxu0 %v183
    %764 = vmatprep.subr.mxu0 %v190
    %765 = vmatpush1.msra.mxu0 %v189
    %766 = vmatprep.subr.mxu0 %v196
    %767 = vmatpush1.msra.mxu0 %v195
    %768 = vmatprep.subr.mxu0 %v202
    %769 = vmatpush1.msra.mxu0 %v201
    %770 = vmatprep.subr.mxu0 %v208
    %771 = vmatpush1.msra.mxu0 %v207
    %772 = vmatprep.subr.mxu0 %v214
    %773 = vmatpush1.msra.mxu0 %v213
    %774 = vmatprep.subr.mxu0 %v220
    %775 = vmatpush1.msra.mxu0 %v219
    %776 = vmatprep.subr.mxu0 %v226
    %777 = vmatpush1.msra.mxu0 %v225
    %778 = vmatprep.subr.mxu0 %v232
    %779 = vmatpush1.msra.mxu0 %v231
    %780 = vmatprep.subr.mxu0 %v238
    %781 = vmatpush1.msra.mxu0 %v237
    %782 = vmatprep.subr.mxu0 %v244
    %783 = vmatpush1.msra.mxu0 %v243
    %784 = vmatprep.subr.mxu0 %v250
    %785 = vmatpush1.msra.mxu0 %v249
    %786 = vmatprep.mubr.f32.mxu0 0.0
    %787 = vmatmul.mubr.f32.gmra.mrb[0].mxu0 0.0
    %v788 = vpop.f32.mrb[0].mxu0
    %v789 = vadd.f32 %v632, %v788
    %v790 = vpop.f32.mrb[0].mxu0
    %v791 = vadd.f32 %v636, %v790
    %792 = vdwg.mxu0
    %793 = vmatprep.subr.mxu0 %v66
    %794 = vmatpush1.msra.mxu0 %v65
    %795 = vmatprep.subr.mxu0 %v72
    %796 = vmatpush1.msra.mxu0 %v71
    %797 = vmatprep.subr.mxu0 %v78
    %798 = vmatpush1.msra.mxu0 %v77
    %799 = vmatprep.subr.mxu0 %v84
    %800 = vmatpush1.msra.mxu0 %v83
    %801 = vmatprep.subr.mxu0 %v90
    %802 = vmatpush1.msra.mxu0 %v89
    %803 = vmatprep.subr.mxu0 %v96
    %804 = vmatpush1.msra.mxu0 %v95
    %805 = vmatprep.subr.mxu0 %v102
    %806 = vmatpush1.msra.mxu0 %v101
    %807 = vmatprep.subr.mxu0 %v108
    %808 = vmatpush1.msra.mxu0 %v107
    %809 = vmatprep.subr.mxu0 %v114
    %810 = vmatpush1.msra.mxu0 %v113
    %811 = vmatprep.subr.mxu0 %v120
    %812 = vmatpush1.msra.mxu0 %v119
    %813 = vmatprep.subr.mxu0 %v126
    %814 = vmatpush1.msra.mxu0 %v125
    %815 = vmatprep.subr.mxu0 %v132
    %816 = vmatpush1.msra.mxu0 %v131
    %817 = vmatprep.subr.mxu0 %v138
    %818 = vmatpush1.msra.mxu0 %v137
    %819 = vmatprep.subr.mxu0 %v144
    %820 = vmatpush1.msra.mxu0 %v143
    %821 = vmatprep.subr.mxu0 %v150
    %822 = vmatpush1.msra.mxu0 %v149
    %823 = vmatprep.subr.mxu0 %v156
    %824 = vmatpush1.msra.mxu0 %v155
    %825 = vmatprep.subr.mxu0 %v162
    %826 = vmatpush1.msra.mxu0 %v161
    %827 = vmatprep.subr.mxu0 %v168
    %828 = vmatpush1.msra.mxu0 %v167
    %829 = vmatprep.subr.mxu0 %v174
    %830 = vmatpush1.msra.mxu0 %v173
    %831 = vmatprep.subr.mxu0 %v180
    %832 = vmatpush1.msra.mxu0 %v179
    %833 = vmatprep.subr.mxu0 %v186
    %834 = vmatpush1.msra.mxu0 %v185
    %835 = vmatprep.subr.mxu0 %v192
    %836 = vmatpush1.msra.mxu0 %v191
    %837 = vmatprep.subr.mxu0 %v198
    %838 = vmatpush1.msra.mxu0 %v197
    %839 = vmatprep.subr.mxu0 %v204
    %840 = vmatpush1.msra.mxu0 %v203
    %841 = vmatprep.subr.mxu0 %v210
    %842 = vmatpush1.msra.mxu0 %v209
    %843 = vmatprep.subr.mxu0 %v216
    %844 = vmatpush1.msra.mxu0 %v215
    %845 = vmatprep.subr.mxu0 %v222
    %846 = vmatpush1.msra.mxu0 %v221
    %847 = vmatprep.subr.mxu0 %v228
    %848 = vmatpush1.msra.mxu0 %v227
    %849 = vmatprep.subr.mxu0 %v234
    %850 = vmatpush1.msra.mxu0 %v233
    %851 = vmatprep.subr.mxu0 %v240
    %852 = vmatpush1.msra.mxu0 %v239
    %853 = vmatprep.subr.mxu0 %v246
    %854 = vmatpush1.msra.mxu0 %v245
    %855 = vmatprep.subr.mxu0 %v252
    %856 = vmatpush1.msra.mxu0 %v251
    %857 = vmatprep.mubr.f32.mxu0 0.0
    %858 = vmatmul.mubr.f32.gmra.mrb[0].mxu0 0.0
    %v859 = vpop.f32.mrb[0].mxu0
    %v860 = vadd.f32 %v640, %v859
    %v861 = vpop.f32.mrb[0].mxu0
    %v862 = vadd.f32 %v644, %v861
    %863 = vdwg.mxu0
    %v864 = vadd.f32 %v455, %v718
    %v865 = vadd.f32 %v457, %v720
    %v866 = vadd.f32 %v532, %v789
    %v867 = vadd.f32 %v534, %v791
    %v868 = vxor.u32 %v864, 2147483648
    %v869 = vxor.u32 %v865, 2147483648
    %v870 = vxor.u32 %v866, 2147483648
    %v871 = vxor.u32 %v867, 2147483648
    %v872 = vmul.f32 %v868, 1.442695
    %v873 = vpow.pop %v872
    %v874 = vmul.f32 %v869, 1.442695
    %v875 = vpow.pop %v874
    %v876 = vmul.f32 %v870, 1.442695
    %v877 = vpow.pop %v876
    %v878 = vmul.f32 %v871, 1.442695
    %v879 = vpow.pop %v878
    %v880 = vadd.f32 %v873, 1.0
    %v881 = vadd.f32 %v875, 1.0
    %v882 = vadd.f32 %v877, 1.0
    %v883 = vadd.f32 %v879, 1.0
    %v884 = vrcp.pop %v880
    %v885 = vmul.f32 1.0, %v884
    %v886 = vrcp.pop %v881
    %v887 = vmul.f32 1.0, %v886
    %v888 = vrcp.pop %v882
    %v889 = vmul.f32 1.0, %v888
    %v890 = vrcp.pop %v883
    %v891 = vmul.f32 1.0, %v890
    %v892 = vmul.f32 %v885, %v860
    %v893 = vmul.f32 %v887, %v862
    %v894 = vadd.f32 %v609, %v892
    %v895 = vadd.f32 %v611, %v893
    %v896 = vtanh.pop %v894
    %v897 = vtanh.pop %v895
    %v898 = vsub.f32 1.0, %v889
    %v899 = vsub.f32 1.0, %v891
    %v900 = vmul.f32 %v898, %v896
    %v901 = vmul.f32 %v899, %v897
    %v902 = vmul.f32 %v889, 0.0
    %v903 = vmul.f32 %v891, 0.0
    %v904 = vadd.f32 %v900, %v902
    %v905 = vadd.f32 %v901, %v903
    %906 = vst [vmem:[#allocation2] sm:$0x3] %v904
    %907 = vst [vmem:[#allocation3 + $0xa] sm:$0x3] %v905
    %908 = vmatprep.subr.mxu0 %v62
    %909 = vmatpush1.msra.mxu0 %v61
    %910 = vmatprep.subr.mxu0 %v68
    %911 = vmatpush1.msra.mxu0 %v67
    %912 = vmatprep.subr.mxu0 %v74
    %913 = vmatpush1.msra.mxu0 %v73
    %914 = vmatprep.subr.mxu0 %v80
    %915 = vmatpush1.msra.mxu0 %v79
    %916 = vmatprep.subr.mxu0 %v86
    %917 = vmatpush1.msra.mxu0 %v85
    %918 = vmatprep.subr.mxu0 %v92
    %919 = vmatpush1.msra.mxu0 %v91
    %920 = vmatprep.subr.mxu0 %v98
    %921 = vmatpush1.msra.mxu0 %v97
    %922 = vmatprep.subr.mxu0 %v104
    %923 = vmatpush1.msra.mxu0 %v103
    %924 = vmatprep.subr.mxu0 %v110
    %925 = vmatpush1.msra.mxu0 %v109
    %926 = vmatprep.subr.mxu0 %v116
    %927 = vmatpush1.msra.mxu0 %v115
    %928 = vmatprep.subr.mxu0 %v122
    %929 = vmatpush1.msra.mxu0 %v121
    %930 = vmatprep.subr.mxu0 %v128
    %931 = vmatpush1.msra.mxu0 %v127
    %932 = vmatprep.subr.mxu0 %v134
    %933 = vmatpush1.msra.mxu0 %v133
    %934 = vmatprep.subr.mxu0 %v140
    %935 = vmatpush1.msra.mxu0 %v139
    %936 = vmatprep.subr.mxu0 %v146
    %937 = vmatpush1.msra.mxu0 %v145
    %938 = vmatprep.subr.mxu0 %v152
    %939 = vmatpush1.msra.mxu0 %v151
    %940 = vmatprep.subr.mxu0 %v158
    %941 = vmatpush1.msra.mxu0 %v157
    %942 = vmatprep.subr.mxu0 %v164
    %943 = vmatpush1.msra.mxu0 %v163
    %944 = vmatprep.subr.mxu0 %v170
    %945 = vmatpush1.msra.mxu0 %v169
    %946 = vmatprep.subr.mxu0 %v176
    %947 = vmatpush1.msra.mxu0 %v175
    %948 = vmatprep.subr.mxu0 %v182
    %949 = vmatpush1.msra.mxu0 %v181
    %950 = vmatprep.subr.mxu0 %v188
    %951 = vmatpush1.msra.mxu0 %v187
    %952 = vmatprep.subr.mxu0 %v194
    %953 = vmatpush1.msra.mxu0 %v193
    %954 = vmatprep.subr.mxu0 %v200
    %955 = vmatpush1.msra.mxu0 %v199
    %956 = vmatprep.subr.mxu0 %v206
    %957 = vmatpush1.msra.mxu0 %v205
    %958 = vmatprep.subr.mxu0 %v212
    %959 = vmatpush1.msra.mxu0 %v211
    %960 = vmatprep.subr.mxu0 %v218
    %961 = vmatpush1.msra.mxu0 %v217
    %962 = vmatprep.subr.mxu0 %v224
    %963 = vmatpush1.msra.mxu0 %v223
    %964 = vmatprep.subr.mxu0 %v230
    %965 = vmatpush1.msra.mxu0 %v229
    %966 = vmatprep.subr.mxu0 %v236
    %967 = vmatpush1.msra.mxu0 %v235
    %968 = vmatprep.subr.mxu0 %v242
    %969 = vmatpush1.msra.mxu0 %v241
    %970 = vmatprep.subr.mxu0 %v248
    %971 = vmatpush1.msra.mxu0 %v247
    %972 = vmatprep.mubr.f32.mxu0 %v905
    %973 = vmatmul.mubr.f32.gmra.mrb[0].mxu0 %v904
    %v974 = vpop.f32.mrb[0].mxu0
    %v975 = vadd.f32 %v624, %v974
    %v976 = vpop.f32.mrb[0].mxu0
    %v977 = vadd.f32 %v628, %v976
    %978 = vdwg.mxu0
    %979 = vmatprep.subr.mxu0 %v64
    %980 = vmatpush1.msra.mxu0 %v63
    %981 = vmatprep.subr.mxu0 %v70
    %982 = vmatpush1.msra.mxu0 %v69
    %983 = vmatprep.subr.mxu0 %v76
    %984 = vmatpush1.msra.mxu0 %v75
    %985 = vmatprep.subr.mxu0 %v82
    %986 = vmatpush1.msra.mxu0 %v81
    %987 = vmatprep.subr.mxu0 %v88
    %988 = vmatpush1.msra.mxu0 %v87
    %989 = vmatprep.subr.mxu0 %v94
    %990 = vmatpush1.msra.mxu0 %v93
    %991 = vmatprep.subr.mxu0 %v100
    %992 = vmatpush1.msra.mxu0 %v99
    %993 = vmatprep.subr.mxu0 %v106
    %994 = vmatpush1.msra.mxu0 %v105
    %995 = vmatprep.subr.mxu0 %v112
    %996 = vmatpush1.msra.mxu0 %v111
    %997 = vmatprep.subr.mxu0 %v118
    %998 = vmatpush1.msra.mxu0 %v117
    %999 = vmatprep.subr.mxu0 %v124
    %1000 = vmatpush1.msra.mxu0 %v123
    %1001 = vmatprep.subr.mxu0 %v130
    %1002 = vmatpush1.msra.mxu0 %v129
    %1003 = vmatprep.subr.mxu0 %v136
    %1004 = vmatpush1.msra.mxu0 %v135
    %1005 = vmatprep.subr.mxu0 %v142
    %1006 = vmatpush1.msra.mxu0 %v141
    %1007 = vmatprep.subr.mxu0 %v148
    %1008 = vmatpush1.msra.mxu0 %v147
    %1009 = vmatprep.subr.mxu0 %v154
    %1010 = vmatpush1.msra.mxu0 %v153
    %1011 = vmatprep.subr.mxu0 %v160
    %1012 = vmatpush1.msra.mxu0 %v159
    %1013 = vmatprep.subr.mxu0 %v166
    %1014 = vmatpush1.msra.mxu0 %v165
    %1015 = vmatprep.subr.mxu0 %v172
    %1016 = vmatpush1.msra.mxu0 %v171
    %1017 = vmatprep.subr.mxu0 %v178
    %1018 = vmatpush1.msra.mxu0 %v177
    %1019 = vmatprep.subr.mxu0 %v184
    %1020 = vmatpush1.msra.mxu0 %v183
    %1021 = vmatprep.subr.mxu0 %v190
    %1022 = vmatpush1.msra.mxu0 %v189
    %1023 = vmatprep.subr.mxu0 %v196
    %1024 = vmatpush1.msra.mxu0 %v195
    %1025 = vmatprep.subr.mxu0 %v202
    %1026 = vmatpush1.msra.mxu0 %v201
    %1027 = vmatprep.subr.mxu0 %v208
    %1028 = vmatpush1.msra.mxu0 %v207
    %1029 = vmatprep.subr.mxu0 %v214
    %1030 = vmatpush1.msra.mxu0 %v213
    %1031 = vmatprep.subr.mxu0 %v220
    %1032 = vmatpush1.msra.mxu0 %v219
    %1033 = vmatprep.subr.mxu0 %v226
    %1034 = vmatpush1.msra.mxu0 %v225
    %1035 = vmatprep.subr.mxu0 %v232
    %1036 = vmatpush1.msra.mxu0 %v231
    %1037 = vmatprep.subr.mxu0 %v238
    %1038 = vmatpush1.msra.mxu0 %v237
    %1039 = vmatprep.subr.mxu0 %v244
    %1040 = vmatpush1.msra.mxu0 %v243
    %1041 = vmatprep.subr.mxu0 %v250
    %1042 = vmatpush1.msra.mxu0 %v249
    %1043 = vmatprep.mubr.f32.mxu0 %v905
    %1044 = vmatmul.mubr.f32.gmra.mrb[0].mxu0 %v904
    %v1045 = vpop.f32.mrb[0].mxu0
    %v1046 = vadd.f32 %v632, %v1045
    %v1047 = vpop.f32.mrb[0].mxu0
    %v1048 = vadd.f32 %v636, %v1047
    %1049 = vdwg.mxu0
    %1050 = vmatprep.subr.mxu0 %v66
    %1051 = vmatpush1.msra.mxu0 %v65
    %1052 = vmatprep.subr.mxu0 %v72
    %1053 = vmatpush1.msra.mxu0 %v71
    %1054 = vmatprep.subr.mxu0 %v78
    %1055 = vmatpush1.msra.mxu0 %v77
    %1056 = vmatprep.subr.mxu0 %v84
    %1057 = vmatpush1.msra.mxu0 %v83
    %1058 = vmatprep.subr.mxu0 %v90
    %1059 = vmatpush1.msra.mxu0 %v89
    %1060 = vmatprep.subr.mxu0 %v96
    %1061 = vmatpush1.msra.mxu0 %v95
    %1062 = vmatprep.subr.mxu0 %v102
    %1063 = vmatpush1.msra.mxu0 %v101
    %1064 = vmatprep.subr.mxu0 %v108
    %1065 = vmatpush1.msra.mxu0 %v107
    %1066 = vmatprep.subr.mxu0 %v114
    %1067 = vmatpush1.msra.mxu0 %v113
    %1068 = vmatprep.subr.mxu0 %v120
    %1069 = vmatpush1.msra.mxu0 %v119
    %1070 = vmatprep.subr.mxu0 %v126
    %1071 = vmatpush1.msra.mxu0 %v125
    %1072 = vmatprep.subr.mxu0 %v132
    %1073 = vmatpush1.msra.mxu0 %v131
    %1074 = vmatprep.subr.mxu0 %v138
    %1075 = vmatpush1.msra.mxu0 %v137
    %1076 = vmatprep.subr.mxu0 %v144
    %1077 = vmatpush1.msra.mxu0 %v143
    %1078 = vmatprep.subr.mxu0 %v150
    %1079 = vmatpush1.msra.mxu0 %v149
    %1080 = vmatprep.subr.mxu0 %v156
    %1081 = vmatpush1.msra.mxu0 %v155
    %1082 = vmatprep.subr.mxu0 %v162
    %1083 = vmatpush1.msra.mxu0 %v161
    %1084 = vmatprep.subr.mxu0 %v168
    %1085 = vmatpush1.msra.mxu0 %v167
    %1086 = vmatprep.subr.mxu0 %v174
    %1087 = vmatpush1.msra.mxu0 %v173
    %1088 = vmatprep.subr.mxu0 %v180
    %1089 = vmatpush1.msra.mxu0 %v179
    %1090 = vmatprep.subr.mxu0 %v186
    %1091 = vmatpush1.msra.mxu0 %v185
    %1092 = vmatprep.subr.mxu0 %v192
    %1093 = vmatpush1.msra.mxu0 %v191
    %1094 = vmatprep.subr.mxu0 %v198
    %1095 = vmatpush1.msra.mxu0 %v197
    %1096 = vmatprep.subr.mxu0 %v204
    %1097 = vmatpush1.msra.mxu0 %v203
    %1098 = vmatprep.subr.mxu0 %v210
    %1099 = vmatpush1.msra.mxu0 %v209
    %1100 = vmatprep.subr.mxu0 %v216
    %1101 = vmatpush1.msra.mxu0 %v215
    %1102 = vmatprep.subr.mxu0 %v222
    %1103 = vmatpush1.msra.mxu0 %v221
    %1104 = vmatprep.subr.mxu0 %v228
    %1105 = vmatpush1.msra.mxu0 %v227
    %1106 = vmatprep.subr.mxu0 %v234
    %1107 = vmatpush1.msra.mxu0 %v233
    %1108 = vmatprep.subr.mxu0 %v240
    %1109 = vmatpush1.msra.mxu0 %v239
    %1110 = vmatprep.subr.mxu0 %v246
    %1111 = vmatpush1.msra.mxu0 %v245
    %1112 = vmatprep.subr.mxu0 %v252
    %1113 = vmatpush1.msra.mxu0 %v251
    %1114 = vmatprep.mubr.f32.mxu0 %v905
    %1115 = vmatmul.mubr.f32.gmra.mrb[0].mxu0 %v904
    %v1116 = vpop.f32.mrb[0].mxu0
    %v1117 = vadd.f32 %v640, %v1116
    %v1118 = vpop.f32.mrb[0].mxu0
    %v1119 = vadd.f32 %v644, %v1118
    %1120 = vdwg.mxu0
    %v1125 = vrot.slane %v975, 6
    %v1126 = vrot.slane %v977, 6
    %v1127 = vrot.slane %v1046, 6
    %v1128 = vrot.slane %v1048, 6
    %v1133 = vadd.f32 %v455, %v1125
    %v1134 = vadd.f32 %v457, %v1126
    %v1135 = vadd.f32 %v532, %v1127
    %v1136 = vadd.f32 %v534, %v1128
    %v1137 = vxor.u32 %v1133, 2147483648
    %v1138 = vxor.u32 %v1134, 2147483648
    %v1139 = vxor.u32 %v1135, 2147483648
    %v1140 = vxor.u32 %v1136, 2147483648
    %v1141 = vmul.f32 %v1137, 1.442695
    %v1142 = vpow.pop %v1141
    %v1143 = vmul.f32 %v1138, 1.442695
    %v1144 = vpow.pop %v1143
    %v1145 = vmul.f32 %v1139, 1.442695
    %v1146 = vpow.pop %v1145
    %v1147 = vmul.f32 %v1140, 1.442695
    %v1148 = vpow.pop %v1147
    %v1149 = vadd.f32 %v1142, 1.0
    %v1150 = vadd.f32 %v1144, 1.0
    %v1151 = vadd.f32 %v1146, 1.0
    %v1152 = vadd.f32 %v1148, 1.0
    %v1153 = vrcp.pop %v1149
    %v1154 = vmul.f32 1.0, %v1153
    %v1155 = vrcp.pop %v1150
    %v1156 = vmul.f32 1.0, %v1155
    %v1157 = vrcp.pop %v1151
    %v1158 = vmul.f32 1.0, %v1157
    %v1159 = vrcp.pop %v1152
    %v1160 = vmul.f32 1.0, %v1159
    %v1163 = vrot.slane %v1117, 6
    %v1164 = vrot.slane %v1119, 6
    %v1167 = vmul.f32 %v1154, %v1163
    %v1168 = vmul.f32 %v1156, %v1164
    %v1169 = vadd.f32 %v609, %v1167
    %v1170 = vadd.f32 %v611, %v1168
    %v1171 = vtanh.pop %v1169
    %v1172 = vtanh.pop %v1170
    %v1173 = vsub.f32 1.0, %v1158
    %v1174 = vsub.f32 1.0, %v1160
    %v1175 = vmul.f32 %v1173, %v1171
    %v1176 = vmul.f32 %v1174, %v1172
    %v1179 = vrot.slane %v904, 6
    %v1180 = vrot.slane %v905, 6
    %v1183 = vmul.f32 %v1158, %v1179
    %v1184 = vmul.f32 %v1160, %v1180
    %v1185 = vadd.f32 %v1175, %v1183
    %v1186 = vadd.f32 %v1176, %v1184
    %1187 = vst [vmem:[#allocation2] sm:$0xc] %v1185
    %1188 = vst [vmem:[#allocation3 + $0x6] sm:$0xc] %v1186
    %v1191 = vrot.slane %v1185, 2
    %v1192 = vrot.slane %v1186, 2
    %1195 = vmatprep.subr.mxu0 %v62
    %1196 = vmatpush1.msra.mxu0 %v61
    %1197 = vmatprep.subr.mxu0 %v68
    %1198 = vmatpush1.msra.mxu0 %v67
    %1199 = vmatprep.subr.mxu0 %v74
    %1200 = vmatpush1.msra.mxu0 %v73
    %1201 = vmatprep.subr.mxu0 %v80
    %1202 = vmatpush1.msra.mxu0 %v79
    %1203 = vmatprep.subr.mxu0 %v86
    %1204 = vmatpush1.msra.mxu0 %v85
    %1205 = vmatprep.subr.mxu0 %v92
    %1206 = vmatpush1.msra.mxu0 %v91
    %1207 = vmatprep.subr.mxu0 %v98
    %1208 = vmatpush1.msra.mxu0 %v97
    %1209 = vmatprep.subr.mxu0 %v104
    %1210 = vmatpush1.msra.mxu0 %v103
    %1211 = vmatprep.subr.mxu0 %v110
    %1212 = vmatpush1.msra.mxu0 %v109
    %1213 = vmatprep.subr.mxu0 %v116
    %1214 = vmatpush1.msra.mxu0 %v115
    %1215 = vmatprep.subr.mxu0 %v122
    %1216 = vmatpush1.msra.mxu0 %v121
    %1217 = vmatprep.subr.mxu0 %v128
    %1218 = vmatpush1.msra.mxu0 %v127
    %1219 = vmatprep.subr.mxu0 %v134
    %1220 = vmatpush1.msra.mxu0 %v133
    %1221 = vmatprep.subr.mxu0 %v140
    %1222 = vmatpush1.msra.mxu0 %v139
    %1223 = vmatprep.subr.mxu0 %v146
    %1224 = vmatpush1.msra.mxu0 %v145
    %1225 = vmatprep.subr.mxu0 %v152
    %1226 = vmatpush1.msra.mxu0 %v151
    %1227 = vmatprep.subr.mxu0 %v158
    %1228 = vmatpush1.msra.mxu0 %v157
    %1229 = vmatprep.subr.mxu0 %v164
    %1230 = vmatpush1.msra.mxu0 %v163
    %1231 = vmatprep.subr.mxu0 %v170
    %1232 = vmatpush1.msra.mxu0 %v169
    %1233 = vmatprep.subr.mxu0 %v176
    %1234 = vmatpush1.msra.mxu0 %v175
    %1235 = vmatprep.subr.mxu0 %v182
    %1236 = vmatpush1.msra.mxu0 %v181
    %1237 = vmatprep.subr.mxu0 %v188
    %1238 = vmatpush1.msra.mxu0 %v187
    %1239 = vmatprep.subr.mxu0 %v194
    %1240 = vmatpush1.msra.mxu0 %v193
    %1241 = vmatprep.subr.mxu0 %v200
    %1242 = vmatpush1.msra.mxu0 %v199
    %1243 = vmatprep.subr.mxu0 %v206
    %1244 = vmatpush1.msra.mxu0 %v205
    %1245 = vmatprep.subr.mxu0 %v212
    %1246 = vmatpush1.msra.mxu0 %v211
    %1247 = vmatprep.subr.mxu0 %v218
    %1248 = vmatpush1.msra.mxu0 %v217
    %1249 = vmatprep.subr.mxu0 %v224
    %1250 = vmatpush1.msra.mxu0 %v223
    %1251 = vmatprep.subr.mxu0 %v230
    %1252 = vmatpush1.msra.mxu0 %v229
    %1253 = vmatprep.subr.mxu0 %v236
    %1254 = vmatpush1.msra.mxu0 %v235
    %1255 = vmatprep.subr.mxu0 %v242
    %1256 = vmatpush1.msra.mxu0 %v241
    %1257 = vmatprep.subr.mxu0 %v248
    %1258 = vmatpush1.msra.mxu0 %v247
    %1259 = vmatprep.mubr.f32.mxu0 %v1192
    %1260 = vmatmul.mubr.f32.gmra.mrb[0].mxu0 %v1191
    %v1261 = vpop.f32.mrb[0].mxu0
    %v1262 = vadd.f32 %v624, %v1261
    %v1263 = vpop.f32.mrb[0].mxu0
    %v1264 = vadd.f32 %v628, %v1263
    %1265 = vdwg.mxu0
    %1266 = vmatprep.subr.mxu0 %v64
    %1267 = vmatpush1.msra.mxu0 %v63
    %1268 = vmatprep.subr.mxu0 %v70
    %1269 = vmatpush1.msra.mxu0 %v69
    %1270 = vmatprep.subr.mxu0 %v76
    %1271 = vmatpush1.msra.mxu0 %v75
    %1272 = vmatprep.subr.mxu0 %v82
    %1273 = vmatpush1.msra.mxu0 %v81
    %1274 = vmatprep.subr.mxu0 %v88
    %1275 = vmatpush1.msra.mxu0 %v87
    %1276 = vmatprep.subr.mxu0 %v94
    %1277 = vmatpush1.msra.mxu0 %v93
    %1278 = vmatprep.subr.mxu0 %v100
    %1279 = vmatpush1.msra.mxu0 %v99
    %1280 = vmatprep.subr.mxu0 %v106
    %1281 = vmatpush1.msra.mxu0 %v105
    %1282 = vmatprep.subr.mxu0 %v112
    %1283 = vmatpush1.msra.mxu0 %v111
    %1284 = vmatprep.subr.mxu0 %v118
    %1285 = vmatpush1.msra.mxu0 %v117
    %1286 = vmatprep.subr.mxu0 %v124
    %1287 = vmatpush1.msra.mxu0 %v123
    %1288 = vmatprep.subr.mxu0 %v130
    %1289 = vmatpush1.msra.mxu0 %v129
    %1290 = vmatprep.subr.mxu0 %v136
    %1291 = vmatpush1.msra.mxu0 %v135
    %1292 = vmatprep.subr.mxu0 %v142
    %1293 = vmatpush1.msra.mxu0 %v141
    %1294 = vmatprep.subr.mxu0 %v148
    %1295 = vmatpush1.msra.mxu0 %v147
    %1296 = vmatprep.subr.mxu0 %v154
    %1297 = vmatpush1.msra.mxu0 %v153
    %1298 = vmatprep.subr.mxu0 %v160
    %1299 = vmatpush1.msra.mxu0 %v159
    %1300 = vmatprep.subr.mxu0 %v166
    %1301 = vmatpush1.msra.mxu0 %v165
    %1302 = vmatprep.subr.mxu0 %v172
    %1303 = vmatpush1.msra.mxu0 %v171
    %1304 = vmatprep.subr.mxu0 %v178
    %1305 = vmatpush1.msra.mxu0 %v177
    %1306 = vmatprep.subr.mxu0 %v184
    %1307 = vmatpush1.msra.mxu0 %v183
    %1308 = vmatprep.subr.mxu0 %v190
    %1309 = vmatpush1.msra.mxu0 %v189
    %1310 = vmatprep.subr.mxu0 %v196
    %1311 = vmatpush1.msra.mxu0 %v195
    %1312 = vmatprep.subr.mxu0 %v202
    %1313 = vmatpush1.msra.mxu0 %v201
    %1314 = vmatprep.subr.mxu0 %v208
    %1315 = vmatpush1.msra.mxu0 %v207
    %1316 = vmatprep.subr.mxu0 %v214
    %1317 = vmatpush1.msra.mxu0 %v213
    %1318 = vmatprep.subr.mxu0 %v220
    %1319 = vmatpush1.msra.mxu0 %v219
    %1320 = vmatprep.subr.mxu0 %v226
    %1321 = vmatpush1.msra.mxu0 %v225
    %1322 = vmatprep.subr.mxu0 %v232
    %1323 = vmatpush1.msra.mxu0 %v231
    %1324 = vmatprep.subr.mxu0 %v238
    %1325 = vmatpush1.msra.mxu0 %v237
    %1326 = vmatprep.subr.mxu0 %v244
    %1327 = vmatpush1.msra.mxu0 %v243
    %1328 = vmatprep.subr.mxu0 %v250
    %1329 = vmatpush1.msra.mxu0 %v249
    %1330 = vmatprep.mubr.f32.mxu0 %v1192
    %1331 = vmatmul.mubr.f32.gmra.mrb[0].mxu0 %v1191
    %v1332 = vpop.f32.mrb[0].mxu0
    %v1333 = vadd.f32 %v632, %v1332
    %v1334 = vpop.f32.mrb[0].mxu0
    %v1335 = vadd.f32 %v636, %v1334
    %1336 = vdwg.mxu0
    %1337 = vmatprep.subr.mxu0 %v66
    %1338 = vmatpush1.msra.mxu0 %v65
    %1339 = vmatprep.subr.mxu0 %v72
    %1340 = vmatpush1.msra.mxu0 %v71
    %1341 = vmatprep.subr.mxu0 %v78
    %1342 = vmatpush1.msra.mxu0 %v77
    %1343 = vmatprep.subr.mxu0 %v84
    %1344 = vmatpush1.msra.mxu0 %v83
    %1345 = vmatprep.subr.mxu0 %v90
    %1346 = vmatpush1.msra.mxu0 %v89
    %1347 = vmatprep.subr.mxu0 %v96
    %1348 = vmatpush1.msra.mxu0 %v95
    %1349 = vmatprep.subr.mxu0 %v102
    %1350 = vmatpush1.msra.mxu0 %v101
    %1351 = vmatprep.subr.mxu0 %v108
    %1352 = vmatpush1.msra.mxu0 %v107
    %1353 = vmatprep.subr.mxu0 %v114
    %1354 = vmatpush1.msra.mxu0 %v113
    %1355 = vmatprep.subr.mxu0 %v120
    %1356 = vmatpush1.msra.mxu0 %v119
    %1357 = vmatprep.subr.mxu0 %v126
    %1358 = vmatpush1.msra.mxu0 %v125
    %1359 = vmatprep.subr.mxu0 %v132
    %1360 = vmatpush1.msra.mxu0 %v131
    %1361 = vmatprep.subr.mxu0 %v138
    %1362 = vmatpush1.msra.mxu0 %v137
    %1363 = vmatprep.subr.mxu0 %v144
    %1364 = vmatpush1.msra.mxu0 %v143
    %1365 = vmatprep.subr.mxu0 %v150
    %1366 = vmatpush1.msra.mxu0 %v149
    %1367 = vmatprep.subr.mxu0 %v156
    %1368 = vmatpush1.msra.mxu0 %v155
    %1369 = vmatprep.subr.mxu0 %v162
    %1370 = vmatpush1.msra.mxu0 %v161
    %1371 = vmatprep.subr.mxu0 %v168
    %1372 = vmatpush1.msra.mxu0 %v167
    %1373 = vmatprep.subr.mxu0 %v174
    %1374 = vmatpush1.msra.mxu0 %v173
    %1375 = vmatprep.subr.mxu0 %v180
    %1376 = vmatpush1.msra.mxu0 %v179
    %1377 = vmatprep.subr.mxu0 %v186
    %1378 = vmatpush1.msra.mxu0 %v185
    %1379 = vmatprep.subr.mxu0 %v192
    %1380 = vmatpush1.msra.mxu0 %v191
    %1381 = vmatprep.subr.mxu0 %v198
    %1382 = vmatpush1.msra.mxu0 %v197
    %1383 = vmatprep.subr.mxu0 %v204
    %1384 = vmatpush1.msra.mxu0 %v203
    %1385 = vmatprep.subr.mxu0 %v210
    %1386 = vmatpush1.msra.mxu0 %v209
    %1387 = vmatprep.subr.mxu0 %v216
    %1388 = vmatpush1.msra.mxu0 %v215
    %1389 = vmatprep.subr.mxu0 %v222
    %1390 = vmatpush1.msra.mxu0 %v221
    %1391 = vmatprep.subr.mxu0 %v228
    %1392 = vmatpush1.msra.mxu0 %v227
    %1393 = vmatprep.subr.mxu0 %v234
    %1394 = vmatpush1.msra.mxu0 %v233
    %1395 = vmatprep.subr.mxu0 %v240
    %1396 = vmatpush1.msra.mxu0 %v239
    %1397 = vmatprep.subr.mxu0 %v246
    %1398 = vmatpush1.msra.mxu0 %v245
    %1399 = vmatprep.subr.mxu0 %v252
    %1400 = vmatpush1.msra.mxu0 %v251
    %1401 = vmatprep.mubr.f32.mxu0 %v1192
    %1402 = vmatmul.mubr.f32.gmra.mrb[0].mxu0 %v1191
    %v1403 = vpop.f32.mrb[0].mxu0
    %v1404 = vadd.f32 %v640, %v1403
    %v1405 = vpop.f32.mrb[0].mxu0
    %v1406 = vadd.f32 %v644, %v1405
    %1407 = vdwg.mxu0
    %v1412 = vrot.slane %v1262, 4
    %v1413 = vrot.slane %v1264, 4
    %v1414 = vrot.slane %v1333, 4
    %v1415 = vrot.slane %v1335, 4
    %v1420 = vadd.f32 %v455, %v1412
    %v1421 = vadd.f32 %v457, %v1413
    %v1422 = vadd.f32 %v532, %v1414
    %v1423 = vadd.f32 %v534, %v1415
    %v1424 = vxor.u32 %v1420, 2147483648
    %v1425 = vxor.u32 %v1421, 2147483648
    %v1426 = vxor.u32 %v1422, 2147483648
    %v1427 = vxor.u32 %v1423, 2147483648
    %v1428 = vmul.f32 %v1424, 1.442695
    %v1429 = vpow.pop %v1428
    %v1430 = vmul.f32 %v1425, 1.442695
    %v1431 = vpow.pop %v1430
    %v1432 = vmul.f32 %v1426, 1.442695
    %v1433 = vpow.pop %v1432
    %v1434 = vmul.f32 %v1427, 1.442695
    %v1435 = vpow.pop %v1434
    %v1436 = vadd.f32 %v1429, 1.0
    %v1437 = vadd.f32 %v1431, 1.0
    %v1438 = vadd.f32 %v1433, 1.0
    %v1439 = vadd.f32 %v1435, 1.0
    %v1440 = vrcp.pop %v1436
    %v1441 = vmul.f32 1.0, %v1440
    %v1442 = vrcp.pop %v1437
    %v1443 = vmul.f32 1.0, %v1442
    %v1444 = vrcp.pop %v1438
    %v1445 = vmul.f32 1.0, %v1444
    %v1446 = vrcp.pop %v1439
    %v1447 = vmul.f32 1.0, %v1446
    %v1450 = vrot.slane %v1404, 4
    %v1451 = vrot.slane %v1406, 4
    %v1454 = vmul.f32 %v1441, %v1450
    %v1455 = vmul.f32 %v1443, %v1451
    %v1456 = vadd.f32 %v609, %v1454
    %v1457 = vadd.f32 %v611, %v1455
    %v1458 = vtanh.pop %v1456
    %v1459 = vtanh.pop %v1457
    %v1460 = vsub.f32 1.0, %v1445
    %v1461 = vsub.f32 1.0, %v1447
    %v1462 = vmul.f32 %v1460, %v1458
    %v1463 = vmul.f32 %v1461, %v1459
    %v1464 = vrot.slane %v1185, 6
    %v1465 = vrot.slane %v1186, 6
    %v1468 = vmul.f32 %v1445, %v1464
    %v1469 = vmul.f32 %v1447, %v1465
    %v1470 = vadd.f32 %v1462, %v1468
    %v1471 = vadd.f32 %v1463, %v1469
    %1472 = vst [vmem:[#allocation2] sm:$0x30] %v1470
    %1473 = vst [vmem:[#allocation3 + $0x2] sm:$0x30] %v1471
    %v1476 = vrot.slane %v1470, 4
    %v1477 = vrot.slane %v1471, 4
    %1480 = vmatprep.subr.mxu0 %v62
    %1481 = vmatpush1.msra.mxu0 %v61
    %1482 = vmatprep.subr.mxu0 %v68
    %1483 = vmatpush1.msra.mxu0 %v67
    %1484 = vmatprep.subr.mxu0 %v74
    %1485 = vmatpush1.msra.mxu0 %v73
    %1486 = vmatprep.subr.mxu0 %v80
    %1487 = vmatpush1.msra.mxu0 %v79
    %1488 = vmatprep.subr.mxu0 %v86
    %1489 = vmatpush1.msra.mxu0 %v85
    %1490 = vmatprep.subr.mxu0 %v92
    %1491 = vmatpush1.msra.mxu0 %v91
    %1492 = vmatprep.subr.mxu0 %v98
    %1493 = vmatpush1.msra.mxu0 %v97
    %1494 = vmatprep.subr.mxu0 %v104
    %1495 = vmatpush1.msra.mxu0 %v103
    %1496 = vmatprep.subr.mxu0 %v110
    %1497 = vmatpush1.msra.mxu0 %v109
    %1498 = vmatprep.subr.mxu0 %v116
    %1499 = vmatpush1.msra.mxu0 %v115
    %1500 = vmatprep.subr.mxu0 %v122
    %1501 = vmatpush1.msra.mxu0 %v121
    %1502 = vmatprep.subr.mxu0 %v128
    %1503 = vmatpush1.msra.mxu0 %v127
    %1504 = vmatprep.subr.mxu0 %v134
    %1505 = vmatpush1.msra.mxu0 %v133
    %1506 = vmatprep.subr.mxu0 %v140
    %1507 = vmatpush1.msra.mxu0 %v139
    %1508 = vmatprep.subr.mxu0 %v146
    %1509 = vmatpush1.msra.mxu0 %v145
    %1510 = vmatprep.subr.mxu0 %v152
    %1511 = vmatpush1.msra.mxu0 %v151
    %1512 = vmatprep.subr.mxu0 %v158
    %1513 = vmatpush1.msra.mxu0 %v157
    %1514 = vmatprep.subr.mxu0 %v164
    %1515 = vmatpush1.msra.mxu0 %v163
    %1516 = vmatprep.subr.mxu0 %v170
    %1517 = vmatpush1.msra.mxu0 %v169
    %1518 = vmatprep.subr.mxu0 %v176
    %1519 = vmatpush1.msra.mxu0 %v175
    %1520 = vmatprep.subr.mxu0 %v182
    %1521 = vmatpush1.msra.mxu0 %v181
    %1522 = vmatprep.subr.mxu0 %v188
    %1523 = vmatpush1.msra.mxu0 %v187
    %1524 = vmatprep.subr.mxu0 %v194
    %1525 = vmatpush1.msra.mxu0 %v193
    %1526 = vmatprep.subr.mxu0 %v200
    %1527 = vmatpush1.msra.mxu0 %v199
    %1528 = vmatprep.subr.mxu0 %v206
    %1529 = vmatpush1.msra.mxu0 %v205
    %1530 = vmatprep.subr.mxu0 %v212
    %1531 = vmatpush1.msra.mxu0 %v211
    %1532 = vmatprep.subr.mxu0 %v218
    %1533 = vmatpush1.msra.mxu0 %v217
    %1534 = vmatprep.subr.mxu0 %v224
    %1535 = vmatpush1.msra.mxu0 %v223
    %1536 = vmatprep.subr.mxu0 %v230
    %1537 = vmatpush1.msra.mxu0 %v229
    %1538 = vmatprep.subr.mxu0 %v236
    %1539 = vmatpush1.msra.mxu0 %v235
    %1540 = vmatprep.subr.mxu0 %v242
    %1541 = vmatpush1.msra.mxu0 %v241
    %1542 = vmatprep.subr.mxu0 %v248
    %1543 = vmatpush1.msra.mxu0 %v247
    %1544 = vmatprep.mubr.f32.mxu0 %v1477
    %1545 = vmatmul.mubr.f32.gmra.mrb[0].mxu0 %v1476
    %v1546 = vpop.f32.mrb[0].mxu0
    %v1547 = vadd.f32 %v624, %v1546
    %v1548 = vpop.f32.mrb[0].mxu0
    %v1549 = vadd.f32 %v628, %v1548
    %1550 = vdwg.mxu0
    %1551 = vmatprep.subr.mxu0 %v64
    %1552 = vmatpush1.msra.mxu0 %v63
    %1553 = vmatprep.subr.mxu0 %v70
    %1554 = vmatpush1.msra.mxu0 %v69
    %1555 = vmatprep.subr.mxu0 %v76
    %1556 = vmatpush1.msra.mxu0 %v75
    %1557 = vmatprep.subr.mxu0 %v82
    %1558 = vmatpush1.msra.mxu0 %v81
    %1559 = vmatprep.subr.mxu0 %v88
    %1560 = vmatpush1.msra.mxu0 %v87
    %1561 = vmatprep.subr.mxu0 %v94
    %1562 = vmatpush1.msra.mxu0 %v93
    %1563 = vmatprep.subr.mxu0 %v100
    %1564 = vmatpush1.msra.mxu0 %v99
    %1565 = vmatprep.subr.mxu0 %v106
    %1566 = vmatpush1.msra.mxu0 %v105
    %1567 = vmatprep.subr.mxu0 %v112
    %1568 = vmatpush1.msra.mxu0 %v111
    %1569 = vmatprep.subr.mxu0 %v118
    %1570 = vmatpush1.msra.mxu0 %v117
    %1571 = vmatprep.subr.mxu0 %v124
    %1572 = vmatpush1.msra.mxu0 %v123
    %1573 = vmatprep.subr.mxu0 %v130
    %1574 = vmatpush1.msra.mxu0 %v129
    %1575 = vmatprep.subr.mxu0 %v136
    %1576 = vmatpush1.msra.mxu0 %v135
    %1577 = vmatprep.subr.mxu0 %v142
    %1578 = vmatpush1.msra.mxu0 %v141
    %1579 = vmatprep.subr.mxu0 %v148
    %1580 = vmatpush1.msra.mxu0 %v147
    %1581 = vmatprep.subr.mxu0 %v154
    %1582 = vmatpush1.msra.mxu0 %v153
    %1583 = vmatprep.subr.mxu0 %v160
    %1584 = vmatpush1.msra.mxu0 %v159
    %1585 = vmatprep.subr.mxu0 %v166
    %1586 = vmatpush1.msra.mxu0 %v165
    %1587 = vmatprep.subr.mxu0 %v172
    %1588 = vmatpush1.msra.mxu0 %v171
    %1589 = vmatprep.subr.mxu0 %v178
    %1590 = vmatpush1.msra.mxu0 %v177
    %1591 = vmatprep.subr.mxu0 %v184
    %1592 = vmatpush1.msra.mxu0 %v183
    %1593 = vmatprep.subr.mxu0 %v190
    %1594 = vmatpush1.msra.mxu0 %v189
    %1595 = vmatprep.subr.mxu0 %v196
    %1596 = vmatpush1.msra.mxu0 %v195
    %1597 = vmatprep.subr.mxu0 %v202
    %1598 = vmatpush1.msra.mxu0 %v201
    %1599 = vmatprep.subr.mxu0 %v208
    %1600 = vmatpush1.msra.mxu0 %v207
    %1601 = vmatprep.subr.mxu0 %v214
    %1602 = vmatpush1.msra.mxu0 %v213
    %1603 = vmatprep.subr.mxu0 %v220
    %1604 = vmatpush1.msra.mxu0 %v219
    %1605 = vmatprep.subr.mxu0 %v226
    %1606 = vmatpush1.msra.mxu0 %v225
    %1607 = vmatprep.subr.mxu0 %v232
    %1608 = vmatpush1.msra.mxu0 %v231
    %1609 = vmatprep.subr.mxu0 %v238
    %1610 = vmatpush1.msra.mxu0 %v237
    %1611 = vmatprep.subr.mxu0 %v244
    %1612 = vmatpush1.msra.mxu0 %v243
    %1613 = vmatprep.subr.mxu0 %v250
    %1614 = vmatpush1.msra.mxu0 %v249
    %1615 = vmatprep.mubr.f32.mxu0 %v1477
    %1616 = vmatmul.mubr.f32.gmra.mrb[0].mxu0 %v1476
    %v1617 = vpop.f32.mrb[0].mxu0
    %v1618 = vadd.f32 %v632, %v1617
    %v1619 = vpop.f32.mrb[0].mxu0
    %v1620 = vadd.f32 %v636, %v1619
    %1621 = vdwg.mxu0
    %1622 = vmatprep.subr.mxu0 %v66
    %1623 = vmatpush1.msra.mxu0 %v65
    %1624 = vmatprep.subr.mxu0 %v72
    %1625 = vmatpush1.msra.mxu0 %v71
    %1626 = vmatprep.subr.mxu0 %v78
    %1627 = vmatpush1.msra.mxu0 %v77
    %1628 = vmatprep.subr.mxu0 %v84
    %1629 = vmatpush1.msra.mxu0 %v83
    %1630 = vmatprep.subr.mxu0 %v90
    %1631 = vmatpush1.msra.mxu0 %v89
    %1632 = vmatprep.subr.mxu0 %v96
    %1633 = vmatpush1.msra.mxu0 %v95
    %1634 = vmatprep.subr.mxu0 %v102
    %1635 = vmatpush1.msra.mxu0 %v101
    %1636 = vmatprep.subr.mxu0 %v108
    %1637 = vmatpush1.msra.mxu0 %v107
    %1638 = vmatprep.subr.mxu0 %v114
    %1639 = vmatpush1.msra.mxu0 %v113
    %1640 = vmatprep.subr.mxu0 %v120
    %1641 = vmatpush1.msra.mxu0 %v119
    %1642 = vmatprep.subr.mxu0 %v126
    %1643 = vmatpush1.msra.mxu0 %v125
    %1644 = vmatprep.subr.mxu0 %v132
    %1645 = vmatpush1.msra.mxu0 %v131
    %1646 = vmatprep.subr.mxu0 %v138
    %1647 = vmatpush1.msra.mxu0 %v137
    %1648 = vmatprep.subr.mxu0 %v144
    %1649 = vmatpush1.msra.mxu0 %v143
    %1650 = vmatprep.subr.mxu0 %v150
    %1651 = vmatpush1.msra.mxu0 %v149
    %1652 = vmatprep.subr.mxu0 %v156
    %1653 = vmatpush1.msra.mxu0 %v155
    %1654 = vmatprep.subr.mxu0 %v162
    %1655 = vmatpush1.msra.mxu0 %v161
    %1656 = vmatprep.subr.mxu0 %v168
    %1657 = vmatpush1.msra.mxu0 %v167
    %1658 = vmatprep.subr.mxu0 %v174
    %1659 = vmatpush1.msra.mxu0 %v173
    %1660 = vmatprep.subr.mxu0 %v180
    %1661 = vmatpush1.msra.mxu0 %v179
    %1662 = vmatprep.subr.mxu0 %v186
    %1663 = vmatpush1.msra.mxu0 %v185
    %1664 = vmatprep.subr.mxu0 %v192
    %1665 = vmatpush1.msra.mxu0 %v191
    %1666 = vmatprep.subr.mxu0 %v198
    %1667 = vmatpush1.msra.mxu0 %v197
    %1668 = vmatprep.subr.mxu0 %v204
    %1669 = vmatpush1.msra.mxu0 %v203
    %1670 = vmatprep.subr.mxu0 %v210
    %1671 = vmatpush1.msra.mxu0 %v209
    %1672 = vmatprep.subr.mxu0 %v216
    %1673 = vmatpush1.msra.mxu0 %v215
    %1674 = vmatprep.subr.mxu0 %v222
    %1675 = vmatpush1.msra.mxu0 %v221
    %1676 = vmatprep.subr.mxu0 %v228
    %1677 = vmatpush1.msra.mxu0 %v227
    %1678 = vmatprep.subr.mxu0 %v234
    %1679 = vmatpush1.msra.mxu0 %v233
    %1680 = vmatprep.subr.mxu0 %v240
    %1681 = vmatpush1.msra.mxu0 %v239
    %1682 = vmatprep.subr.mxu0 %v246
    %1683 = vmatpush1.msra.mxu0 %v245
    %1684 = vmatprep.subr.mxu0 %v252
    %1685 = vmatpush1.msra.mxu0 %v251
    %1686 = vmatprep.mubr.f32.mxu0 %v1477
    %1687 = vmatmul.mubr.f32.gmra.mrb[0].mxu0 %v1476
    %v1688 = vpop.f32.mrb[0].mxu0
    %v1689 = vadd.f32 %v640, %v1688
    %v1690 = vpop.f32.mrb[0].mxu0
    %v1691 = vadd.f32 %v644, %v1690
    %1692 = vdwg.mxu0
    %v1697 = vrot.slane %v1547, 2
    %v1698 = vrot.slane %v1549, 2
    %v1699 = vrot.slane %v1618, 2
    %v1700 = vrot.slane %v1620, 2
    %v1705 = vadd.f32 %v455, %v1697
    %v1706 = vadd.f32 %v457, %v1698
    %v1707 = vadd.f32 %v532, %v1699
    %v1708 = vadd.f32 %v534, %v1700
    %v1709 = vxor.u32 %v1705, 2147483648
    %v1710 = vxor.u32 %v1706, 2147483648
    %v1711 = vxor.u32 %v1707, 2147483648
    %v1712 = vxor.u32 %v1708, 2147483648
    %v1713 = vmul.f32 %v1709, 1.442695
    %v1714 = vpow.pop %v1713
    %v1715 = vmul.f32 %v1710, 1.442695
    %v1716 = vpow.pop %v1715
    %v1717 = vmul.f32 %v1711, 1.442695
    %v1718 = vpow.pop %v1717
    %v1719 = vmul.f32 %v1712, 1.442695
    %v1720 = vpow.pop %v1719
    %v1721 = vadd.f32 %v1714, 1.0
    %v1722 = vadd.f32 %v1716, 1.0
    %v1723 = vadd.f32 %v1718, 1.0
    %v1724 = vadd.f32 %v1720, 1.0
    %v1725 = vrcp.pop %v1721
    %v1726 = vmul.f32 1.0, %v1725
    %v1727 = vrcp.pop %v1722
    %v1728 = vmul.f32 1.0, %v1727
    %v1729 = vrcp.pop %v1723
    %v1730 = vmul.f32 1.0, %v1729
    %v1731 = vrcp.pop %v1724
    %v1732 = vmul.f32 1.0, %v1731
    %v1735 = vrot.slane %v1689, 2
    %v1736 = vrot.slane %v1691, 2
    %v1739 = vmul.f32 %v1726, %v1735
    %v1740 = vmul.f32 %v1728, %v1736
    %v1741 = vadd.f32 %v609, %v1739
    %v1742 = vadd.f32 %v611, %v1740
    %v1743 = vtanh.pop %v1741
    %v1744 = vtanh.pop %v1742
    %v1745 = vsub.f32 1.0, %v1730
    %v1746 = vsub.f32 1.0, %v1732
    %v1747 = vmul.f32 %v1745, %v1743
    %v1748 = vmul.f32 %v1746, %v1744
    %v1749 = vrot.slane %v1470, 6
    %v1750 = vrot.slane %v1471, 6
    %v1753 = vmul.f32 %v1730, %v1749
    %v1754 = vmul.f32 %v1732, %v1750
    %v1755 = vadd.f32 %v1747, %v1753
    %v1756 = vadd.f32 %v1748, %v1754
    %1757 = vst [vmem:[#allocation2] sm:$0xc0] %v1755
    %1758 = vst [vmem:[#allocation3 - $0x2] sm:$0xc0] %v1756
    %v1761 = vrot.slane %v1755, 6
    %v1762 = vrot.slane %v1756, 6
    %1765 = vmatprep.subr.mxu0 %v62
    %1766 = vmatpush1.msra.mxu0 %v61
    %1767 = vmatprep.subr.mxu0 %v68
    %1768 = vmatpush1.msra.mxu0 %v67
    %1769 = vmatprep.subr.mxu0 %v74
    %1770 = vmatpush1.msra.mxu0 %v73
    %1771 = vmatprep.subr.mxu0 %v80
    %1772 = vmatpush1.msra.mxu0 %v79
    %1773 = vmatprep.subr.mxu0 %v86
    %1774 = vmatpush1.msra.mxu0 %v85
    %1775 = vmatprep.subr.mxu0 %v92
    %1776 = vmatpush1.msra.mxu0 %v91
    %1777 = vmatprep.subr.mxu0 %v98
    %1778 = vmatpush1.msra.mxu0 %v97
    %1779 = vmatprep.subr.mxu0 %v104
    %1780 = vmatpush1.msra.mxu0 %v103
    %1781 = vmatprep.subr.mxu0 %v110
    %1782 = vmatpush1.msra.mxu0 %v109
    %1783 = vmatprep.subr.mxu0 %v116
    %1784 = vmatpush1.msra.mxu0 %v115
    %1785 = vmatprep.subr.mxu0 %v122
    %1786 = vmatpush1.msra.mxu0 %v121
    %1787 = vmatprep.subr.mxu0 %v128
    %1788 = vmatpush1.msra.mxu0 %v127
    %1789 = vmatprep.subr.mxu0 %v134
    %1790 = vmatpush1.msra.mxu0 %v133
    %1791 = vmatprep.subr.mxu0 %v140
    %1792 = vmatpush1.msra.mxu0 %v139
    %1793 = vmatprep.subr.mxu0 %v146
    %1794 = vmatpush1.msra.mxu0 %v145
    %1795 = vmatprep.subr.mxu0 %v152
    %1796 = vmatpush1.msra.mxu0 %v151
    %1797 = vmatprep.subr.mxu0 %v158
    %1798 = vmatpush1.msra.mxu0 %v157
    %1799 = vmatprep.subr.mxu0 %v164
    %1800 = vmatpush1.msra.mxu0 %v163
    %1801 = vmatprep.subr.mxu0 %v170
    %1802 = vmatpush1.msra.mxu0 %v169
    %1803 = vmatprep.subr.mxu0 %v176
    %1804 = vmatpush1.msra.mxu0 %v175
    %1805 = vmatprep.subr.mxu0 %v182
    %1806 = vmatpush1.msra.mxu0 %v181
    %1807 = vmatprep.subr.mxu0 %v188
    %1808 = vmatpush1.msra.mxu0 %v187
    %1809 = vmatprep.subr.mxu0 %v194
    %1810 = vmatpush1.msra.mxu0 %v193
    %1811 = vmatprep.subr.mxu0 %v200
    %1812 = vmatpush1.msra.mxu0 %v199
    %1813 = vmatprep.subr.mxu0 %v206
    %1814 = vmatpush1.msra.mxu0 %v205
    %1815 = vmatprep.subr.mxu0 %v212
    %1816 = vmatpush1.msra.mxu0 %v211
    %1817 = vmatprep.subr.mxu0 %v218
    %1818 = vmatpush1.msra.mxu0 %v217
    %1819 = vmatprep.subr.mxu0 %v224
    %1820 = vmatpush1.msra.mxu0 %v223
    %1821 = vmatprep.subr.mxu0 %v230
    %1822 = vmatpush1.msra.mxu0 %v229
    %1823 = vmatprep.subr.mxu0 %v236
    %1824 = vmatpush1.msra.mxu0 %v235
    %1825 = vmatprep.subr.mxu0 %v242
    %1826 = vmatpush1.msra.mxu0 %v241
    %1827 = vmatprep.subr.mxu0 %v248
    %1828 = vmatpush1.msra.mxu0 %v247
    %1829 = vmatprep.mubr.f32.mxu0 %v1762
    %1830 = vmatmul.mubr.f32.gmra.mrb[0].mxu0 %v1761
    %v1831 = vpop.f32.mrb[0].mxu0
    %v1832 = vadd.f32 %v624, %v1831
    %v1833 = vpop.f32.mrb[0].mxu0
    %v1834 = vadd.f32 %v628, %v1833
    %1835 = vdwg.mxu0
    %1836 = vmatprep.subr.mxu0 %v64
    %1837 = vmatpush1.msra.mxu0 %v63
    %1838 = vmatprep.subr.mxu0 %v70
    %1839 = vmatpush1.msra.mxu0 %v69
    %1840 = vmatprep.subr.mxu0 %v76
    %1841 = vmatpush1.msra.mxu0 %v75
    %1842 = vmatprep.subr.mxu0 %v82
    %1843 = vmatpush1.msra.mxu0 %v81
    %1844 = vmatprep.subr.mxu0 %v88
    %1845 = vmatpush1.msra.mxu0 %v87
    %1846 = vmatprep.subr.mxu0 %v94
    %1847 = vmatpush1.msra.mxu0 %v93
    %1848 = vmatprep.subr.mxu0 %v100
    %1849 = vmatpush1.msra.mxu0 %v99
    %1850 = vmatprep.subr.mxu0 %v106
    %1851 = vmatpush1.msra.mxu0 %v105
    %1852 = vmatprep.subr.mxu0 %v112
    %1853 = vmatpush1.msra.mxu0 %v111
    %1854 = vmatprep.subr.mxu0 %v118
    %1855 = vmatpush1.msra.mxu0 %v117
    %1856 = vmatprep.subr.mxu0 %v124
    %1857 = vmatpush1.msra.mxu0 %v123
    %1858 = vmatprep.subr.mxu0 %v130
    %1859 = vmatpush1.msra.mxu0 %v129
    %1860 = vmatprep.subr.mxu0 %v136
    %1861 = vmatpush1.msra.mxu0 %v135
    %1862 = vmatprep.subr.mxu0 %v142
    %1863 = vmatpush1.msra.mxu0 %v141
    %1864 = vmatprep.subr.mxu0 %v148
    %1865 = vmatpush1.msra.mxu0 %v147
    %1866 = vmatprep.subr.mxu0 %v154
    %1867 = vmatpush1.msra.mxu0 %v153
    %1868 = vmatprep.subr.mxu0 %v160
    %1869 = vmatpush1.msra.mxu0 %v159
    %1870 = vmatprep.subr.mxu0 %v166
    %1871 = vmatpush1.msra.mxu0 %v165
    %1872 = vmatprep.subr.mxu0 %v172
    %1873 = vmatpush1.msra.mxu0 %v171
    %1874 = vmatprep.subr.mxu0 %v178
    %1875 = vmatpush1.msra.mxu0 %v177
    %1876 = vmatprep.subr.mxu0 %v184
    %1877 = vmatpush1.msra.mxu0 %v183
    %1878 = vmatprep.subr.mxu0 %v190
    %1879 = vmatpush1.msra.mxu0 %v189
    %1880 = vmatprep.subr.mxu0 %v196
    %1881 = vmatpush1.msra.mxu0 %v195
    %1882 = vmatprep.subr.mxu0 %v202
    %1883 = vmatpush1.msra.mxu0 %v201
    %1884 = vmatprep.subr.mxu0 %v208
    %1885 = vmatpush1.msra.mxu0 %v207
    %1886 = vmatprep.subr.mxu0 %v214
    %1887 = vmatpush1.msra.mxu0 %v213
    %1888 = vmatprep.subr.mxu0 %v220
    %1889 = vmatpush1.msra.mxu0 %v219
    %1890 = vmatprep.subr.mxu0 %v226
    %1891 = vmatpush1.msra.mxu0 %v225
    %1892 = vmatprep.subr.mxu0 %v232
    %1893 = vmatpush1.msra.mxu0 %v231
    %1894 = vmatprep.subr.mxu0 %v238
    %1895 = vmatpush1.msra.mxu0 %v237
    %1896 = vmatprep.subr.mxu0 %v244
    %1897 = vmatpush1.msra.mxu0 %v243
    %1898 = vmatprep.subr.mxu0 %v250
    %1899 = vmatpush1.msra.mxu0 %v249
    %1900 = vmatprep.mubr.f32.mxu0 %v1762
    %1901 = vmatmul.mubr.f32.gmra.mrb[0].mxu0 %v1761
    %v1902 = vpop.f32.mrb[0].mxu0
    %v1903 = vadd.f32 %v632, %v1902
    %v1904 = vpop.f32.mrb[0].mxu0
    %v1905 = vadd.f32 %v636, %v1904
    %1906 = vdwg.mxu0
    %1907 = vmatprep.subr.mxu0 %v66
    %1908 = vmatpush1.msra.mxu0 %v65
    %1909 = vmatprep.subr.mxu0 %v72
    %1910 = vmatpush1.msra.mxu0 %v71
    %1911 = vmatprep.subr.mxu0 %v78
    %1912 = vmatpush1.msra.mxu0 %v77
    %1913 = vmatprep.subr.mxu0 %v84
    %1914 = vmatpush1.msra.mxu0 %v83
    %1915 = vmatprep.subr.mxu0 %v90
    %1916 = vmatpush1.msra.mxu0 %v89
    %1917 = vmatprep.subr.mxu0 %v96
    %1918 = vmatpush1.msra.mxu0 %v95
    %1919 = vmatprep.subr.mxu0 %v102
    %1920 = vmatpush1.msra.mxu0 %v101
    %1921 = vmatprep.subr.mxu0 %v108
    %1922 = vmatpush1.msra.mxu0 %v107
    %1923 = vmatprep.subr.mxu0 %v114
    %1924 = vmatpush1.msra.mxu0 %v113
    %1925 = vmatprep.subr.mxu0 %v120
    %1926 = vmatpush1.msra.mxu0 %v119
    %1927 = vmatprep.subr.mxu0 %v126
    %1928 = vmatpush1.msra.mxu0 %v125
    %1929 = vmatprep.subr.mxu0 %v132
    %1930 = vmatpush1.msra.mxu0 %v131
    %1931 = vmatprep.subr.mxu0 %v138
    %1932 = vmatpush1.msra.mxu0 %v137
    %1933 = vmatprep.subr.mxu0 %v144
    %1934 = vmatpush1.msra.mxu0 %v143
    %1935 = vmatprep.subr.mxu0 %v150
    %1936 = vmatpush1.msra.mxu0 %v149
    %1937 = vmatprep.subr.mxu0 %v156
    %1938 = vmatpush1.msra.mxu0 %v155
    %1939 = vmatprep.subr.mxu0 %v162
    %1940 = vmatpush1.msra.mxu0 %v161
    %1941 = vmatprep.subr.mxu0 %v168
    %1942 = vmatpush1.msra.mxu0 %v167
    %1943 = vmatprep.subr.mxu0 %v174
    %1944 = vmatpush1.msra.mxu0 %v173
    %1945 = vmatprep.subr.mxu0 %v180
    %1946 = vmatpush1.msra.mxu0 %v179
    %1947 = vmatprep.subr.mxu0 %v186
    %1948 = vmatpush1.msra.mxu0 %v185
    %1949 = vmatprep.subr.mxu0 %v192
    %1950 = vmatpush1.msra.mxu0 %v191
    %1951 = vmatprep.subr.mxu0 %v198
    %1952 = vmatpush1.msra.mxu0 %v197
    %1953 = vmatprep.subr.mxu0 %v204
    %1954 = vmatpush1.msra.mxu0 %v203
    %1955 = vmatprep.subr.mxu0 %v210
    %1956 = vmatpush1.msra.mxu0 %v209
    %1957 = vmatprep.subr.mxu0 %v216
    %1958 = vmatpush1.msra.mxu0 %v215
    %1959 = vmatprep.subr.mxu0 %v222
    %1960 = vmatpush1.msra.mxu0 %v221
    %1961 = vmatprep.subr.mxu0 %v228
    %1962 = vmatpush1.msra.mxu0 %v227
    %1963 = vmatprep.subr.mxu0 %v234
    %1964 = vmatpush1.msra.mxu0 %v233
    %1965 = vmatprep.subr.mxu0 %v240
    %1966 = vmatpush1.msra.mxu0 %v239
    %1967 = vmatprep.subr.mxu0 %v246
    %1968 = vmatpush1.msra.mxu0 %v245
    %1969 = vmatprep.subr.mxu0 %v252
    %1970 = vmatpush1.msra.mxu0 %v251
    %1971 = vmatprep.mubr.f32.mxu0 %v1762
    %1972 = vmatmul.mubr.f32.gmra.mrb[0].mxu0 %v1761
    %v1973 = vpop.f32.mrb[0].mxu0
    %v1974 = vadd.f32 %v640, %v1973
    %v1975 = vpop.f32.mrb[0].mxu0
    %v1976 = vadd.f32 %v644, %v1975
    %1977 = vdwg.mxu0
    %v1978 = vadd.f32 %v461, %v1832
    %v1979 = vadd.f32 %v463, %v1834
    %v1980 = vadd.f32 %v538, %v1903
    %v1981 = vadd.f32 %v540, %v1905
    %v1982 = vxor.u32 %v1978, 2147483648
    %v1983 = vxor.u32 %v1979, 2147483648
    %v1984 = vxor.u32 %v1980, 2147483648
    %v1985 = vxor.u32 %v1981, 2147483648
    %v1986 = vmul.f32 %v1982, 1.442695
    %v1987 = vpow.pop %v1986
    %v1988 = vmul.f32 %v1983, 1.442695
    %v1989 = vpow.pop %v1988
    %v1990 = vmul.f32 %v1984, 1.442695
    %v1991 = vpow.pop %v1990
    %v1992 = vmul.f32 %v1985, 1.442695
    %v1993 = vpow.pop %v1992
    %v1994 = vadd.f32 %v1987, 1.0
    %v1995 = vadd.f32 %v1989, 1.0
    %v1996 = vadd.f32 %v1991, 1.0
    %v1997 = vadd.f32 %v1993, 1.0
    %v1998 = vrcp.pop %v1994
    %v1999 = vmul.f32 1.0, %v1998
    %v2000 = vrcp.pop %v1995
    %v2001 = vmul.f32 1.0, %v2000
    %v2002 = vrcp.pop %v1996
    %v2003 = vmul.f32 1.0, %v2002
    %v2004 = vrcp.pop %v1997
    %v2005 = vmul.f32 1.0, %v2004
    %v2006 = vmul.f32 %v1999, %v1974
    %v2007 = vmul.f32 %v2001, %v1976
    %v2008 = vadd.f32 %v615, %v2006
    %v2009 = vadd.f32 %v617, %v2007
    %v2010 = vtanh.pop %v2008
    %v2011 = vtanh.pop %v2009
    %v2012 = vsub.f32 1.0, %v2003
    %v2013 = vsub.f32 1.0, %v2005
    %v2014 = vmul.f32 %v2012, %v2010
    %v2015 = vmul.f32 %v2013, %v2011
    %v2016 = vmul.f32 %v2003, %v1761
    %v2017 = vmul.f32 %v2005, %v1762
    %v2018 = vadd.f32 %v2014, %v2016
    %v2019 = vadd.f32 %v2015, %v2017
    %2020 = vst [vmem:[#allocation2 + $0x8] sm:$0x3] %v2018
    %2021 = vst [vmem:[#allocation3 + $0x2] sm:$0x3] %v2019
    %2022 = vmatprep.subr.mxu0 %v62
    %2023 = vmatpush1.msra.mxu0 %v61
    %2024 = vmatprep.subr.mxu0 %v68
    %2025 = vmatpush1.msra.mxu0 %v67
    %2026 = vmatprep.subr.mxu0 %v74
    %2027 = vmatpush1.msra.mxu0 %v73
    %2028 = vmatprep.subr.mxu0 %v80
    %2029 = vmatpush1.msra.mxu0 %v79
    %2030 = vmatprep.subr.mxu0 %v86
    %2031 = vmatpush1.msra.mxu0 %v85
    %2032 = vmatprep.subr.mxu0 %v92
    %2033 = vmatpush1.msra.mxu0 %v91
    %2034 = vmatprep.subr.mxu0 %v98
    %2035 = vmatpush1.msra.mxu0 %v97
    %2036 = vmatprep.subr.mxu0 %v104
    %2037 = vmatpush1.msra.mxu0 %v103
    %2038 = vmatprep.subr.mxu0 %v110
    %2039 = vmatpush1.msra.mxu0 %v109
    %2040 = vmatprep.subr.mxu0 %v116
    %2041 = vmatpush1.msra.mxu0 %v115
    %2042 = vmatprep.subr.mxu0 %v122
    %2043 = vmatpush1.msra.mxu0 %v121
    %2044 = vmatprep.subr.mxu0 %v128
    %2045 = vmatpush1.msra.mxu0 %v127
    %2046 = vmatprep.subr.mxu0 %v134
    %2047 = vmatpush1.msra.mxu0 %v133
    %2048 = vmatprep.subr.mxu0 %v140
    %2049 = vmatpush1.msra.mxu0 %v139
    %2050 = vmatprep.subr.mxu0 %v146
    %2051 = vmatpush1.msra.mxu0 %v145
    %2052 = vmatprep.subr.mxu0 %v152
    %2053 = vmatpush1.msra.mxu0 %v151
    %2054 = vmatprep.subr.mxu0 %v158
    %2055 = vmatpush1.msra.mxu0 %v157
    %2056 = vmatprep.subr.mxu0 %v164
    %2057 = vmatpush1.msra.mxu0 %v163
    %2058 = vmatprep.subr.mxu0 %v170
    %2059 = vmatpush1.msra.mxu0 %v169
    %2060 = vmatprep.subr.mxu0 %v176
    %2061 = vmatpush1.msra.mxu0 %v175
    %2062 = vmatprep.subr.mxu0 %v182
    %2063 = vmatpush1.msra.mxu0 %v181
    %2064 = vmatprep.subr.mxu0 %v188
    %2065 = vmatpush1.msra.mxu0 %v187
    %2066 = vmatprep.subr.mxu0 %v194
    %2067 = vmatpush1.msra.mxu0 %v193
    %2068 = vmatprep.subr.mxu0 %v200
    %2069 = vmatpush1.msra.mxu0 %v199
    %2070 = vmatprep.subr.mxu0 %v206
    %2071 = vmatpush1.msra.mxu0 %v205
    %2072 = vmatprep.subr.mxu0 %v212
    %2073 = vmatpush1.msra.mxu0 %v211
    %2074 = vmatprep.subr.mxu0 %v218
    %2075 = vmatpush1.msra.mxu0 %v217
    %2076 = vmatprep.subr.mxu0 %v224
    %2077 = vmatpush1.msra.mxu0 %v223
    %2078 = vmatprep.subr.mxu0 %v230
    %2079 = vmatpush1.msra.mxu0 %v229
    %2080 = vmatprep.subr.mxu0 %v236
    %2081 = vmatpush1.msra.mxu0 %v235
    %2082 = vmatprep.subr.mxu0 %v242
    %2083 = vmatpush1.msra.mxu0 %v241
    %2084 = vmatprep.subr.mxu0 %v248
    %2085 = vmatpush1.msra.mxu0 %v247
    %2086 = vmatprep.mubr.f32.mxu0 %v2019
    %2087 = vmatmul.mubr.f32.gmra.mrb[0].mxu0 %v2018
    %v2088 = vpop.f32.mrb[0].mxu0
    %v2089 = vadd.f32 %v624, %v2088
    %v2090 = vpop.f32.mrb[0].mxu0
    %v2091 = vadd.f32 %v628, %v2090
    %2092 = vdwg.mxu0
    %2093 = vmatprep.subr.mxu0 %v64
    %2094 = vmatpush1.msra.mxu0 %v63
    %2095 = vmatprep.subr.mxu0 %v70
    %2096 = vmatpush1.msra.mxu0 %v69
    %2097 = vmatprep.subr.mxu0 %v76
    %2098 = vmatpush1.msra.mxu0 %v75
    %2099 = vmatprep.subr.mxu0 %v82
    %2100 = vmatpush1.msra.mxu0 %v81
    %2101 = vmatprep.subr.mxu0 %v88
    %2102 = vmatpush1.msra.mxu0 %v87
    %2103 = vmatprep.subr.mxu0 %v94
    %2104 = vmatpush1.msra.mxu0 %v93
    %2105 = vmatprep.subr.mxu0 %v100
    %2106 = vmatpush1.msra.mxu0 %v99
    %2107 = vmatprep.subr.mxu0 %v106
    %2108 = vmatpush1.msra.mxu0 %v105
    %2109 = vmatprep.subr.mxu0 %v112
    %2110 = vmatpush1.msra.mxu0 %v111
    %2111 = vmatprep.subr.mxu0 %v118
    %2112 = vmatpush1.msra.mxu0 %v117
    %2113 = vmatprep.subr.mxu0 %v124
    %2114 = vmatpush1.msra.mxu0 %v123
    %2115 = vmatprep.subr.mxu0 %v130
    %2116 = vmatpush1.msra.mxu0 %v129
    %2117 = vmatprep.subr.mxu0 %v136
    %2118 = vmatpush1.msra.mxu0 %v135
    %2119 = vmatprep.subr.mxu0 %v142
    %2120 = vmatpush1.msra.mxu0 %v141
    %2121 = vmatprep.subr.mxu0 %v148
    %2122 = vmatpush1.msra.mxu0 %v147
    %2123 = vmatprep.subr.mxu0 %v154
    %2124 = vmatpush1.msra.mxu0 %v153
    %2125 = vmatprep.subr.mxu0 %v160
    %2126 = vmatpush1.msra.mxu0 %v159
    %2127 = vmatprep.subr.mxu0 %v166
    %2128 = vmatpush1.msra.mxu0 %v165
    %2129 = vmatprep.subr.mxu0 %v172
    %2130 = vmatpush1.msra.mxu0 %v171
    %2131 = vmatprep.subr.mxu0 %v178
    %2132 = vmatpush1.msra.mxu0 %v177
    %2133 = vmatprep.subr.mxu0 %v184
    %2134 = vmatpush1.msra.mxu0 %v183
    %2135 = vmatprep.subr.mxu0 %v190
    %2136 = vmatpush1.msra.mxu0 %v189
    %2137 = vmatprep.subr.mxu0 %v196
    %2138 = vmatpush1.msra.mxu0 %v195
    %2139 = vmatprep.subr.mxu0 %v202
    %2140 = vmatpush1.msra.mxu0 %v201
    %2141 = vmatprep.subr.mxu0 %v208
    %2142 = vmatpush1.msra.mxu0 %v207
    %2143 = vmatprep.subr.mxu0 %v214
    %2144 = vmatpush1.msra.mxu0 %v213
    %2145 = vmatprep.subr.mxu0 %v220
    %2146 = vmatpush1.msra.mxu0 %v219
    %2147 = vmatprep.subr.mxu0 %v226
    %2148 = vmatpush1.msra.mxu0 %v225
    %2149 = vmatprep.subr.mxu0 %v232
    %2150 = vmatpush1.msra.mxu0 %v231
    %2151 = vmatprep.subr.mxu0 %v238
    %2152 = vmatpush1.msra.mxu0 %v237
    %2153 = vmatprep.subr.mxu0 %v244
    %2154 = vmatpush1.msra.mxu0 %v243
    %2155 = vmatprep.subr.mxu0 %v250
    %2156 = vmatpush1.msra.mxu0 %v249
    %2157 = vmatprep.mubr.f32.mxu0 %v2019
    %2158 = vmatmul.mubr.f32.gmra.mrb[0].mxu0 %v2018
    %v2159 = vpop.f32.mrb[0].mxu0
    %v2160 = vadd.f32 %v632, %v2159
    %v2161 = vpop.f32.mrb[0].mxu0
    %v2162 = vadd.f32 %v636, %v2161
    %2163 = vdwg.mxu0
    %2164 = vmatprep.subr.mxu0 %v66
    %2165 = vmatpush1.msra.mxu0 %v65
    %2166 = vmatprep.subr.mxu0 %v72
    %2167 = vmatpush1.msra.mxu0 %v71
    %2168 = vmatprep.subr.mxu0 %v78
    %2169 = vmatpush1.msra.mxu0 %v77
    %2170 = vmatprep.subr.mxu0 %v84
    %2171 = vmatpush1.msra.mxu0 %v83
    %2172 = vmatprep.subr.mxu0 %v90
    %2173 = vmatpush1.msra.mxu0 %v89
    %2174 = vmatprep.subr.mxu0 %v96
    %2175 = vmatpush1.msra.mxu0 %v95
    %2176 = vmatprep.subr.mxu0 %v102
    %2177 = vmatpush1.msra.mxu0 %v101
    %2178 = vmatprep.subr.mxu0 %v108
    %2179 = vmatpush1.msra.mxu0 %v107
    %2180 = vmatprep.subr.mxu0 %v114
    %2181 = vmatpush1.msra.mxu0 %v113
    %2182 = vmatprep.subr.mxu0 %v120
    %2183 = vmatpush1.msra.mxu0 %v119
    %2184 = vmatprep.subr.mxu0 %v126
    %2185 = vmatpush1.msra.mxu0 %v125
    %2186 = vmatprep.subr.mxu0 %v132
    %2187 = vmatpush1.msra.mxu0 %v131
    %2188 = vmatprep.subr.mxu0 %v138
    %2189 = vmatpush1.msra.mxu0 %v137
    %2190 = vmatprep.subr.mxu0 %v144
    %2191 = vmatpush1.msra.mxu0 %v143
    %2192 = vmatprep.subr.mxu0 %v150
    %2193 = vmatpush1.msra.mxu0 %v149
    %2194 = vmatprep.subr.mxu0 %v156
    %2195 = vmatpush1.msra.mxu0 %v155
    %2196 = vmatprep.subr.mxu0 %v162
    %2197 = vmatpush1.msra.mxu0 %v161
    %2198 = vmatprep.subr.mxu0 %v168
    %2199 = vmatpush1.msra.mxu0 %v167
    %2200 = vmatprep.subr.mxu0 %v174
    %2201 = vmatpush1.msra.mxu0 %v173
    %2202 = vmatprep.subr.mxu0 %v180
    %2203 = vmatpush1.msra.mxu0 %v179
    %2204 = vmatprep.subr.mxu0 %v186
    %2205 = vmatpush1.msra.mxu0 %v185
    %2206 = vmatprep.subr.mxu0 %v192
    %2207 = vmatpush1.msra.mxu0 %v191
    %2208 = vmatprep.subr.mxu0 %v198
    %2209 = vmatpush1.msra.mxu0 %v197
    %2210 = vmatprep.subr.mxu0 %v204
    %2211 = vmatpush1.msra.mxu0 %v203
    %2212 = vmatprep.subr.mxu0 %v210
    %2213 = vmatpush1.msra.mxu0 %v209
    %2214 = vmatprep.subr.mxu0 %v216
    %2215 = vmatpush1.msra.mxu0 %v215
    %2216 = vmatprep.subr.mxu0 %v222
    %2217 = vmatpush1.msra.mxu0 %v221
    %2218 = vmatprep.subr.mxu0 %v228
    %2219 = vmatpush1.msra.mxu0 %v227
    %2220 = vmatprep.subr.mxu0 %v234
    %2221 = vmatpush1.msra.mxu0 %v233
    %2222 = vmatprep.subr.mxu0 %v240
    %2223 = vmatpush1.msra.mxu0 %v239
    %2224 = vmatprep.subr.mxu0 %v246
    %2225 = vmatpush1.msra.mxu0 %v245
    %2226 = vmatprep.subr.mxu0 %v252
    %2227 = vmatpush1.msra.mxu0 %v251
    %2228 = vmatprep.mubr.f32.mxu0 %v2019
    %2229 = vmatmul.mubr.f32.gmra.mrb[0].mxu0 %v2018
    %v2230 = vpop.f32.mrb[0].mxu0
    %v2231 = vadd.f32 %v640, %v2230
    %v2232 = vpop.f32.mrb[0].mxu0
    %v2233 = vadd.f32 %v644, %v2232
    %2234 = vdwg.mxu0
    %v2239 = vrot.slane %v2089, 6
    %v2240 = vrot.slane %v2091, 6
    %v2241 = vrot.slane %v2160, 6
    %v2242 = vrot.slane %v2162, 6
    %v2247 = vadd.f32 %v461, %v2239
    %v2248 = vadd.f32 %v463, %v2240
    %v2249 = vadd.f32 %v538, %v2241
    %v2250 = vadd.f32 %v540, %v2242
    %v2251 = vxor.u32 %v2247, 2147483648
    %v2252 = vxor.u32 %v2248, 2147483648
    %v2253 = vxor.u32 %v2249, 2147483648
    %v2254 = vxor.u32 %v2250, 2147483648
    %v2255 = vmul.f32 %v2251, 1.442695
    %v2256 = vpow.pop %v2255
    %v2257 = vmul.f32 %v2252, 1.442695
    %v2258 = vpow.pop %v2257
    %v2259 = vmul.f32 %v2253, 1.442695
    %v2260 = vpow.pop %v2259
    %v2261 = vmul.f32 %v2254, 1.442695
    %v2262 = vpow.pop %v2261
    %v2263 = vadd.f32 %v2256, 1.0
    %v2264 = vadd.f32 %v2258, 1.0
    %v2265 = vadd.f32 %v2260, 1.0
    %v2266 = vadd.f32 %v2262, 1.0
    %v2267 = vrcp.pop %v2263
    %v2268 = vmul.f32 1.0, %v2267
    %v2269 = vrcp.pop %v2264
    %v2270 = vmul.f32 1.0, %v2269
    %v2271 = vrcp.pop %v2265
    %v2272 = vmul.f32 1.0, %v2271
    %v2273 = vrcp.pop %v2266
    %v2274 = vmul.f32 1.0, %v2273
    %v2277 = vrot.slane %v2231, 6
    %v2278 = vrot.slane %v2233, 6
    %v2281 = vmul.f32 %v2268, %v2277
    %v2282 = vmul.f32 %v2270, %v2278
    %v2283 = vadd.f32 %v615, %v2281
    %v2284 = vadd.f32 %v617, %v2282
    %v2285 = vtanh.pop %v2283
    %v2286 = vtanh.pop %v2284
    %v2287 = vsub.f32 1.0, %v2272
    %v2288 = vsub.f32 1.0, %v2274
    %v2289 = vmul.f32 %v2287, %v2285
    %v2290 = vmul.f32 %v2288, %v2286
    %v2293 = vrot.slane %v2018, 6
    %v2294 = vrot.slane %v2019, 6
    %v2297 = vmul.f32 %v2272, %v2293
    %v2298 = vmul.f32 %v2274, %v2294
    %v2299 = vadd.f32 %v2289, %v2297
    %v2300 = vadd.f32 %v2290, %v2298
    %2301 = vst [vmem:[#allocation2 + $0x8] sm:$0xc] %v2299
    %2302 = vst [vmem:[#allocation3 - $0x2] sm:$0xc] %v2300
    %v2305 = vrot.slane %v2299, 2
    %v2306 = vrot.slane %v2300, 2
    %2309 = vmatprep.subr.mxu0 %v62
    %2310 = vmatpush1.msra.mxu0 %v61
    %2311 = vmatprep.subr.mxu0 %v68
    %2312 = vmatpush1.msra.mxu0 %v67
    %2313 = vmatprep.subr.mxu0 %v74
    %2314 = vmatpush1.msra.mxu0 %v73
    %2315 = vmatprep.subr.mxu0 %v80
    %2316 = vmatpush1.msra.mxu0 %v79
    %2317 = vmatprep.subr.mxu0 %v86
    %2318 = vmatpush1.msra.mxu0 %v85
    %2319 = vmatprep.subr.mxu0 %v92
    %2320 = vmatpush1.msra.mxu0 %v91
    %2321 = vmatprep.subr.mxu0 %v98
    %2322 = vmatpush1.msra.mxu0 %v97
    %2323 = vmatprep.subr.mxu0 %v104
    %2324 = vmatpush1.msra.mxu0 %v103
    %2325 = vmatprep.subr.mxu0 %v110
    %2326 = vmatpush1.msra.mxu0 %v109
    %2327 = vmatprep.subr.mxu0 %v116
    %2328 = vmatpush1.msra.mxu0 %v115
    %2329 = vmatprep.subr.mxu0 %v122
    %2330 = vmatpush1.msra.mxu0 %v121
    %2331 = vmatprep.subr.mxu0 %v128
    %2332 = vmatpush1.msra.mxu0 %v127
    %2333 = vmatprep.subr.mxu0 %v134
    %2334 = vmatpush1.msra.mxu0 %v133
    %2335 = vmatprep.subr.mxu0 %v140
    %2336 = vmatpush1.msra.mxu0 %v139
    %2337 = vmatprep.subr.mxu0 %v146
    %2338 = vmatpush1.msra.mxu0 %v145
    %2339 = vmatprep.subr.mxu0 %v152
    %2340 = vmatpush1.msra.mxu0 %v151
    %2341 = vmatprep.subr.mxu0 %v158
    %2342 = vmatpush1.msra.mxu0 %v157
    %2343 = vmatprep.subr.mxu0 %v164
    %2344 = vmatpush1.msra.mxu0 %v163
    %2345 = vmatprep.subr.mxu0 %v170
    %2346 = vmatpush1.msra.mxu0 %v169
    %2347 = vmatprep.subr.mxu0 %v176
    %2348 = vmatpush1.msra.mxu0 %v175
    %2349 = vmatprep.subr.mxu0 %v182
    %2350 = vmatpush1.msra.mxu0 %v181
    %2351 = vmatprep.subr.mxu0 %v188
    %2352 = vmatpush1.msra.mxu0 %v187
    %2353 = vmatprep.subr.mxu0 %v194
    %2354 = vmatpush1.msra.mxu0 %v193
    %2355 = vmatprep.subr.mxu0 %v200
    %2356 = vmatpush1.msra.mxu0 %v199
    %2357 = vmatprep.subr.mxu0 %v206
    %2358 = vmatpush1.msra.mxu0 %v205
    %2359 = vmatprep.subr.mxu0 %v212
    %2360 = vmatpush1.msra.mxu0 %v211
    %2361 = vmatprep.subr.mxu0 %v218
    %2362 = vmatpush1.msra.mxu0 %v217
    %2363 = vmatprep.subr.mxu0 %v224
    %2364 = vmatpush1.msra.mxu0 %v223
    %2365 = vmatprep.subr.mxu0 %v230
    %2366 = vmatpush1.msra.mxu0 %v229
    %2367 = vmatprep.subr.mxu0 %v236
    %2368 = vmatpush1.msra.mxu0 %v235
    %2369 = vmatprep.subr.mxu0 %v242
    %2370 = vmatpush1.msra.mxu0 %v241
    %2371 = vmatprep.subr.mxu0 %v248
    %2372 = vmatpush1.msra.mxu0 %v247
    %2373 = vmatprep.mubr.f32.mxu0 %v2306
    %2374 = vmatmul.mubr.f32.gmra.mrb[0].mxu0 %v2305
    %v2375 = vpop.f32.mrb[0].mxu0
    %v2376 = vadd.f32 %v624, %v2375
    %v2377 = vpop.f32.mrb[0].mxu0
    %2378 = vdwg.mxu0
    %2379 = vmatprep.subr.mxu0 %v64
    %2380 = vmatpush1.msra.mxu0 %v63
    %2381 = vmatprep.subr.mxu0 %v70
    %2382 = vmatpush1.msra.mxu0 %v69
    %2383 = vmatprep.subr.mxu0 %v76
    %2384 = vmatpush1.msra.mxu0 %v75
    %2385 = vmatprep.subr.mxu0 %v82
    %2386 = vmatpush1.msra.mxu0 %v81
    %2387 = vmatprep.subr.mxu0 %v88
    %2388 = vmatpush1.msra.mxu0 %v87
    %2389 = vmatprep.subr.mxu0 %v94
    %2390 = vmatpush1.msra.mxu0 %v93
    %2391 = vmatprep.subr.mxu0 %v100
    %2392 = vmatpush1.msra.mxu0 %v99
    %2393 = vmatprep.subr.mxu0 %v106
    %2394 = vmatpush1.msra.mxu0 %v105
    %2395 = vmatprep.subr.mxu0 %v112
    %2396 = vmatpush1.msra.mxu0 %v111
    %2397 = vmatprep.subr.mxu0 %v118
    %2398 = vmatpush1.msra.mxu0 %v117
    %2399 = vmatprep.subr.mxu0 %v124
    %2400 = vmatpush1.msra.mxu0 %v123
    %2401 = vmatprep.subr.mxu0 %v130
    %2402 = vmatpush1.msra.mxu0 %v129
    %2403 = vmatprep.subr.mxu0 %v136
    %2404 = vmatpush1.msra.mxu0 %v135
    %2405 = vmatprep.subr.mxu0 %v142
    %2406 = vmatpush1.msra.mxu0 %v141
    %2407 = vmatprep.subr.mxu0 %v148
    %2408 = vmatpush1.msra.mxu0 %v147
    %2409 = vmatprep.subr.mxu0 %v154
    %2410 = vmatpush1.msra.mxu0 %v153
    %2411 = vmatprep.subr.mxu0 %v160
    %2412 = vmatpush1.msra.mxu0 %v159
    %2413 = vmatprep.subr.mxu0 %v166
    %2414 = vmatpush1.msra.mxu0 %v165
    %2415 = vmatprep.subr.mxu0 %v172
    %2416 = vmatpush1.msra.mxu0 %v171
    %2417 = vmatprep.subr.mxu0 %v178
    %2418 = vmatpush1.msra.mxu0 %v177
    %2419 = vmatprep.subr.mxu0 %v184
    %2420 = vmatpush1.msra.mxu0 %v183
    %2421 = vmatprep.subr.mxu0 %v190
    %2422 = vmatpush1.msra.mxu0 %v189
    %2423 = vmatprep.subr.mxu0 %v196
    %2424 = vmatpush1.msra.mxu0 %v195
    %2425 = vmatprep.subr.mxu0 %v202
    %2426 = vmatpush1.msra.mxu0 %v201
    %2427 = vmatprep.subr.mxu0 %v208
    %2428 = vmatpush1.msra.mxu0 %v207
    %2429 = vmatprep.subr.mxu0 %v214
    %2430 = vmatpush1.msra.mxu0 %v213
    %2431 = vmatprep.subr.mxu0 %v220
    %2432 = vmatpush1.msra.mxu0 %v219
    %2433 = vmatprep.subr.mxu0 %v226
    %2434 = vmatpush1.msra.mxu0 %v225
    %2435 = vmatprep.subr.mxu0 %v232
    %2436 = vmatpush1.msra.mxu0 %v231
    %2437 = vmatprep.subr.mxu0 %v238
    %2438 = vmatpush1.msra.mxu0 %v237
    %2439 = vmatprep.subr.mxu0 %v244
    %2440 = vmatpush1.msra.mxu0 %v243
    %2441 = vmatprep.subr.mxu0 %v250
    %2442 = vmatpush1.msra.mxu0 %v249
    %2443 = vmatprep.mubr.f32.mxu0 %v2306
    %2444 = vmatmul.mubr.f32.gmra.mrb[0].mxu0 %v2305
    %v2445 = vpop.f32.mrb[0].mxu0
    %v2446 = vadd.f32 %v632, %v2445
    %v2447 = vpop.f32.mrb[0].mxu0
    %2448 = vdwg.mxu0
    %2449 = vmatprep.subr.mxu0 %v66
    %2450 = vmatpush1.msra.mxu0 %v65
    %2451 = vmatprep.subr.mxu0 %v72
    %2452 = vmatpush1.msra.mxu0 %v71
    %2453 = vmatprep.subr.mxu0 %v78
    %2454 = vmatpush1.msra.mxu0 %v77
    %2455 = vmatprep.subr.mxu0 %v84
    %2456 = vmatpush1.msra.mxu0 %v83
    %2457 = vmatprep.subr.mxu0 %v90
    %2458 = vmatpush1.msra.mxu0 %v89
    %2459 = vmatprep.subr.mxu0 %v96
    %2460 = vmatpush1.msra.mxu0 %v95
    %2461 = vmatprep.subr.mxu0 %v102
    %2462 = vmatpush1.msra.mxu0 %v101
    %2463 = vmatprep.subr.mxu0 %v108
    %2464 = vmatpush1.msra.mxu0 %v107
    %2465 = vmatprep.subr.mxu0 %v114
    %2466 = vmatpush1.msra.mxu0 %v113
    %2467 = vmatprep.subr.mxu0 %v120
    %2468 = vmatpush1.msra.mxu0 %v119
    %2469 = vmatprep.subr.mxu0 %v126
    %2470 = vmatpush1.msra.mxu0 %v125
    %2471 = vmatprep.subr.mxu0 %v132
    %2472 = vmatpush1.msra.mxu0 %v131
    %2473 = vmatprep.subr.mxu0 %v138
    %2474 = vmatpush1.msra.mxu0 %v137
    %2475 = vmatprep.subr.mxu0 %v144
    %2476 = vmatpush1.msra.mxu0 %v143
    %2477 = vmatprep.subr.mxu0 %v150
    %2478 = vmatpush1.msra.mxu0 %v149
    %2479 = vmatprep.subr.mxu0 %v156
    %2480 = vmatpush1.msra.mxu0 %v155
    %2481 = vmatprep.subr.mxu0 %v162
    %2482 = vmatpush1.msra.mxu0 %v161
    %2483 = vmatprep.subr.mxu0 %v168
    %2484 = vmatpush1.msra.mxu0 %v167
    %2485 = vmatprep.subr.mxu0 %v174
    %2486 = vmatpush1.msra.mxu0 %v173
    %2487 = vmatprep.subr.mxu0 %v180
    %2488 = vmatpush1.msra.mxu0 %v179
    %2489 = vmatprep.subr.mxu0 %v186
    %2490 = vmatpush1.msra.mxu0 %v185
    %2491 = vmatprep.subr.mxu0 %v192
    %2492 = vmatpush1.msra.mxu0 %v191
    %2493 = vmatprep.subr.mxu0 %v198
    %2494 = vmatpush1.msra.mxu0 %v197
    %2495 = vmatprep.subr.mxu0 %v204
    %2496 = vmatpush1.msra.mxu0 %v203
    %2497 = vmatprep.subr.mxu0 %v210
    %2498 = vmatpush1.msra.mxu0 %v209
    %2499 = vmatprep.subr.mxu0 %v216
    %2500 = vmatpush1.msra.mxu0 %v215
    %2501 = vmatprep.subr.mxu0 %v222
    %2502 = vmatpush1.msra.mxu0 %v221
    %2503 = vmatprep.subr.mxu0 %v228
    %2504 = vmatpush1.msra.mxu0 %v227
    %2505 = vmatprep.subr.mxu0 %v234
    %2506 = vmatpush1.msra.mxu0 %v233
    %2507 = vmatprep.subr.mxu0 %v240
    %2508 = vmatpush1.msra.mxu0 %v239
    %2509 = vmatprep.subr.mxu0 %v246
    %2510 = vmatpush1.msra.mxu0 %v245
    %2511 = vmatprep.subr.mxu0 %v252
    %2512 = vmatpush1.msra.mxu0 %v251
    %2513 = vmatprep.mubr.f32.mxu0 %v2306
    %2514 = vmatmul.mubr.f32.gmra.mrb[0].mxu0 %v2305
    %v2515 = vpop.f32.mrb[0].mxu0
    %v2516 = vadd.f32 %v640, %v2515
    %v2517 = vpop.f32.mrb[0].mxu0
    %2518 = vdwg.mxu0
    %v2521 = vrot.slane %v2376, 4
    %v2522 = vrot.slane %v2446, 4
    %v2525 = vadd.f32 %v461, %v2521
    %v2526 = vadd.f32 %v538, %v2522
    %v2527 = vxor.u32 %v2525, 2147483648
    %v2528 = vxor.u32 %v2526, 2147483648
    %v2529 = vmul.f32 %v2527, 1.442695
    %v2530 = vpow.pop %v2529
    %v2531 = vmul.f32 %v2528, 1.442695
    %v2532 = vpow.pop %v2531
    %v2533 = vadd.f32 %v2530, 1.0
    %v2534 = vadd.f32 %v2532, 1.0
    %v2535 = vrcp.pop %v2533
    %v2536 = vmul.f32 1.0, %v2535
    %v2537 = vrcp.pop %v2534
    %v2538 = vmul.f32 1.0, %v2537
    %v2540 = vrot.slane %v2516, 4
    %v2542 = vmul.f32 %v2536, %v2540
    %v2543 = vadd.f32 %v615, %v2542
    %v2544 = vtanh.pop %v2543
    %v2545 = vsub.f32 1.0, %v2538
    %v2546 = vmul.f32 %v2545, %v2544
    %v2547 = vrot.slane %v2299, 6
    %v2549 = vmul.f32 %v2538, %v2547
    %v2550 = vadd.f32 %v2546, %v2549
    %2551 = vst [vmem:[#allocation2 + $0x8] sm:$0x30] %v2550
    %v2552 = vld [vmem:[#allocation9 + $0x310] sm:$0x1]
    %v2553 = vld [vmem:[#allocation9 + $0x318] sm:$0xff]
    %v2554 = vld [vmem:[#allocation9] sm:$0xff]
    %v2555 = vld [vmem:[#allocation9 + $0x8] sm:$0xff]
    %v2556 = vld [vmem:[#allocation9 + $0x10] sm:$0xff]
    %v2557 = vld [vmem:[#allocation9 + $0x18] sm:$0xff]
    %v2558 = vld [vmem:[#allocation9 + $0x20] sm:$0xff]
    %v2559 = vld [vmem:[#allocation9 + $0x28] sm:$0xff]
    %v2560 = vld [vmem:[#allocation9 + $0x30] sm:$0xff]
    %v2561 = vld [vmem:[#allocation9 + $0x38] sm:$0xff]
    %v2562 = vld [vmem:[#allocation9 + $0x40] sm:$0xff]
    %v2563 = vld [vmem:[#allocation9 + $0x48] sm:$0xff]
    %v2564 = vld [vmem:[#allocation9 + $0x50] sm:$0xff]
    %v2565 = vld [vmem:[#allocation9 + $0x58] sm:$0xff]
    %v2566 = vld [vmem:[#allocation9 + $0x60] sm:$0xff]
    %v2567 = vld [vmem:[#allocation9 + $0x68] sm:$0xff]
    %v2568 = vld [vmem:[#allocation9 + $0x70] sm:$0xff]
    %v2569 = vld [vmem:[#allocation9 + $0x78] sm:$0xff]
    %v2570 = vld [vmem:[#allocation9 + $0x80] sm:$0xff]
    %v2571 = vld [vmem:[#allocation9 + $0x88] sm:$0xff]
    %v2572 = vld [vmem:[#allocation9 + $0x90] sm:$0xff]
    %v2573 = vld [vmem:[#allocation9 + $0x98] sm:$0xff]
    %v2574 = vld [vmem:[#allocation9 + $0xa0] sm:$0xff]
    %v2575 = vld [vmem:[#allocation9 + $0xa8] sm:$0xff]
    %v2576 = vld [vmem:[#allocation9 + $0xb0] sm:$0xff]
    %v2577 = vld [vmem:[#allocation9 + $0xb8] sm:$0xff]
    %v2578 = vld [vmem:[#allocation9 + $0xc0] sm:$0xff]
    %v2579 = vld [vmem:[#allocation9 + $0xc8] sm:$0xff]
    %v2580 = vld [vmem:[#allocation9 + $0xd0] sm:$0xff]
    %v2581 = vld [vmem:[#allocation9 + $0xd8] sm:$0xff]
    %v2582 = vld [vmem:[#allocation9 + $0xe0] sm:$0xff]
    %v2583 = vld [vmem:[#allocation9 + $0xe8] sm:$0xff]
    %v2584 = vld [vmem:[#allocation9 + $0xf0] sm:$0xff]
    %v2585 = vld [vmem:[#allocation9 + $0xf8] sm:$0xff]
    %v2586 = vld [vmem:[#allocation9 + $0x100] sm:$0xff]
    %v2587 = vld [vmem:[#allocation9 + $0x108] sm:$0xff]
    %v2588 = vld [vmem:[#allocation9 + $0x110] sm:$0xff]
    %v2589 = vld [vmem:[#allocation9 + $0x118] sm:$0xff]
    %v2590 = vld [vmem:[#allocation9 + $0x120] sm:$0xff]
    %v2591 = vld [vmem:[#allocation9 + $0x128] sm:$0xff]
    %v2592 = vld [vmem:[#allocation9 + $0x130] sm:$0xff]
    %v2593 = vld [vmem:[#allocation9 + $0x138] sm:$0xff]
    %v2594 = vld [vmem:[#allocation9 + $0x140] sm:$0xff]
    %v2595 = vld [vmem:[#allocation9 + $0x148] sm:$0xff]
    %v2596 = vld [vmem:[#allocation9 + $0x150] sm:$0xff]
    %v2597 = vld [vmem:[#allocation9 + $0x158] sm:$0xff]
    %v2598 = vld [vmem:[#allocation9 + $0x160] sm:$0xff]
    %v2599 = vld [vmem:[#allocation9 + $0x168] sm:$0xff]
    %v2600 = vld [vmem:[#allocation9 + $0x170] sm:$0xff]
    %v2601 = vld [vmem:[#allocation9 + $0x178] sm:$0xff]
    %v2602 = vld [vmem:[#allocation9 + $0x180] sm:$0x1]
    %v2603 = vld [vmem:[#allocation9 + $0x181] sm:$0x1]
    %v2604 = vld [vmem:[#allocation2] sm:$0xff]
    %v2605 = vld [vmem:[#allocation2 + $0x8] sm:$0x3f]
    %v2606 = vld [vmem:[#allocation3] sm:$0xff]
    %v2607 = vld [vmem:[#allocation3 + $0x8] sm:$0x3f]
    %2608 = vmatprep.subr.mxu0 0.0
    %2609 = vmatpush1.msra.mxu0 %v2570
    %2610 = vmatprep.subr.mxu0 0.0
    %2611 = vmatpush1.msra.mxu0 %v2571
    %2612 = vmatprep.subr.mxu0 0.0
    %2613 = vmatpush1.msra.mxu0 %v2572
    %2614 = vmatprep.subr.mxu0 0.0
    %2615 = vmatpush1.msra.mxu0 %v2573
    %2616 = vmatprep.subr.mxu0 0.0
    %2617 = vmatpush1.msra.mxu0 %v2574
    %2618 = vmatprep.subr.mxu0 0.0
    %2619 = vmatpush1.msra.mxu0 %v2575
    %2620 = vmatprep.subr.mxu0 0.0
    %2621 = vmatpush1.msra.mxu0 %v2576
    %2622 = vmatprep.subr.mxu0 0.0
    %2623 = vmatpush1.msra.mxu0 %v2577
    %2624 = vmatprep.subr.mxu0 0.0
    %2625 = vmatpush1.msra.mxu0 %v2578
    %2626 = vmatprep.subr.mxu0 0.0
    %2627 = vmatpush1.msra.mxu0 %v2579
    %2628 = vmatprep.subr.mxu0 0.0
    %2629 = vmatpush1.msra.mxu0 %v2580
    %2630 = vmatprep.subr.mxu0 0.0
    %2631 = vmatpush1.msra.mxu0 %v2581
    %2632 = vmatprep.subr.mxu0 0.0
    %2633 = vmatpush1.msra.mxu0 %v2582
    %2634 = vmatprep.subr.mxu0 0.0
    %2635 = vmatpush1.msra.mxu0 %v2583
    %2636 = vmatprep.subr.mxu0 0.0
    %2637 = vmatpush1.msra.mxu0 %v2584
    %2638 = vmatprep.subr.mxu0 0.0
    %2639 = vmatpush1.msra.mxu0 %v2585
    %2640 = vmatprep.subr.mxu0 0.0
    %2641 = vmatpush1.msra.mxu0 0.0
    %2642 = vmatprep.subr.mxu0 0.0
    %2643 = vmatpush1.msra.mxu0 0.0
    %2644 = vmatprep.subr.mxu0 0.0
    %2645 = vmatpush1.msra.mxu0 0.0
    %2646 = vmatprep.subr.mxu0 0.0
    %2647 = vmatpush1.msra.mxu0 0.0
    %2648 = vmatprep.subr.mxu0 0.0
    %2649 = vmatpush1.msra.mxu0 0.0
    %2650 = vmatprep.subr.mxu0 0.0
    %2651 = vmatpush1.msra.mxu0 0.0
    %2652 = vmatprep.subr.mxu0 0.0
    %2653 = vmatpush1.msra.mxu0 0.0
    %2654 = vmatprep.subr.mxu0 0.0
    %2655 = vmatpush1.msra.mxu0 0.0
    %2656 = vmatprep.subr.mxu0 0.0
    %2657 = vmatpush1.msra.mxu0 0.0
    %2658 = vmatprep.subr.mxu0 0.0
    %2659 = vmatpush1.msra.mxu0 0.0
    %2660 = vmatprep.subr.mxu0 0.0
    %2661 = vmatpush1.msra.mxu0 0.0
    %2662 = vmatprep.subr.mxu0 0.0
    %2663 = vmatpush1.msra.mxu0 0.0
    %2664 = vmatprep.subr.mxu0 0.0
    %2665 = vmatpush1.msra.mxu0 0.0
    %2666 = vmatprep.subr.mxu0 0.0
    %2667 = vmatpush1.msra.mxu0 0.0
    %2668 = vmatprep.subr.mxu0 0.0
    %2669 = vmatpush1.msra.mxu0 0.0
    %2670 = vmatprep.subr.mxu0 0.0
    %2671 = vmatpush1.msra.mxu0 0.0
    %2672 = vmatprep.mubr.f32.mxu0 0.0
    %2673 = vmatmul.mubr.f32.gmra.mrb[0].mxu0 %v2606
    %v2674 = vpop.f32.mrb[0].mxu0
    %v2675 = vadd.f32 0.0, %v2674
    %v2676 = vpop.f32.mrb[0].mxu0
    %2677 = vmatprep.mubr.f32.mxu0 0.0
    %2678 = vmatmul.mubr.f32.gmra.mrb[0].mxu0 %v2607
    %v2679 = vpop.f32.mrb[0].mxu0
    %v2680 = vadd.f32 0.0, %v2679
    %v2681 = vpop.f32.mrb[0].mxu0
    %2682 = vdwg.mxu0
    %2683 = vmatprep.subr.mxu0 0.0
    %2684 = vmatpush1.msra.mxu0 %v2554
    %2685 = vmatprep.subr.mxu0 0.0
    %2686 = vmatpush1.msra.mxu0 %v2555
    %2687 = vmatprep.subr.mxu0 0.0
    %2688 = vmatpush1.msra.mxu0 %v2556
    %2689 = vmatprep.subr.mxu0 0.0
    %2690 = vmatpush1.msra.mxu0 %v2557
    %2691 = vmatprep.subr.mxu0 0.0
    %2692 = vmatpush1.msra.mxu0 %v2558
    %2693 = vmatprep.subr.mxu0 0.0
    %2694 = vmatpush1.msra.mxu0 %v2559
    %2695 = vmatprep.subr.mxu0 0.0
    %2696 = vmatpush1.msra.mxu0 %v2560
    %2697 = vmatprep.subr.mxu0 0.0
    %2698 = vmatpush1.msra.mxu0 %v2561
    %2699 = vmatprep.subr.mxu0 0.0
    %2700 = vmatpush1.msra.mxu0 %v2562
    %2701 = vmatprep.subr.mxu0 0.0
    %2702 = vmatpush1.msra.mxu0 %v2563
    %2703 = vmatprep.subr.mxu0 0.0
    %2704 = vmatpush1.msra.mxu0 %v2564
    %2705 = vmatprep.subr.mxu0 0.0
    %2706 = vmatpush1.msra.mxu0 %v2565
    %2707 = vmatprep.subr.mxu0 0.0
    %2708 = vmatpush1.msra.mxu0 %v2566
    %2709 = vmatprep.subr.mxu0 0.0
    %2710 = vmatpush1.msra.mxu0 %v2567
    %2711 = vmatprep.subr.mxu0 0.0
    %2712 = vmatpush1.msra.mxu0 %v2568
    %2713 = vmatprep.subr.mxu0 0.0
    %2714 = vmatpush1.msra.mxu0 %v2569
    %2715 = vmatprep.subr.mxu0 0.0
    %2716 = vmatpush1.msra.mxu0 0.0
    %2717 = vmatprep.subr.mxu0 0.0
    %2718 = vmatpush1.msra.mxu0 0.0
    %2719 = vmatprep.subr.mxu0 0.0
    %2720 = vmatpush1.msra.mxu0 0.0
    %2721 = vmatprep.subr.mxu0 0.0
    %2722 = vmatpush1.msra.mxu0 0.0
    %2723 = vmatprep.subr.mxu0 0.0
    %2724 = vmatpush1.msra.mxu0 0.0
    %2725 = vmatprep.subr.mxu0 0.0
    %2726 = vmatpush1.msra.mxu0 0.0
    %2727 = vmatprep.subr.mxu0 0.0
    %2728 = vmatpush1.msra.mxu0 0.0
    %2729 = vmatprep.subr.mxu0 0.0
    %2730 = vmatpush1.msra.mxu0 0.0
    %2731 = vmatprep.subr.mxu0 0.0
    %2732 = vmatpush1.msra.mxu0 0.0
    %2733 = vmatprep.subr.mxu0 0.0
    %2734 = vmatpush1.msra.mxu0 0.0
    %2735 = vmatprep.subr.mxu0 0.0
    %2736 = vmatpush1.msra.mxu0 0.0
    %2737 = vmatprep.subr.mxu0 0.0
    %2738 = vmatpush1.msra.mxu0 0.0
    %2739 = vmatprep.subr.mxu0 0.0
    %2740 = vmatpush1.msra.mxu0 0.0
    %2741 = vmatprep.subr.mxu0 0.0
    %2742 = vmatpush1.msra.mxu0 0.0
    %2743 = vmatprep.subr.mxu0 0.0
    %2744 = vmatpush1.msra.mxu0 0.0
    %2745 = vmatprep.subr.mxu0 0.0
    %2746 = vmatpush1.msra.mxu0 0.0
    %2747 = vmatprep.mubr.f32.mxu0 0.0
    %2748 = vmatmul.mubr.f32.gmra.mrb[0].mxu0 %v2604
    %v2749 = vpop.f32.mrb[0].mxu0
    %v2750 = vadd.f32 %v2675, %v2749
    %v2751 = vpop.f32.mrb[0].mxu0
    %2752 = vmatprep.mubr.f32.mxu0 0.0
    %2753 = vmatmul.mubr.f32.gmra.mrb[0].mxu0 %v2605
    %v2754 = vpop.f32.mrb[0].mxu0
    %v2755 = vadd.f32 %v2680, %v2754
    %v2756 = vpop.f32.mrb[0].mxu0
    %2757 = vdwg.mxu0
    %v2758 = vlaneseq
    %v2759 = vshrl.u32 %v2758, 7
    %v2760 = vsub.s32 0, %v2759
    %v2761 = vrot.slane %v2602, %v2760
    %v2762 = vadd.f32 %v2750, %v2761
    %v2763 = vadd.f32 %v2755, %v2761
    %v2764 = vmax.f32 %v2762, 0.0
    %v2765 = vmax.f32 %v2763, 0.0
    %2766 = vmatprep.subr.mxu0 0.0
    %2767 = vmatpush1.msra.mxu0 %v2586
    %2768 = vmatprep.subr.mxu0 0.0
    %2769 = vmatpush1.msra.mxu0 %v2587
    %2770 = vmatprep.subr.mxu0 0.0
    %2771 = vmatpush1.msra.mxu0 %v2588
    %2772 = vmatprep.subr.mxu0 0.0
    %2773 = vmatpush1.msra.mxu0 %v2589
    %2774 = vmatprep.subr.mxu0 0.0
    %2775 = vmatpush1.msra.mxu0 %v2590
    %2776 = vmatprep.subr.mxu0 0.0
    %2777 = vmatpush1.msra.mxu0 %v2591
    %2778 = vmatprep.subr.mxu0 0.0
    %2779 = vmatpush1.msra.mxu0 %v2592
    %2780 = vmatprep.subr.mxu0 0.0
    %2781 = vmatpush1.msra.mxu0 %v2593
    %2782 = vmatprep.subr.mxu0 0.0
    %2783 = vmatpush1.msra.mxu0 %v2594
    %2784 = vmatprep.subr.mxu0 0.0
    %2785 = vmatpush1.msra.mxu0 %v2595
    %2786 = vmatprep.subr.mxu0 0.0
    %2787 = vmatpush1.msra.mxu0 %v2596
    %2788 = vmatprep.subr.mxu0 0.0
    %2789 = vmatpush1.msra.mxu0 %v2597
    %2790 = vmatprep.subr.mxu0 0.0
    %2791 = vmatpush1.msra.mxu0 %v2598
    %2792 = vmatprep.subr.mxu0 0.0
    %2793 = vmatpush1.msra.mxu0 %v2599
    %2794 = vmatprep.subr.mxu0 0.0
    %2795 = vmatpush1.msra.mxu0 %v2600
    %2796 = vmatprep.subr.mxu0 0.0
    %2797 = vmatpush1.msra.mxu0 %v2601
    %2798 = vmatprep.subr.mxu0 0.0
    %2799 = vmatpush1.msra.mxu0 0.0
    %2800 = vmatprep.subr.mxu0 0.0
    %2801 = vmatpush1.msra.mxu0 0.0
    %2802 = vmatprep.subr.mxu0 0.0
    %2803 = vmatpush1.msra.mxu0 0.0
    %2804 = vmatprep.subr.mxu0 0.0
    %2805 = vmatpush1.msra.mxu0 0.0
    %2806 = vmatprep.subr.mxu0 0.0
    %2807 = vmatpush1.msra.mxu0 0.0
    %2808 = vmatprep.subr.mxu0 0.0
    %2809 = vmatpush1.msra.mxu0 0.0
    %2810 = vmatprep.subr.mxu0 0.0
    %2811 = vmatpush1.msra.mxu0 0.0
    %2812 = vmatprep.subr.mxu0 0.0
    %2813 = vmatpush1.msra.mxu0 0.0
    %2814 = vmatprep.subr.mxu0 0.0
    %2815 = vmatpush1.msra.mxu0 0.0
    %2816 = vmatprep.subr.mxu0 0.0
    %2817 = vmatpush1.msra.mxu0 0.0
    %2818 = vmatprep.subr.mxu0 0.0
    %2819 = vmatpush1.msra.mxu0 0.0
    %2820 = vmatprep.subr.mxu0 0.0
    %2821 = vmatpush1.msra.mxu0 0.0
    %2822 = vmatprep.subr.mxu0 0.0
    %2823 = vmatpush1.msra.mxu0 0.0
    %2824 = vmatprep.subr.mxu0 0.0
    %2825 = vmatpush1.msra.mxu0 0.0
    %2826 = vmatprep.subr.mxu0 0.0
    %2827 = vmatpush1.msra.mxu0 0.0
    %2828 = vmatprep.subr.mxu0 0.0
    %2829 = vmatpush1.msra.mxu0 0.0
    %2830 = vmatprep.mubr.f32.mxu0 0.0
    %2831 = vmatmul.mubr.f32.gmra.mrb[0].mxu0 %v2764
    %v2832 = vpop.f32.mrb[0].mxu0
    %v2833 = vadd.f32 0.0, %v2832
    %v2834 = vpop.f32.mrb[0].mxu0
    %2835 = vmatprep.mubr.f32.mxu0 0.0
    %2836 = vmatmul.mubr.f32.gmra.mrb[0].mxu0 %v2765
    %v2837 = vpop.f32.mrb[0].mxu0
    %v2838 = vadd.f32 0.0, %v2837
    %v2839 = vpop.f32.mrb[0].mxu0
    %2840 = vdwg.mxu0
    %v2841 = vlaneseq
    %v2842 = vshrl.u32 %v2841, 7
    %v2843 = vsub.s32 0, %v2842
    %v2844 = vrot.slane %v2603, %v2843
    %v2845 = vadd.f32 %v2833, %v2844
    %v2846 = vadd.f32 %v2838, %v2844
    %vm2849 = vcmask 1045504
    %v2850 = vrot.slane %v59, 2
    %v2851 = vrot.slane %v60, 2
    %v2852 = vsel %vm2849, %v2850, %v2851
    %v2855 = vsub.f32 %v2845, %v2852
    %v2856 = vsub.f32 %v2846, %v2851
    %v2857 = vand.u32 2147483647, %v2855
    %v2858 = vand.u32 2147483647, %v2856
    %vm2859 = vcmask 64512
    %v2860 = vsel %vm2859, %v2857, 0.0
    %vm2861 = vcmask 62464
    %v2862 = vsel %vm2861, %v2858, 0.0
    %v2863 = vadd.f32 %v2860, %v2862
    %2864 = vadd.xlane.f32.xlu0 %v2863
    %v2865 = vpop.xlane.xlu0 %2864
    %v2866 = vrot.slane %v2865, 4
    %v2867 = vadd.f32 %v2865, %v2866
    %v2868 = vrot.slane %v2867, 2
    %v2869 = vadd.f32 %v2867, %v2868
    %v2870 = vrot.slane %v2869, 1
    %v2871 = vadd.f32 %v2869, %v2870
    %s2872 = vtos %v2871
    %v2873 = vrcp.pop 16.0
    %s2874 = vtos %v2873
    %s2875 = smul.f32 %s2872, %s2874
    %s2876 = sadd.f32 %s2875, 0.0
    %v2877 = vlaneseq
    %v2878 = vshrl.u32 %v2877, 7
    %v2879 = vsub.s32 0, %v2878
    %v2880 = vrot.slane %v2552, %v2879
    %v2881 = vmul.f32 %v2855, %v2880
    %v2882 = vmul.f32 %v2856, %v2880
    %v2883 = vmul.f32 %v2881, %v2881
    %v2884 = vmul.f32 %v2882, %v2882
    %v2886 = vsel %vm2859, %v2883, 0
    %v2889 = vsel %vm2859, %v2884, 0
    %2891 = vmatprep.subr.mxu0 0.0
    %2892 = vmatpush1.msra.mxu0 %v2553
    %2893 = vmatprep.subr.mxu0 0.0
    %2894 = vmatpush1.msra.mxu0 0.0
    %2895 = vmatprep.subr.mxu0 0.0
    %2896 = vmatpush1.msra.mxu0 0.0
    %2897 = vmatprep.subr.mxu0 0.0
    %2898 = vmatpush1.msra.mxu0 0.0
    %2899 = vmatprep.subr.mxu0 0.0
    %2900 = vmatpush1.msra.mxu0 0.0
    %2901 = vmatprep.subr.mxu0 0.0
    %2902 = vmatpush1.msra.mxu0 0.0
    %2903 = vmatprep.subr.mxu0 0.0
    %2904 = vmatpush1.msra.mxu0 0.0
    %2905 = vmatprep.subr.mxu0 0.0
    %2906 = vmatpush1.msra.mxu0 0.0
    %2907 = vmatprep.subr.mxu0 0.0
    %2908 = vmatpush1.msra.mxu0 0.0
    %2909 = vmatprep.subr.mxu0 0.0
    %2910 = vmatpush1.msra.mxu0 0.0
    %2911 = vmatprep.subr.mxu0 0.0
    %2912 = vmatpush1.msra.mxu0 0.0
    %2913 = vmatprep.subr.mxu0 0.0
    %2914 = vmatpush1.msra.mxu0 0.0
    %2915 = vmatprep.subr.mxu0 0.0
    %2916 = vmatpush1.msra.mxu0 0.0
    %2917 = vmatprep.subr.mxu0 0.0
    %2918 = vmatpush1.msra.mxu0 0.0
    %2919 = vmatprep.subr.mxu0 0.0
    %2920 = vmatpush1.msra.mxu0 0.0
    %2921 = vmatprep.subr.mxu0 0.0
    %2922 = vmatpush1.msra.mxu0 0.0
    %2923 = vmatprep.subr.mxu0 0.0
    %2924 = vmatpush1.msra.mxu0 0.0
    %2925 = vmatprep.subr.mxu0 0.0
    %2926 = vmatpush1.msra.mxu0 0.0
    %2927 = vmatprep.subr.mxu0 0.0
    %2928 = vmatpush1.msra.mxu0 0.0
    %2929 = vmatprep.subr.mxu0 0.0
    %2930 = vmatpush1.msra.mxu0 0.0
    %2931 = vmatprep.subr.mxu0 0.0
    %2932 = vmatpush1.msra.mxu0 0.0
    %2933 = vmatprep.subr.mxu0 0.0
    %2934 = vmatpush1.msra.mxu0 0.0
    %2935 = vmatprep.subr.mxu0 0.0
    %2936 = vmatpush1.msra.mxu0 0.0
    %2937 = vmatprep.subr.mxu0 0.0
    %2938 = vmatpush1.msra.mxu0 0.0
    %2939 = vmatprep.subr.mxu0 0.0
    %2940 = vmatpush1.msra.mxu0 0.0
    %2941 = vmatprep.subr.mxu0 0.0
    %2942 = vmatpush1.msra.mxu0 0.0
    %2943 = vmatprep.subr.mxu0 0.0
    %2944 = vmatpush1.msra.mxu0 0.0
    %2945 = vmatprep.subr.mxu0 0.0
    %2946 = vmatpush1.msra.mxu0 0.0
    %2947 = vmatprep.subr.mxu0 0.0
    %2948 = vmatpush1.msra.mxu0 0.0
    %2949 = vmatprep.subr.mxu0 0.0
    %2950 = vmatpush1.msra.mxu0 0.0
    %2951 = vmatprep.subr.mxu0 0.0
    %2952 = vmatpush1.msra.mxu0 0.0
    %2953 = vmatprep.subr.mxu0 0.0
    %2954 = vmatpush1.msra.mxu0 0.0
    %2955 = vmatprep.mubr.f32.mxu0 0.0
    %2956 = vmatmul.mubr.f32.gmra.mrb[0].mxu0 %v2886
    %v2957 = vpop.f32.mrb[0].mxu0
    %v2958 = vadd.f32 0.0, %v2957
    %v2959 = vpop.f32.mrb[0].mxu0
    %2960 = vmatprep.mubr.f32.mxu0 0.0
    %2961 = vmatmul.mubr.f32.gmra.mrb[0].mxu0 %v2889
    %v2962 = vpop.f32.mrb[0].mxu0
    %v2963 = vadd.f32 0.0, %v2962
    %v2964 = vpop.f32.mrb[0].mxu0
    %2965 = vdwg.mxu0
    %v2966 = vrsqrt.pop %v2958
    %v2967 = vmul.f32 %v2958, %v2966
    %vm2968 = vcmp.eq.f32.partialorder %v2958, inf
    %v2969 = vsel %vm2968, %v2958, %v2967
    %vm2970 = vcmp.eq.f32.partialorder %v2958, 0.0
    %v2971 = vand.u32 %v2958, 2147483648
    %v2972 = vsel %vm2970, %v2971, %v2969
    %v2973 = vrsqrt.pop %v2963
    %v2974 = vmul.f32 %v2963, %v2973
    %vm2975 = vcmp.eq.f32.partialorder %v2963, inf
    %v2976 = vsel %vm2975, %v2963, %v2974
    %vm2977 = vcmp.eq.f32.partialorder %v2963, 0.0
    %v2978 = vand.u32 %v2963, 2147483648
    %v2979 = vsel %vm2977, %v2978, %v2976
    %vm2980 = vcmask 31744
    %v2981 = vsel %vm2980, %v2972, 0.0
    %vm2982 = vcmask 29696
    %v2983 = vsel %vm2982, %v2979, 0.0
    %v2984 = vadd.f32 %v2981, %v2983
    %2985 = vadd.xlane.f32.xlu0 %v2984
    %v2986 = vpop.xlane.xlu0 %2985
    %v2987 = vrot.slane %v2986, 4
    %v2988 = vadd.f32 %v2986, %v2987
    %v2989 = vrot.slane %v2988, 2
    %v2990 = vadd.f32 %v2988, %v2989
    %v2991 = vrot.slane %v2990, 1
    %v2992 = vadd.f32 %v2990, %v2991
    %s2993 = vtos %v2992
    %v2994 = vrcp.pop 8.0
    %s2995 = vtos %v2994
    %s2996 = smul.f32 %s2993, %s2995
    %s2997 = sadd.f32 %s2996, 0.0
    %v2998 = vld [vmem:[#allocation9 + $0x188] sm:$0xff]
    %v2999 = vld [vmem:[#allocation9 + $0x190] sm:$0xff]
    %v3000 = vld [vmem:[#allocation9 + $0x198] sm:$0xff]
    %v3001 = vld [vmem:[#allocation9 + $0x1a0] sm:$0xff]
    %v3002 = vld [vmem:[#allocation9 + $0x1a8] sm:$0xff]
    %v3003 = vld [vmem:[#allocation9 + $0x1b0] sm:$0xff]
    %v3004 = vld [vmem:[#allocation9 + $0x1b8] sm:$0xff]
    %v3005 = vld [vmem:[#allocation9 + $0x1c0] sm:$0xff]
    %v3006 = vld [vmem:[#allocation9 + $0x1c8] sm:$0xff]
    %v3007 = vld [vmem:[#allocation9 + $0x1d0] sm:$0xff]
    %v3008 = vld [vmem:[#allocation9 + $0x1d8] sm:$0xff]
    %v3009 = vld [vmem:[#allocation9 + $0x1e0] sm:$0xff]
    %v3010 = vld [vmem:[#allocation9 + $0x1e8] sm:$0xff]
    %v3011 = vld [vmem:[#allocation9 + $0x1f0] sm:$0xff]
    %v3012 = vld [vmem:[#allocation9 + $0x1f8] sm:$0xff]
    %v3013 = vld [vmem:[#allocation9 + $0x200] sm:$0xff]
    %v3014 = vld [vmem:[#allocation9 + $0x208] sm:$0xff]
    %v3015 = vld [vmem:[#allocation9 + $0x210] sm:$0xff]
    %v3016 = vld [vmem:[#allocation9 + $0x218] sm:$0xff]
    %v3017 = vld [vmem:[#allocation9 + $0x220] sm:$0xff]
    %v3018 = vld [vmem:[#allocation9 + $0x228] sm:$0xff]
    %v3019 = vld [vmem:[#allocation9 + $0x230] sm:$0xff]
    %v3020 = vld [vmem:[#allocation9 + $0x238] sm:$0xff]
    %v3021 = vld [vmem:[#allocation9 + $0x240] sm:$0xff]
    %v3022 = vld [vmem:[#allocation9 + $0x248] sm:$0xff]
    %v3023 = vld [vmem:[#allocation9 + $0x250] sm:$0xff]
    %v3024 = vld [vmem:[#allocation9 + $0x258] sm:$0xff]
    %v3025 = vld [vmem:[#allocation9 + $0x260] sm:$0xff]
    %v3026 = vld [vmem:[#allocation9 + $0x268] sm:$0xff]
    %v3027 = vld [vmem:[#allocation9 + $0x270] sm:$0xff]
    %v3028 = vld [vmem:[#allocation9 + $0x278] sm:$0xff]
    %v3029 = vld [vmem:[#allocation9 + $0x280] sm:$0xff]
    %v3030 = vld [vmem:[#allocation9 + $0x288] sm:$0xff]
    %v3031 = vld [vmem:[#allocation9 + $0x290] sm:$0xff]
    %v3032 = vld [vmem:[#allocation9 + $0x298] sm:$0xff]
    %v3033 = vld [vmem:[#allocation9 + $0x2a0] sm:$0xff]
    %v3034 = vld [vmem:[#allocation9 + $0x2a8] sm:$0xff]
    %v3035 = vld [vmem:[#allocation9 + $0x2b0] sm:$0xff]
    %v3036 = vld [vmem:[#allocation9 + $0x2b8] sm:$0xff]
    %v3037 = vld [vmem:[#allocation9 + $0x2c0] sm:$0xff]
    %v3038 = vld [vmem:[#allocation9 + $0x2c8] sm:$0xff]
    %v3039 = vld [vmem:[#allocation9 + $0x2d0] sm:$0xff]
    %v3040 = vld [vmem:[#allocation9 + $0x2d8] sm:$0xff]
    %v3041 = vld [vmem:[#allocation9 + $0x2e0] sm:$0xff]
    %v3042 = vld [vmem:[#allocation9 + $0x2e8] sm:$0xff]
    %v3043 = vld [vmem:[#allocation9 + $0x2f0] sm:$0xff]
    %v3044 = vld [vmem:[#allocation9 + $0x2f8] sm:$0xff]
    %v3045 = vld [vmem:[#allocation9 + $0x300] sm:$0xff]
    %v3046 = vld [vmem:[#allocation9 + $0x308] sm:$0x1]
    %v3047 = vld [vmem:[#allocation9 + $0x309] sm:$0x1]
    %v3048 = vld [vmem:[#allocation2] sm:$0xff]
    %v3049 = vld [vmem:[#allocation2 + $0x8] sm:$0x3]
    %v3050 = vld [vmem:[#allocation3 + $0x4] sm:$0xff]
    %v3051 = vld [vmem:[#allocation3 + $0xc] sm:$0x3]
    %3052 = vmatprep.subr.mxu0 0.0
    %3053 = vmatpush1.msra.mxu0 %v3014
    %3054 = vmatprep.subr.mxu0 0.0
    %3055 = vmatpush1.msra.mxu0 %v3015
    %3056 = vmatprep.subr.mxu0 0.0
    %3057 = vmatpush1.msra.mxu0 %v3016
    %3058 = vmatprep.subr.mxu0 0.0
    %3059 = vmatpush1.msra.mxu0 %v3017
    %3060 = vmatprep.subr.mxu0 0.0
    %3061 = vmatpush1.msra.mxu0 %v3018
    %3062 = vmatprep.subr.mxu0 0.0
    %3063 = vmatpush1.msra.mxu0 %v3019
    %3064 = vmatprep.subr.mxu0 0.0
    %3065 = vmatpush1.msra.mxu0 %v3020
    %3066 = vmatprep.subr.mxu0 0.0
    %3067 = vmatpush1.msra.mxu0 %v3021
    %3068 = vmatprep.subr.mxu0 0.0
    %3069 = vmatpush1.msra.mxu0 %v3022
    %3070 = vmatprep.subr.mxu0 0.0
    %3071 = vmatpush1.msra.mxu0 %v3023
    %3072 = vmatprep.subr.mxu0 0.0
    %3073 = vmatpush1.msra.mxu0 %v3024
    %3074 = vmatprep.subr.mxu0 0.0
    %3075 = vmatpush1.msra.mxu0 %v3025
    %3076 = vmatprep.subr.mxu0 0.0
    %3077 = vmatpush1.msra.mxu0 %v3026
    %3078 = vmatprep.subr.mxu0 0.0
    %3079 = vmatpush1.msra.mxu0 %v3027
    %3080 = vmatprep.subr.mxu0 0.0
    %3081 = vmatpush1.msra.mxu0 %v3028
    %3082 = vmatprep.subr.mxu0 0.0
    %3083 = vmatpush1.msra.mxu0 %v3029
    %3084 = vmatprep.subr.mxu0 0.0
    %3085 = vmatpush1.msra.mxu0 0.0
    %3086 = vmatprep.subr.mxu0 0.0
    %3087 = vmatpush1.msra.mxu0 0.0
    %3088 = vmatprep.subr.mxu0 0.0
    %3089 = vmatpush1.msra.mxu0 0.0
    %3090 = vmatprep.subr.mxu0 0.0
    %3091 = vmatpush1.msra.mxu0 0.0
    %3092 = vmatprep.subr.mxu0 0.0
    %3093 = vmatpush1.msra.mxu0 0.0
    %3094 = vmatprep.subr.mxu0 0.0
    %3095 = vmatpush1.msra.mxu0 0.0
    %3096 = vmatprep.subr.mxu0 0.0
    %3097 = vmatpush1.msra.mxu0 0.0
    %3098 = vmatprep.subr.mxu0 0.0
    %3099 = vmatpush1.msra.mxu0 0.0
    %3100 = vmatprep.subr.mxu0 0.0
    %3101 = vmatpush1.msra.mxu0 0.0
    %3102 = vmatprep.subr.mxu0 0.0
    %3103 = vmatpush1.msra.mxu0 0.0
    %3104 = vmatprep.subr.mxu0 0.0
    %3105 = vmatpush1.msra.mxu0 0.0
    %3106 = vmatprep.subr.mxu0 0.0
    %3107 = vmatpush1.msra.mxu0 0.0
    %3108 = vmatprep.subr.mxu0 0.0
    %3109 = vmatpush1.msra.mxu0 0.0
    %3110 = vmatprep.subr.mxu0 0.0
    %3111 = vmatpush1.msra.mxu0 0.0
    %3112 = vmatprep.subr.mxu0 0.0
    %3113 = vmatpush1.msra.mxu0 0.0
    %3114 = vmatprep.subr.mxu0 0.0
    %3115 = vmatpush1.msra.mxu0 0.0
    %3116 = vmatprep.mubr.f32.mxu0 0.0
    %3117 = vmatmul.mubr.f32.gmra.mrb[0].mxu0 %v3050
    %v3118 = vpop.f32.mrb[0].mxu0
    %v3119 = vadd.f32 0.0, %v3118
    %v3120 = vpop.f32.mrb[0].mxu0
    %3121 = vmatprep.mubr.f32.mxu0 0.0
    %3122 = vmatmul.mubr.f32.gmra.mrb[0].mxu0 %v3051
    %v3123 = vpop.f32.mrb[0].mxu0
    %v3124 = vadd.f32 0.0, %v3123
    %v3125 = vpop.f32.mrb[0].mxu0
    %3126 = vdwg.mxu0
    %3127 = vmatprep.subr.mxu0 0.0
    %3128 = vmatpush1.msra.mxu0 %v2998
    %3129 = vmatprep.subr.mxu0 0.0
    %3130 = vmatpush1.msra.mxu0 %v2999
    %3131 = vmatprep.subr.mxu0 0.0
    %3132 = vmatpush1.msra.mxu0 %v3000
    %3133 = vmatprep.subr.mxu0 0.0
    %3134 = vmatpush1.msra.mxu0 %v3001
    %3135 = vmatprep.subr.mxu0 0.0
    %3136 = vmatpush1.msra.mxu0 %v3002
    %3137 = vmatprep.subr.mxu0 0.0
    %3138 = vmatpush1.msra.mxu0 %v3003
    %3139 = vmatprep.subr.mxu0 0.0
    %3140 = vmatpush1.msra.mxu0 %v3004
    %3141 = vmatprep.subr.mxu0 0.0
    %3142 = vmatpush1.msra.mxu0 %v3005
    %3143 = vmatprep.subr.mxu0 0.0
    %3144 = vmatpush1.msra.mxu0 %v3006
    %3145 = vmatprep.subr.mxu0 0.0
    %3146 = vmatpush1.msra.mxu0 %v3007
    %3147 = vmatprep.subr.mxu0 0.0
    %3148 = vmatpush1.msra.mxu0 %v3008
    %3149 = vmatprep.subr.mxu0 0.0
    %3150 = vmatpush1.msra.mxu0 %v3009
    %3151 = vmatprep.subr.mxu0 0.0
    %3152 = vmatpush1.msra.mxu0 %v3010
    %3153 = vmatprep.subr.mxu0 0.0
    %3154 = vmatpush1.msra.mxu0 %v3011
    %3155 = vmatprep.subr.mxu0 0.0
    %3156 = vmatpush1.msra.mxu0 %v3012
    %3157 = vmatprep.subr.mxu0 0.0
    %3158 = vmatpush1.msra.mxu0 %v3013
    %3159 = vmatprep.subr.mxu0 0.0
    %3160 = vmatpush1.msra.mxu0 0.0
    %3161 = vmatprep.subr.mxu0 0.0
    %3162 = vmatpush1.msra.mxu0 0.0
    %3163 = vmatprep.subr.mxu0 0.0
    %3164 = vmatpush1.msra.mxu0 0.0
    %3165 = vmatprep.subr.mxu0 0.0
    %3166 = vmatpush1.msra.mxu0 0.0
    %3167 = vmatprep.subr.mxu0 0.0
    %3168 = vmatpush1.msra.mxu0 0.0
    %3169 = vmatprep.subr.mxu0 0.0
    %3170 = vmatpush1.msra.mxu0 0.0
    %3171 = vmatprep.subr.mxu0 0.0
    %3172 = vmatpush1.msra.mxu0 0.0
    %3173 = vmatprep.subr.mxu0 0.0
    %3174 = vmatpush1.msra.mxu0 0.0
    %3175 = vmatprep.subr.mxu0 0.0
    %3176 = vmatpush1.msra.mxu0 0.0
    %3177 = vmatprep.subr.mxu0 0.0
    %3178 = vmatpush1.msra.mxu0 0.0
    %3179 = vmatprep.subr.mxu0 0.0
    %3180 = vmatpush1.msra.mxu0 0.0
    %3181 = vmatprep.subr.mxu0 0.0
    %3182 = vmatpush1.msra.mxu0 0.0
    %3183 = vmatprep.subr.mxu0 0.0
    %3184 = vmatpush1.msra.mxu0 0.0
    %3185 = vmatprep.subr.mxu0 0.0
    %3186 = vmatpush1.msra.mxu0 0.0
    %3187 = vmatprep.subr.mxu0 0.0
    %3188 = vmatpush1.msra.mxu0 0.0
    %3189 = vmatprep.subr.mxu0 0.0
    %3190 = vmatpush1.msra.mxu0 0.0
    %3191 = vmatprep.mubr.f32.mxu0 0.0
    %3192 = vmatmul.mubr.f32.gmra.mrb[0].mxu0 %v3048
    %v3193 = vpop.f32.mrb[0].mxu0
    %v3194 = vadd.f32 %v3119, %v3193
    %v3195 = vpop.f32.mrb[0].mxu0
    %3196 = vmatprep.mubr.f32.mxu0 0.0
    %3197 = vmatmul.mubr.f32.gmra.mrb[0].mxu0 %v3049
    %v3198 = vpop.f32.mrb[0].mxu0
    %v3199 = vadd.f32 %v3124, %v3198
    %v3200 = vpop.f32.mrb[0].mxu0
    %3201 = vdwg.mxu0
    %v3202 = vlaneseq
    %v3203 = vshrl.u32 %v3202, 7
    %v3204 = vsub.s32 0, %v3203
    %v3205 = vrot.slane %v3046, %v3204
    %v3206 = vadd.f32 %v3194, %v3205
    %v3207 = vadd.f32 %v3199, %v3205
    %v3208 = vmax.f32 %v3206, 0.0
    %v3209 = vmax.f32 %v3207, 0.0
    %3210 = vmatprep.subr.mxu0 0.0
    %3211 = vmatpush1.msra.mxu0 %v3030
    %3212 = vmatprep.subr.mxu0 0.0
    %3213 = vmatpush1.msra.mxu0 %v3031
    %3214 = vmatprep.subr.mxu0 0.0
    %3215 = vmatpush1.msra.mxu0 %v3032
    %3216 = vmatprep.subr.mxu0 0.0
    %3217 = vmatpush1.msra.mxu0 %v3033
    %3218 = vmatprep.subr.mxu0 0.0
    %3219 = vmatpush1.msra.mxu0 %v3034
    %3220 = vmatprep.subr.mxu0 0.0
    %3221 = vmatpush1.msra.mxu0 %v3035
    %3222 = vmatprep.subr.mxu0 0.0
    %3223 = vmatpush1.msra.mxu0 %v3036
    %3224 = vmatprep.subr.mxu0 0.0
    %3225 = vmatpush1.msra.mxu0 %v3037
    %3226 = vmatprep.subr.mxu0 0.0
    %3227 = vmatpush1.msra.mxu0 %v3038
    %3228 = vmatprep.subr.mxu0 0.0
    %3229 = vmatpush1.msra.mxu0 %v3039
    %3230 = vmatprep.subr.mxu0 0.0
    %3231 = vmatpush1.msra.mxu0 %v3040
    %3232 = vmatprep.subr.mxu0 0.0
    %3233 = vmatpush1.msra.mxu0 %v3041
    %3234 = vmatprep.subr.mxu0 0.0
    %3235 = vmatpush1.msra.mxu0 %v3042
    %3236 = vmatprep.subr.mxu0 0.0
    %3237 = vmatpush1.msra.mxu0 %v3043
    %3238 = vmatprep.subr.mxu0 0.0
    %3239 = vmatpush1.msra.mxu0 %v3044
    %3240 = vmatprep.subr.mxu0 0.0
    %3241 = vmatpush1.msra.mxu0 %v3045
    %3242 = vmatprep.subr.mxu0 0.0
    %3243 = vmatpush1.msra.mxu0 0.0
    %3244 = vmatprep.subr.mxu0 0.0
    %3245 = vmatpush1.msra.mxu0 0.0
    %3246 = vmatprep.subr.mxu0 0.0
    %3247 = vmatpush1.msra.mxu0 0.0
    %3248 = vmatprep.subr.mxu0 0.0
    %3249 = vmatpush1.msra.mxu0 0.0
    %3250 = vmatprep.subr.mxu0 0.0
    %3251 = vmatpush1.msra.mxu0 0.0
    %3252 = vmatprep.subr.mxu0 0.0
    %3253 = vmatpush1.msra.mxu0 0.0
    %3254 = vmatprep.subr.mxu0 0.0
    %3255 = vmatpush1.msra.mxu0 0.0
    %3256 = vmatprep.subr.mxu0 0.0
    %3257 = vmatpush1.msra.mxu0 0.0
    %3258 = vmatprep.subr.mxu0 0.0
    %3259 = vmatpush1.msra.mxu0 0.0
    %3260 = vmatprep.subr.mxu0 0.0
    %3261 = vmatpush1.msra.mxu0 0.0
    %3262 = vmatprep.subr.mxu0 0.0
    %3263 = vmatpush1.msra.mxu0 0.0
    %3264 = vmatprep.subr.mxu0 0.0
    %3265 = vmatpush1.msra.mxu0 0.0
    %3266 = vmatprep.subr.mxu0 0.0
    %3267 = vmatpush1.msra.mxu0 0.0
    %3268 = vmatprep.subr.mxu0 0.0
    %3269 = vmatpush1.msra.mxu0 0.0
    %3270 = vmatprep.subr.mxu0 0.0
    %3271 = vmatpush1.msra.mxu0 0.0
    %3272 = vmatprep.subr.mxu0 0.0
    %3273 = vmatpush1.msra.mxu0 0.0
    %3274 = vmatprep.mubr.f32.mxu0 0.0
    %3275 = vmatmul.mubr.f32.gmra.mrb[0].mxu0 %v3208
    %v3276 = vpop.f32.mrb[0].mxu0
    %v3277 = vadd.f32 0.0, %v3276
    %v3278 = vpop.f32.mrb[0].mxu0
    %3279 = vmatprep.mubr.f32.mxu0 0.0
    %3280 = vmatmul.mubr.f32.gmra.mrb[0].mxu0 %v3209
    %v3281 = vpop.f32.mrb[0].mxu0
    %v3282 = vadd.f32 0.0, %v3281
    %v3283 = vpop.f32.mrb[0].mxu0
    %3284 = vdwg.mxu0
    %v3285 = vlaneseq
    %v3286 = vshrl.u32 %v3285, 7
    %v3287 = vsub.s32 0, %v3286
    %v3288 = vrot.slane %v3047, %v3287
    %v3289 = vadd.f32 %v3277, %v3288
    %v3290 = vadd.f32 %v3282, %v3288
    %vm3291 = vcmask 1043456
    %v3292 = vrot.slane %v59, 4
    %v3293 = vrot.slane %v60, 4
    %v3294 = vsel %vm3291, %v3292, %v3293
    %v3297 = vsub.f32 %v3289, %v3294
    %v3298 = vsub.f32 %v3290, %v3293
    %v3299 = vand.u32 2147483647, %v3297
    %v3300 = vand.u32 2147483647, %v3298
    %v3301 = vsel %vm2859, %v3299, 0.0
    %vm3302 = vcmask 58368
    %v3303 = vsel %vm3302, %v3300, 0.0
    %v3304 = vadd.f32 %v3301, %v3303
    %3305 = vadd.xlane.f32.xlu0 %v3304
    %v3306 = vpop.xlane.xlu0 %3305
    %v3307 = vrot.slane %v3306, 4
    %v3308 = vadd.f32 %v3306, %v3307
    %v3309 = vrot.slane %v3308, 2
    %v3310 = vadd.f32 %v3308, %v3309
    %v3311 = vrot.slane %v3310, 1
    %v3312 = vadd.f32 %v3310, %v3311
    %s3313 = vtos %v3312
    %v3314 = vrcp.pop 16.0
    %s3315 = vtos %v3314
    %s3316 = smul.f32 %s3313, %s3315
    %s3317 = sadd.f32 %s2876, %s3316
    %v3318 = vmul.f32 %v3297, %v2880
    %v3319 = vmul.f32 %v3298, %v2880
    %v3320 = vmul.f32 %v3318, %v3318
    %v3321 = vmul.f32 %v3319, %v3319
    %v3323 = vsel %vm2859, %v3320, 0
    %v3326 = vsel %vm2859, %v3321, 0
    %3328 = vmatprep.subr.mxu0 0.0
    %3329 = vmatpush1.msra.mxu0 %v2553
    %3330 = vmatprep.subr.mxu0 0.0
    %3331 = vmatpush1.msra.mxu0 0.0
    %3332 = vmatprep.subr.mxu0 0.0
    %3333 = vmatpush1.msra.mxu0 0.0
    %3334 = vmatprep.subr.mxu0 0.0
    %3335 = vmatpush1.msra.mxu0 0.0
    %3336 = vmatprep.subr.mxu0 0.0
    %3337 = vmatpush1.msra.mxu0 0.0
    %3338 = vmatprep.subr.mxu0 0.0
    %3339 = vmatpush1.msra.mxu0 0.0
    %3340 = vmatprep.subr.mxu0 0.0
    %3341 = vmatpush1.msra.mxu0 0.0
    %3342 = vmatprep.subr.mxu0 0.0
    %3343 = vmatpush1.msra.mxu0 0.0
    %3344 = vmatprep.subr.mxu0 0.0
    %3345 = vmatpush1.msra.mxu0 0.0
    %3346 = vmatprep.subr.mxu0 0.0
    %3347 = vmatpush1.msra.mxu0 0.0
    %3348 = vmatprep.subr.mxu0 0.0
    %3349 = vmatpush1.msra.mxu0 0.0
    %3350 = vmatprep.subr.mxu0 0.0
    %3351 = vmatpush1.msra.mxu0 0.0
    %3352 = vmatprep.subr.mxu0 0.0
    %3353 = vmatpush1.msra.mxu0 0.0
    %3354 = vmatprep.subr.mxu0 0.0
    %3355 = vmatpush1.msra.mxu0 0.0
    %3356 = vmatprep.subr.mxu0 0.0
    %3357 = vmatpush1.msra.mxu0 0.0
    %3358 = vmatprep.subr.mxu0 0.0
    %3359 = vmatpush1.msra.mxu0 0.0
    %3360 = vmatprep.subr.mxu0 0.0
    %3361 = vmatpush1.msra.mxu0 0.0
    %3362 = vmatprep.subr.mxu0 0.0
    %3363 = vmatpush1.msra.mxu0 0.0
    %3364 = vmatprep.subr.mxu0 0.0
    %3365 = vmatpush1.msra.mxu0 0.0
    %3366 = vmatprep.subr.mxu0 0.0
    %3367 = vmatpush1.msra.mxu0 0.0
    %3368 = vmatprep.subr.mxu0 0.0
    %3369 = vmatpush1.msra.mxu0 0.0
    %3370 = vmatprep.subr.mxu0 0.0
    %3371 = vmatpush1.msra.mxu0 0.0
    %3372 = vmatprep.subr.mxu0 0.0
    %3373 = vmatpush1.msra.mxu0 0.0
    %3374 = vmatprep.subr.mxu0 0.0
    %3375 = vmatpush1.msra.mxu0 0.0
    %3376 = vmatprep.subr.mxu0 0.0
    %3377 = vmatpush1.msra.mxu0 0.0
    %3378 = vmatprep.subr.mxu0 0.0
    %3379 = vmatpush1.msra.mxu0 0.0
    %3380 = vmatprep.subr.mxu0 0.0
    %3381 = vmatpush1.msra.mxu0 0.0
    %3382 = vmatprep.subr.mxu0 0.0
    %3383 = vmatpush1.msra.mxu0 0.0
    %3384 = vmatprep.subr.mxu0 0.0
    %3385 = vmatpush1.msra.mxu0 0.0
    %3386 = vmatprep.subr.mxu0 0.0
    %3387 = vmatpush1.msra.mxu0 0.0
    %3388 = vmatprep.subr.mxu0 0.0
    %3389 = vmatpush1.msra.mxu0 0.0
    %3390 = vmatprep.subr.mxu0 0.0
    %3391 = vmatpush1.msra.mxu0 0.0
    %3392 = vmatprep.mubr.f32.mxu0 0.0
    %3393 = vmatmul.mubr.f32.gmra.mrb[0].mxu0 %v3323
    %v3394 = vpop.f32.mrb[0].mxu0
    %v3395 = vadd.f32 0.0, %v3394
    %v3396 = vpop.f32.mrb[0].mxu0
    %3397 = vmatprep.mubr.f32.mxu0 0.0
    %3398 = vmatmul.mubr.f32.gmra.mrb[0].mxu0 %v3326
    %v3399 = vpop.f32.mrb[0].mxu0
    %v3400 = vadd.f32 0.0, %v3399
    %v3401 = vpop.f32.mrb[0].mxu0
    %3402 = vdwg.mxu0
    %v3403 = vrsqrt.pop %v3395
    %v3404 = vmul.f32 %v3395, %v3403
    %vm3405 = vcmp.eq.f32.partialorder %v3395, inf
    %v3406 = vsel %vm3405, %v3395, %v3404
    %vm3407 = vcmp.eq.f32.partialorder %v3395, 0.0
    %v3408 = vand.u32 %v3395, 2147483648
    %v3409 = vsel %vm3407, %v3408, %v3406
    %v3410 = vrsqrt.pop %v3400
    %v3411 = vmul.f32 %v3400, %v3410
    %vm3412 = vcmp.eq.f32.partialorder %v3400, inf
    %v3413 = vsel %vm3412, %v3400, %v3411
    %vm3414 = vcmp.eq.f32.partialorder %v3400, 0.0
    %v3415 = vand.u32 %v3400, 2147483648
    %v3416 = vsel %vm3414, %v3415, %v3413
    %v3417 = vsel %vm2980, %v3409, 0.0
    %vm3418 = vcmask 25600
    %v3419 = vsel %vm3418, %v3416, 0.0
    %v3420 = vadd.f32 %v3417, %v3419
    %3421 = vadd.xlane.f32.xlu0 %v3420
    %v3422 = vpop.xlane.xlu0 %3421
    %v3423 = vrot.slane %v3422, 4
    %v3424 = vadd.f32 %v3422, %v3423
    %v3425 = vrot.slane %v3424, 2
    %v3426 = vadd.f32 %v3424, %v3425
    %v3427 = vrot.slane %v3426, 1
    %v3428 = vadd.f32 %v3426, %v3427
    %s3429 = vtos %v3428
    %v3430 = vrcp.pop 8.0
    %s3431 = vtos %v3430
    %s3432 = smul.f32 %s3429, %s3431
    %s3433 = sadd.f32 %s2997, %s3432
    %v3434 = vrcp.pop 16.0
    %s3435 = vtos %v3434
    %s3436 = smul.f32 %s3317, %s3435
    %s3437 = scalar_lea.smem [#allocation10], 0
    %3438 = sst [smem:[%s3437]] %s3436
    %v3439 = vrcp.pop 12.0
    %s3440 = vtos %v3439
    %s3441 = smul.f32 %s3433, %s3440
    %s3442 = scalar_lea.smem [#allocation11], 0
    %3443 = sst [smem:[%s3442]] %s3441
    // Predicated region
    $region26: #{tpu_custom_call.1} parent=1 // pred_check
      _
    $region27: #{tpu_custom_call.1} parent=1 // pred_check_branch
      %3445 = sbr.rel (0) target = $region29
    $region28: #{tpu_custom_call.1} parent=1 // pred_region
      %s3447 = ssub.s32 16, 16
      %3448 = vsyncadd [#allocation6], %s3447
      %3451 = dma.smem_to_hbm [#allocation10], 16, %s3, [#allocation6]
    $region29: #{tpu_custom_call.1} parent=1 // pred_fallthru
      _
    // Predicated region
    $region30: #{tpu_custom_call.1} parent=1 // pred_check
      _
    $region31: #{tpu_custom_call.1} parent=1 // pred_check_branch
      %3453 = sbr.rel (0) target = $region33
    $region32: #{tpu_custom_call.1} parent=1 // pred_region
      %s3455 = ssub.s32 16, 16
      %3456 = vsyncadd [#allocation12], %s3455
      %3459 = dma.smem_to_hbm [#allocation11], 16, %s4, [#allocation12]
    $region33: #{tpu_custom_call.1} parent=1 // pred_fallthru
      _
    // Predicated region
    $region34: #{tpu_custom_call.1} parent=1 // pred_check
      _
    $region35: #{tpu_custom_call.1} parent=1 // pred_check_branch
      %3461 = sbr.rel (0) target = $region37
    $region36: #{tpu_custom_call.1} parent=1 // pred_region
      %3462 = dma.done [#allocation6], 16
    $region37: #{tpu_custom_call.1} parent=1 // pred_fallthru
      _
    // Predicated region
    $region38: #{tpu_custom_call.1} parent=1 // pred_check
      _
    $region39: #{tpu_custom_call.1} parent=1 // pred_check_branch
      %3464 = sbr.rel (0) target = $region41
    $region40: #{tpu_custom_call.1} parent=1 // pred_region
      %3465 = dma.done [#allocation12], 16
    $region41: #{tpu_custom_call.1} parent=1 // pred_fallthru
      _
    %3466 = sfence
    %3467 = vsyncpa [#allocation5], 1
    %3468 = vsyncpa [#allocation8], 1
    %3469 = vsyncpa [#allocation6], 1
    %3470 = vsyncpa [#allocation12], 1

</llo_original>
